<compile_context>
chip_gen: v7x
topology: tpu7x:2x2x1
jax: 0.10.0
libtpu: 0.0.40
codegen_flags: <defaults>
</compile_context>

<pallas_src>
import functools

import jax
import jax.numpy as jnp
from jax.experimental import pallas as pl
from jax.experimental.pallas import tpu as pltpu


# --------------------------- fused BiLSTM kernel ------------------------------
def _run_direction(x_in, wih_ref, whh_ref, b_ref, S, B, H, reverse,
                   out_scr=None, col_off=0, track_max=False):
    """One (layer, direction) LSTM recurrence, fully in-kernel.

    x_in: (S*B, In) f32 value, time-major flattened.
    If out_scr is given, h_t is stored to out_scr[t*B:(t+1)*B, col_off:col_off+H].
    If track_max, returns the elementwise running max over t of h_t.
    """
    # Hoisted input projection: ONE (S*B, In) x (In, 4H) matmul + bias,
    # off the sequential critical path.  PyTorch gate order: i, f, g, o.
    gx = jnp.dot(x_in, wih_ref[...], preferred_element_type=jnp.float32) + b_ref[...]
    whh = whh_ref[...]

    h = jnp.zeros((B, H), jnp.float32)
    c = jnp.zeros((B, H), jnp.float32)
    m = jnp.full((B, H), -jnp.inf, jnp.float32) if track_max else None

    steps = range(S - 1, -1, -1) if reverse else range(S)
    for t in steps:                       # statically unrolled (S is small)
        gates = gx[t * B:(t + 1) * B, :] + jnp.dot(
            h, whh, preferred_element_type=jnp.float32)
        i_g = jax.nn.sigmoid(gates[:, 0 * H:1 * H])
        f_g = jax.nn.sigmoid(gates[:, 1 * H:2 * H])
        g_g = jnp.tanh(gates[:, 2 * H:3 * H])
        o_g = jax.nn.sigmoid(gates[:, 3 * H:4 * H])
        c = f_g * c + i_g * g_g
        h = o_g * jnp.tanh(c)
        if out_scr is not None:
            out_scr[t * B:(t + 1) * B, col_off:col_off + H] = h
        if track_max:
            m = jnp.maximum(m, h)
    return m


def _bilstm_fused_kernel(n_layers, S, B, H, *refs):
    """Whole network in one kernel: LSTM stack + max-pool + fc/ReLU + classifier."""
    x_ref = refs[0]
    w_refs = refs[1:1 + 6 * n_layers]
    wfc_ref, bfc_ref, wcls_ref, bcls_ref, out_ref = refs[1 + 6 * n_layers:
                                                         6 + 6 * n_layers]
    act_scrs = refs[6 + 6 * n_layers:]

    layer_in = x_ref[...]                          # (S*B, In0)
    m_f = m_b = None
    for layer in range(n_layers):
        wih_f, whh_f, b_f, wih_b, whh_b, b_b = w_refs[6 * layer:6 * layer + 6]
        if layer < n_layers - 1:
            # Write both directions straight into one (S*B, 2H) scratch:
            # no concatenate, no reverse copies, no HBM round trip.
            scr = act_scrs[layer % len(act_scrs)]
            _run_direction(layer_in, wih_f, whh_f, b_f, S, B, H, False,
                           out_scr=scr, col_off=0)
            _run_direction(layer_in, wih_b, whh_b, b_b, S, B, H, True,
                           out_scr=scr, col_off=H)
            layer_in = scr[...]                    # (S*B, 2H)
        else:
            # Last layer: only the running max over t is needed by the head.
            m_f = _run_direction(layer_in, wih_f, whh_f, b_f, S, B, H, False,
                                 track_max=True)
            m_b = _run_direction(layer_in, wih_b, whh_b, b_b, S, B, H, True,
                                 track_max=True)

    pooled = jnp.concatenate([m_f, m_b], axis=1)   # (B, 2H)  == amax over seq
    hfc = jnp.dot(pooled, wfc_ref[...], preferred_element_type=jnp.float32) + bfc_ref[...]
    hfc = jnp.maximum(hfc, 0.0)                    # ReLU
    out = jnp.dot(hfc, wcls_ref[...], preferred_element_type=jnp.float32) + bcls_ref[...]
    out_ref[...] = out.astype(out_ref.dtype)


# ------------------------------ Full forward ----------------------------------
def bilstm_forward(tokens, params):
    # Embedding gather (plain JAX) + permute(1,0,2): (B,S) -> (S,B,E).
    x = params["embedding"][tokens]
    x = jnp.transpose(x, (1, 0, 2))
    S, B, E = x.shape
    x2d = x.reshape(S * B, E)                      # time-major, flattened

    n_layers = params["lstm_layers"]
    H = params["lstm"][0]["fwd"][1].shape[0]       # per-direction hidden
    O = params["w_cls"].shape[1]

    lstm_flat = []
    for layer in range(n_layers):
        lstm_flat += list(params["lstm"][layer]["fwd"])
        lstm_flat += list(params["lstm"][layer]["bwd"])
    inputs = [x2d] + lstm_flat + [params["w_fc"], params["b_fc"],
                                  params["w_cls"], params["b_cls"]]

    def _full_spec(a):
        nd = a.ndim
        return pl.BlockSpec(a.shape, lambda i, _nd=nd: (0,) * _nd)

    n_act = 0 if n_layers == 1 else (1 if n_layers == 2 else 2)
    kernel = functools.partial(_bilstm_fused_kernel, n_layers, S, B, H)

    return pl.pallas_call(
        kernel,
        out_shape=jax.ShapeDtypeStruct((B, O), jnp.float32),
        grid_spec=pltpu.PrefetchScalarGridSpec(
            num_scalar_prefetch=0,
            grid=(1,),
            in_specs=[_full_spec(a) for a in inputs],
            out_specs=pl.BlockSpec((B, O), lambda i: (0, 0)),
            scratch_shapes=[pltpu.VMEM((S * B, 2 * H), jnp.float32)
                            for _ in range(n_act)],
        ),
        compiler_params=pltpu.CompilerParams(
            dimension_semantics=("arbitrary",)),
    )(*inputs)


# --------------------------- Pure-JAX reference --------------------------------
def lstm_dir_ref(x, wih, whh, b):
    S, B, In = x.shape
    H = whh.shape[0]

    def step(carry, xt):
        h, c = carry
        gates = xt @ wih + h @ whh + b
        i_g = jax.nn.sigmoid(gates[:, :H])
        f_g = jax.nn.sigmoid(gates[:, H:2 * H])
        g_g = jnp.tanh(gates[:, 2 * H:3 * H])
        o_g = jax.nn.sigmoid(gates[:, 3 * H:])
        c = f_g * c + i_g * g_g
        h = o_g * jnp.tanh(c)
        return (h, c), h

    init = (jnp.zeros((B, H), jnp.float32), jnp.zeros((B, H), jnp.float32))
    _, hs = jax.lax.scan(step, init, x)
    return hs


def bilstm_forward_ref(tokens, params):
    x = params["embedding"][tokens]
    x = jnp.transpose(x, (1, 0, 2))
    for layer in range(params["lstm_layers"]):
        f = lstm_dir_ref(x, *params["lstm"][layer]["fwd"])
        b = lstm_dir_ref(x[::-1], *params["lstm"][layer]["bwd"])[::-1]
        x = jnp.concatenate([f, b], axis=-1)
    pooled = jnp.max(x, axis=0)
    h = jnp.maximum(pooled @ params["w_fc"] + params["b_fc"], 0.0)
    return h @ params["w_cls"] + params["b_cls"]


# ------------------------------- Param init ------------------------------------
def init_params(key, vocab_size, embedding_dim, hidden_dim, lstm_layers, fc_dim, output_dim):
    Hd = hidden_dim // 2
    keys = iter(jax.random.split(key, 64))

    def unif(shape, scale):
        return jax.random.uniform(next(keys), shape, jnp.float32, -scale, scale)

    params = {"lstm_layers": lstm_layers}
    params["embedding"] = jax.random.normal(next(keys), (vocab_size, embedding_dim), jnp.float32)

    scale = 1.0 / jnp.sqrt(Hd)
    lstm = []
    for layer in range(lstm_layers):
        in_dim = embedding_dim if layer == 0 else hidden_dim
        layer_p = {}
        for d in ("fwd", "bwd"):
            wih = unif((in_dim, 4 * Hd), scale)          # stored transposed: (In, 4H)
            whh = unif((Hd, 4 * Hd), scale)              # (H, 4H)
            bias = unif((1, 4 * Hd), scale) + unif((1, 4 * Hd), scale)  # b_ih + b_hh
            layer_p[d] = (wih, whh, bias)
        lstm.append(layer_p)
    params["lstm"] = lstm

    params["w_fc"] = unif((hidden_dim, fc_dim), 1.0 / jnp.sqrt(hidden_dim))
    params["b_fc"] = unif((1, fc_dim), 1.0 / jnp.sqrt(hidden_dim))
    params["w_cls"] = unif((fc_dim, output_dim), 1.0 / jnp.sqrt(fc_dim))
    params["b_cls"] = unif((1, output_dim), 1.0 / jnp.sqrt(fc_dim))
    return params


# ---------------------------------- Main ---------------------------------------
if __name__ == "__main__":
    VOCAB = 50
    B, S = 2, 8
    EMB_DIM = 32
    HIDDEN_DIM = 32       # per-direction hidden = 16
    LSTM_LAYERS = 2
    FC_DIM = 64
    OUT_DIM = 1

    key = jax.random.PRNGKey(0)
    k_tok, k_par = jax.random.split(key)
    tokens = jax.random.randint(k_tok, (B, S), 0, VOCAB, dtype=jnp.int32)
    params = init_params(k_par, VOCAB, EMB_DIM, HIDDEN_DIM, LSTM_LAYERS, FC_DIM, OUT_DIM)

    out = bilstm_forward(tokens, params)
    out = jax.block_until_ready(out)

    ref = jax.block_until_ready(bilstm_forward_ref(tokens, params))
    assert out.shape == (B, OUT_DIM), out.shape
    assert jnp.allclose(out, ref, rtol=1e-4, atol=1e-4), (out, ref)

    print("KERNEL_OK")
</pallas_src>

<mosaic_0001>
module attributes {stable_mosaic.version = 11 : i64} {
  func.func @_bilstm_fused_kernel(%arg0: i32, %arg1: memref<16x32xf32, #tpu.memory_space<vmem>>, %arg2: memref<32x64xf32, #tpu.memory_space<vmem>>, %arg3: memref<16x64xf32, #tpu.memory_space<vmem>>, %arg4: memref<1x64xf32, #tpu.memory_space<vmem>>, %arg5: memref<32x64xf32, #tpu.memory_space<vmem>>, %arg6: memref<16x64xf32, #tpu.memory_space<vmem>>, %arg7: memref<1x64xf32, #tpu.memory_space<vmem>>, %arg8: memref<32x64xf32, #tpu.memory_space<vmem>>, %arg9: memref<16x64xf32, #tpu.memory_space<vmem>>, %arg10: memref<1x64xf32, #tpu.memory_space<vmem>>, %arg11: memref<32x64xf32, #tpu.memory_space<vmem>>, %arg12: memref<16x64xf32, #tpu.memory_space<vmem>>, %arg13: memref<1x64xf32, #tpu.memory_space<vmem>>, %arg14: memref<32x64xf32, #tpu.memory_space<vmem>>, %arg15: memref<1x64xf32, #tpu.memory_space<vmem>>, %arg16: memref<64x1xf32, #tpu.memory_space<vmem>>, %arg17: memref<1x1xf32, #tpu.memory_space<vmem>>, %arg18: memref<2x1xf32, #tpu.memory_space<vmem>>, %arg19: memref<16x32xf32, #tpu.memory_space<vmem>>) attributes {dimension_semantics = [#tpu.dimension_semantics<arbitrary>], iteration_bounds = array<i64: 1>, scalar_prefetch = 0 : i64, scratch_operands = 1 : i64, tpu.core_type = #tpu.core_type<tc>, window_params = [{pipeline_mode = #tpu.pipeline_mode<synchronous>, transform_indices = @transform_0, window_bounds = array<i64: 16, 32>}, {pipeline_mode = #tpu.pipeline_mode<synchronous>, transform_indices = @transform_1, window_bounds = array<i64: 32, 64>}, {pipeline_mode = #tpu.pipeline_mode<synchronous>, transform_indices = @transform_2, window_bounds = array<i64: 16, 64>}, {pipeline_mode = #tpu.pipeline_mode<synchronous>, transform_indices = @transform_3, window_bounds = array<i64: 1, 64>}, {pipeline_mode = #tpu.pipeline_mode<synchronous>, transform_indices = @transform_4, window_bounds = array<i64: 32, 64>}, {pipeline_mode = #tpu.pipeline_mode<synchronous>, transform_indices = @transform_5, window_bounds = array<i64: 16, 64>}, {pipeline_mode = #tpu.pipeline_mode<synchronous>, transform_indices = @transform_6, window_bounds = array<i64: 1, 64>}, {pipeline_mode = #tpu.pipeline_mode<synchronous>, transform_indices = @transform_7, window_bounds = array<i64: 32, 64>}, {pipeline_mode = #tpu.pipeline_mode<synchronous>, transform_indices = @transform_8, window_bounds = array<i64: 16, 64>}, {pipeline_mode = #tpu.pipeline_mode<synchronous>, transform_indices = @transform_9, window_bounds = array<i64: 1, 64>}, {pipeline_mode = #tpu.pipeline_mode<synchronous>, transform_indices = @transform_10, window_bounds = array<i64: 32, 64>}, {pipeline_mode = #tpu.pipeline_mode<synchronous>, transform_indices = @transform_11, window_bounds = array<i64: 16, 64>}, {pipeline_mode = #tpu.pipeline_mode<synchronous>, transform_indices = @transform_12, window_bounds = array<i64: 1, 64>}, {pipeline_mode = #tpu.pipeline_mode<synchronous>, transform_indices = @transform_13, window_bounds = array<i64: 32, 64>}, {pipeline_mode = #tpu.pipeline_mode<synchronous>, transform_indices = @transform_14, window_bounds = array<i64: 1, 64>}, {pipeline_mode = #tpu.pipeline_mode<synchronous>, transform_indices = @transform_15, window_bounds = array<i64: 64, 1>}, {pipeline_mode = #tpu.pipeline_mode<synchronous>, transform_indices = @transform_16, window_bounds = array<i64: 1, 1>}, {pipeline_mode = #tpu.pipeline_mode<synchronous>, transform_indices = @transform_17, window_bounds = array<i64: 2, 1>}]} {
    %c0 = arith.constant 0 : index
    %c0_0 = arith.constant 0 : index
    %0 = vector.load %arg1[%c0, %c0_0] : memref<16x32xf32, #tpu.memory_space<vmem>>, vector<16x32xf32>
    %c0_1 = arith.constant 0 : index
    %c0_2 = arith.constant 0 : index
    %1 = vector.load %arg2[%c0_1, %c0_2] : memref<32x64xf32, #tpu.memory_space<vmem>>, vector<32x64xf32>
    %cst = arith.constant dense<0.000000e+00> : vector<16x64xf32>
    %2 = tpu.matmul %0, %1, %cst {dimension_numbers = #tpu.dot_dimension_numbers<[1], [0], [0], [1], [0, 0, 1, 1], [], []>} : vector<16x32xf32>, vector<32x64xf32>, vector<16x64xf32> -> vector<16x64xf32>
    %c0_3 = arith.constant 0 : index
    %c0_4 = arith.constant 0 : index
    %3 = vector.load %arg4[%c0_3, %c0_4] : memref<1x64xf32, #tpu.memory_space<vmem>>, vector<1x64xf32>
    %4 = vector.broadcast %3 : vector<1x64xf32> to vector<16x64xf32>
    %5 = arith.addf %2, %4 : vector<16x64xf32>
    %c0_5 = arith.constant 0 : index
    %c0_6 = arith.constant 0 : index
    %6 = vector.load %arg3[%c0_5, %c0_6] : memref<16x64xf32, #tpu.memory_space<vmem>>, vector<16x64xf32>
    %cst_7 = arith.constant 0.000000e+00 : f32
    %7 = vector.broadcast %cst_7 : f32 to vector<2x16xf32>
    %cst_8 = arith.constant 0.000000e+00 : f32
    %8 = vector.broadcast %cst_8 : f32 to vector<2x16xf32>
    %9 = vector.extract_strided_slice %5 {offsets = [0, 0], sizes = [2, 64], strides = [1, 1]} : vector<16x64xf32> to vector<2x64xf32>
    %cst_9 = arith.constant dense<0.000000e+00> : vector<2x64xf32>
    %10 = tpu.matmul %7, %6, %cst_9 {dimension_numbers = #tpu.dot_dimension_numbers<[1], [0], [0], [1], [0, 0, 1, 1], [], []>} : vector<2x16xf32>, vector<16x64xf32>, vector<2x64xf32> -> vector<2x64xf32>
    %11 = arith.addf %9, %10 : vector<2x64xf32>
    %12 = vector.extract_strided_slice %11 {offsets = [0, 0], sizes = [2, 16], strides = [1, 1]} : vector<2x64xf32> to vector<2x16xf32>
    %13 = arith.negf %12 : vector<2x16xf32>
    %14 = math.exp %13 : vector<2x16xf32>
    %cst_10 = arith.constant 1.000000e+00 : f32
    %15 = vector.broadcast %cst_10 : f32 to vector<2x16xf32>
    %16 = arith.addf %15, %14 : vector<2x16xf32>
    %17 = arith.divf %15, %16 : vector<2x16xf32>
    %18 = vector.extract_strided_slice %11 {offsets = [0, 16], sizes = [2, 16], strides = [1, 1]} : vector<2x64xf32> to vector<2x16xf32>
    %19 = arith.negf %18 : vector<2x16xf32>
    %20 = math.exp %19 : vector<2x16xf32>
    %cst_11 = arith.constant 1.000000e+00 : f32
    %21 = vector.broadcast %cst_11 : f32 to vector<2x16xf32>
    %22 = arith.addf %21, %20 : vector<2x16xf32>
    %23 = arith.divf %21, %22 : vector<2x16xf32>
    %24 = vector.extract_strided_slice %11 {offsets = [0, 32], sizes = [2, 16], strides = [1, 1]} : vector<2x64xf32> to vector<2x16xf32>
    %25 = math.tanh %24 : vector<2x16xf32>
    %26 = vector.extract_strided_slice %11 {offsets = [0, 48], sizes = [2, 16], strides = [1, 1]} : vector<2x64xf32> to vector<2x16xf32>
    %27 = arith.negf %26 : vector<2x16xf32>
    %28 = math.exp %27 : vector<2x16xf32>
    %cst_12 = arith.constant 1.000000e+00 : f32
    %29 = vector.broadcast %cst_12 : f32 to vector<2x16xf32>
    %30 = arith.addf %29, %28 : vector<2x16xf32>
    %31 = arith.divf %29, %30 : vector<2x16xf32>
    %32 = arith.mulf %23, %8 : vector<2x16xf32>
    %33 = arith.mulf %17, %25 : vector<2x16xf32>
    %34 = arith.addf %32, %33 : vector<2x16xf32>
    %35 = math.tanh %34 : vector<2x16xf32>
    %36 = arith.mulf %31, %35 : vector<2x16xf32>
    %c0_13 = arith.constant 0 : index
    %c0_14 = arith.constant 0 : index
    %37 = vector.load %arg19[%c0_13, %c0_14] : memref<16x32xf32, #tpu.memory_space<vmem>>, vector<2x16xf32>
    tpu.vector_store %arg19[%c0_13, %c0_14], %36 {strides = array<i32>} : memref<16x32xf32, #tpu.memory_space<vmem>>, vector<2x16xf32>,
    %38 = vector.extract_strided_slice %5 {offsets = [2, 0], sizes = [2, 64], strides = [1, 1]} : vector<16x64xf32> to vector<2x64xf32>
    %cst_15 = arith.constant dense<0.000000e+00> : vector<2x64xf32>
    %39 = tpu.matmul %36, %6, %cst_15 {dimension_numbers = #tpu.dot_dimension_numbers<[1], [0], [0], [1], [0, 0, 1, 1], [], []>} : vector<2x16xf32>, vector<16x64xf32>, vector<2x64xf32> -> vector<2x64xf32>
    %40 = arith.addf %38, %39 : vector<2x64xf32>
    %41 = vector.extract_strided_slice %40 {offsets = [0, 0], sizes = [2, 16], strides = [1, 1]} : vector<2x64xf32> to vector<2x16xf32>
    %42 = arith.negf %41 : vector<2x16xf32>
    %43 = math.exp %42 : vector<2x16xf32>
    %cst_16 = arith.constant 1.000000e+00 : f32
    %44 = vector.broadcast %cst_16 : f32 to vector<2x16xf32>
    %45 = arith.addf %44, %43 : vector<2x16xf32>
    %46 = arith.divf %44, %45 : vector<2x16xf32>
    %47 = vector.extract_strided_slice %40 {offsets = [0, 16], sizes = [2, 16], strides = [1, 1]} : vector<2x64xf32> to vector<2x16xf32>
    %48 = arith.negf %47 : vector<2x16xf32>
    %49 = math.exp %48 : vector<2x16xf32>
    %cst_17 = arith.constant 1.000000e+00 : f32
    %50 = vector.broadcast %cst_17 : f32 to vector<2x16xf32>
    %51 = arith.addf %50, %49 : vector<2x16xf32>
    %52 = arith.divf %50, %51 : vector<2x16xf32>
    %53 = vector.extract_strided_slice %40 {offsets = [0, 32], sizes = [2, 16], strides = [1, 1]} : vector<2x64xf32> to vector<2x16xf32>
    %54 = math.tanh %53 : vector<2x16xf32>
    %55 = vector.extract_strided_slice %40 {offsets = [0, 48], sizes = [2, 16], strides = [1, 1]} : vector<2x64xf32> to vector<2x16xf32>
    %56 = arith.negf %55 : vector<2x16xf32>
    %57 = math.exp %56 : vector<2x16xf32>
    %cst_18 = arith.constant 1.000000e+00 : f32
    %58 = vector.broadcast %cst_18 : f32 to vector<2x16xf32>
    %59 = arith.addf %58, %57 : vector<2x16xf32>
    %60 = arith.divf %58, %59 : vector<2x16xf32>
    %61 = arith.mulf %52, %34 : vector<2x16xf32>
    %62 = arith.mulf %46, %54 : vector<2x16xf32>
    %63 = arith.addf %61, %62 : vector<2x16xf32>
    %64 = math.tanh %63 : vector<2x16xf32>
    %65 = arith.mulf %60, %64 : vector<2x16xf32>
    %c2 = arith.constant 2 : index
    %c0_19 = arith.constant 0 : index
    %66 = vector.load %arg19[%c2, %c0_19] : memref<16x32xf32, #tpu.memory_space<vmem>>, vector<2x16xf32>
    tpu.vector_store %arg19[%c2, %c0_19], %65 {strides = array<i32>} : memref<16x32xf32, #tpu.memory_space<vmem>>, vector<2x16xf32>,
    %67 = vector.extract_strided_slice %5 {offsets = [4, 0], sizes = [2, 64], strides = [1, 1]} : vector<16x64xf32> to vector<2x64xf32>
    %cst_20 = arith.constant dense<0.000000e+00> : vector<2x64xf32>
    %68 = tpu.matmul %65, %6, %cst_20 {dimension_numbers = #tpu.dot_dimension_numbers<[1], [0], [0], [1], [0, 0, 1, 1], [], []>} : vector<2x16xf32>, vector<16x64xf32>, vector<2x64xf32> -> vector<2x64xf32>
    %69 = arith.addf %67, %68 : vector<2x64xf32>
    %70 = vector.extract_strided_slice %69 {offsets = [0, 0], sizes = [2, 16], strides = [1, 1]} : vector<2x64xf32> to vector<2x16xf32>
    %71 = arith.negf %70 : vector<2x16xf32>
    %72 = math.exp %71 : vector<2x16xf32>
    %cst_21 = arith.constant 1.000000e+00 : f32
    %73 = vector.broadcast %cst_21 : f32 to vector<2x16xf32>
    %74 = arith.addf %73, %72 : vector<2x16xf32>
    %75 = arith.divf %73, %74 : vector<2x16xf32>
    %76 = vector.extract_strided_slice %69 {offsets = [0, 16], sizes = [2, 16], strides = [1, 1]} : vector<2x64xf32> to vector<2x16xf32>
    %77 = arith.negf %76 : vector<2x16xf32>
    %78 = math.exp %77 : vector<2x16xf32>
    %cst_22 = arith.constant 1.000000e+00 : f32
    %79 = vector.broadcast %cst_22 : f32 to vector<2x16xf32>
    %80 = arith.addf %79, %78 : vector<2x16xf32>
    %81 = arith.divf %79, %80 : vector<2x16xf32>
    %82 = vector.extract_strided_slice %69 {offsets = [0, 32], sizes = [2, 16], strides = [1, 1]} : vector<2x64xf32> to vector<2x16xf32>
    %83 = math.tanh %82 : vector<2x16xf32>
    %84 = vector.extract_strided_slice %69 {offsets = [0, 48], sizes = [2, 16], strides = [1, 1]} : vector<2x64xf32> to vector<2x16xf32>
    %85 = arith.negf %84 : vector<2x16xf32>
    %86 = math.exp %85 : vector<2x16xf32>
    %cst_23 = arith.constant 1.000000e+00 : f32
    %87 = vector.broadcast %cst_23 : f32 to vector<2x16xf32>
    %88 = arith.addf %87, %86 : vector<2x16xf32>
    %89 = arith.divf %87, %88 : vector<2x16xf32>
    %90 = arith.mulf %81, %63 : vector<2x16xf32>
    %91 = arith.mulf %75, %83 : vector<2x16xf32>
    %92 = arith.addf %90, %91 : vector<2x16xf32>
    %93 = math.tanh %92 : vector<2x16xf32>
    %94 = arith.mulf %89, %93 : vector<2x16xf32>
    %c4 = arith.constant 4 : index
    %c0_24 = arith.constant 0 : index
    %95 = vector.load %arg19[%c4, %c0_24] : memref<16x32xf32, #tpu.memory_space<vmem>>, vector<2x16xf32>
    tpu.vector_store %arg19[%c4, %c0_24], %94 {strides = array<i32>} : memref<16x32xf32, #tpu.memory_space<vmem>>, vector<2x16xf32>,
    %96 = vector.extract_strided_slice %5 {offsets = [6, 0], sizes = [2, 64], strides = [1, 1]} : vector<16x64xf32> to vector<2x64xf32>
    %cst_25 = arith.constant dense<0.000000e+00> : vector<2x64xf32>
    %97 = tpu.matmul %94, %6, %cst_25 {dimension_numbers = #tpu.dot_dimension_numbers<[1], [0], [0], [1], [0, 0, 1, 1], [], []>} : vector<2x16xf32>, vector<16x64xf32>, vector<2x64xf32> -> vector<2x64xf32>
    %98 = arith.addf %96, %97 : vector<2x64xf32>
    %99 = vector.extract_strided_slice %98 {offsets = [0, 0], sizes = [2, 16], strides = [1, 1]} : vector<2x64xf32> to vector<2x16xf32>
    %100 = arith.negf %99 : vector<2x16xf32>
    %101 = math.exp %100 : vector<2x16xf32>
    %cst_26 = arith.constant 1.000000e+00 : f32
    %102 = vector.broadcast %cst_26 : f32 to vector<2x16xf32>
    %103 = arith.addf %102, %101 : vector<2x16xf32>
    %104 = arith.divf %102, %103 : vector<2x16xf32>
    %105 = vector.extract_strided_slice %98 {offsets = [0, 16], sizes = [2, 16], strides = [1, 1]} : vector<2x64xf32> to vector<2x16xf32>
    %106 = arith.negf %105 : vector<2x16xf32>
    %107 = math.exp %106 : vector<2x16xf32>
    %cst_27 = arith.constant 1.000000e+00 : f32
    %108 = vector.broadcast %cst_27 : f32 to vector<2x16xf32>
    %109 = arith.addf %108, %107 : vector<2x16xf32>
    %110 = arith.divf %108, %109 : vector<2x16xf32>
    %111 = vector.extract_strided_slice %98 {offsets = [0, 32], sizes = [2, 16], strides = [1, 1]} : vector<2x64xf32> to vector<2x16xf32>
    %112 = math.tanh %111 : vector<2x16xf32>
    %113 = vector.extract_strided_slice %98 {offsets = [0, 48], sizes = [2, 16], strides = [1, 1]} : vector<2x64xf32> to vector<2x16xf32>
    %114 = arith.negf %113 : vector<2x16xf32>
    %115 = math.exp %114 : vector<2x16xf32>
    %cst_28 = arith.constant 1.000000e+00 : f32
    %116 = vector.broadcast %cst_28 : f32 to vector<2x16xf32>
    %117 = arith.addf %116, %115 : vector<2x16xf32>
    %118 = arith.divf %116, %117 : vector<2x16xf32>
    %119 = arith.mulf %110, %92 : vector<2x16xf32>
    %120 = arith.mulf %104, %112 : vector<2x16xf32>
    %121 = arith.addf %119, %120 : vector<2x16xf32>
    %122 = math.tanh %121 : vector<2x16xf32>
    %123 = arith.mulf %118, %122 : vector<2x16xf32>
    %c6 = arith.constant 6 : index
    %c0_29 = arith.constant 0 : index
    %124 = vector.load %arg19[%c6, %c0_29] : memref<16x32xf32, #tpu.memory_space<vmem>>, vector<2x16xf32>
    tpu.vector_store %arg19[%c6, %c0_29], %123 {strides = array<i32>} : memref<16x32xf32, #tpu.memory_space<vmem>>, vector<2x16xf32>,
    %125 = vector.extract_strided_slice %5 {offsets = [8, 0], sizes = [2, 64], strides = [1, 1]} : vector<16x64xf32> to vector<2x64xf32>
    %cst_30 = arith.constant dense<0.000000e+00> : vector<2x64xf32>
    %126 = tpu.matmul %123, %6, %cst_30 {dimension_numbers = #tpu.dot_dimension_numbers<[1], [0], [0], [1], [0, 0, 1, 1], [], []>} : vector<2x16xf32>, vector<16x64xf32>, vector<2x64xf32> -> vector<2x64xf32>
    %127 = arith.addf %125, %126 : vector<2x64xf32>
    %128 = vector.extract_strided_slice %127 {offsets = [0, 0], sizes = [2, 16], strides = [1, 1]} : vector<2x64xf32> to vector<2x16xf32>
    %129 = arith.negf %128 : vector<2x16xf32>
    %130 = math.exp %129 : vector<2x16xf32>
    %cst_31 = arith.constant 1.000000e+00 : f32
    %131 = vector.broadcast %cst_31 : f32 to vector<2x16xf32>
    %132 = arith.addf %131, %130 : vector<2x16xf32>
    %133 = arith.divf %131, %132 : vector<2x16xf32>
    %134 = vector.extract_strided_slice %127 {offsets = [0, 16], sizes = [2, 16], strides = [1, 1]} : vector<2x64xf32> to vector<2x16xf32>
    %135 = arith.negf %134 : vector<2x16xf32>
    %136 = math.exp %135 : vector<2x16xf32>
    %cst_32 = arith.constant 1.000000e+00 : f32
    %137 = vector.broadcast %cst_32 : f32 to vector<2x16xf32>
    %138 = arith.addf %137, %136 : vector<2x16xf32>
    %139 = arith.divf %137, %138 : vector<2x16xf32>
    %140 = vector.extract_strided_slice %127 {offsets = [0, 32], sizes = [2, 16], strides = [1, 1]} : vector<2x64xf32> to vector<2x16xf32>
    %141 = math.tanh %140 : vector<2x16xf32>
    %142 = vector.extract_strided_slice %127 {offsets = [0, 48], sizes = [2, 16], strides = [1, 1]} : vector<2x64xf32> to vector<2x16xf32>
    %143 = arith.negf %142 : vector<2x16xf32>
    %144 = math.exp %143 : vector<2x16xf32>
    %cst_33 = arith.constant 1.000000e+00 : f32
    %145 = vector.broadcast %cst_33 : f32 to vector<2x16xf32>
    %146 = arith.addf %145, %144 : vector<2x16xf32>
    %147 = arith.divf %145, %146 : vector<2x16xf32>
    %148 = arith.mulf %139, %121 : vector<2x16xf32>
    %149 = arith.mulf %133, %141 : vector<2x16xf32>
    %150 = arith.addf %148, %149 : vector<2x16xf32>
    %151 = math.tanh %150 : vector<2x16xf32>
    %152 = arith.mulf %147, %151 : vector<2x16xf32>
    %c8 = arith.constant 8 : index
    %c0_34 = arith.constant 0 : index
    %153 = vector.load %arg19[%c8, %c0_34] : memref<16x32xf32, #tpu.memory_space<vmem>>, vector<2x16xf32>
    tpu.vector_store %arg19[%c8, %c0_34], %152 {strides = array<i32>} : memref<16x32xf32, #tpu.memory_space<vmem>>, vector<2x16xf32>,
    %154 = vector.extract_strided_slice %5 {offsets = [10, 0], sizes = [2, 64], strides = [1, 1]} : vector<16x64xf32> to vector<2x64xf32>
    %cst_35 = arith.constant dense<0.000000e+00> : vector<2x64xf32>
    %155 = tpu.matmul %152, %6, %cst_35 {dimension_numbers = #tpu.dot_dimension_numbers<[1], [0], [0], [1], [0, 0, 1, 1], [], []>} : vector<2x16xf32>, vector<16x64xf32>, vector<2x64xf32> -> vector<2x64xf32>
    %156 = arith.addf %154, %155 : vector<2x64xf32>
    %157 = vector.extract_strided_slice %156 {offsets = [0, 0], sizes = [2, 16], strides = [1, 1]} : vector<2x64xf32> to vector<2x16xf32>
    %158 = arith.negf %157 : vector<2x16xf32>
    %159 = math.exp %158 : vector<2x16xf32>
    %cst_36 = arith.constant 1.000000e+00 : f32
    %160 = vector.broadcast %cst_36 : f32 to vector<2x16xf32>
    %161 = arith.addf %160, %159 : vector<2x16xf32>
    %162 = arith.divf %160, %161 : vector<2x16xf32>
    %163 = vector.extract_strided_slice %156 {offsets = [0, 16], sizes = [2, 16], strides = [1, 1]} : vector<2x64xf32> to vector<2x16xf32>
    %164 = arith.negf %163 : vector<2x16xf32>
    %165 = math.exp %164 : vector<2x16xf32>
    %cst_37 = arith.constant 1.000000e+00 : f32
    %166 = vector.broadcast %cst_37 : f32 to vector<2x16xf32>
    %167 = arith.addf %166, %165 : vector<2x16xf32>
    %168 = arith.divf %166, %167 : vector<2x16xf32>
    %169 = vector.extract_strided_slice %156 {offsets = [0, 32], sizes = [2, 16], strides = [1, 1]} : vector<2x64xf32> to vector<2x16xf32>
    %170 = math.tanh %169 : vector<2x16xf32>
    %171 = vector.extract_strided_slice %156 {offsets = [0, 48], sizes = [2, 16], strides = [1, 1]} : vector<2x64xf32> to vector<2x16xf32>
    %172 = arith.negf %171 : vector<2x16xf32>
    %173 = math.exp %172 : vector<2x16xf32>
    %cst_38 = arith.constant 1.000000e+00 : f32
    %174 = vector.broadcast %cst_38 : f32 to vector<2x16xf32>
    %175 = arith.addf %174, %173 : vector<2x16xf32>
    %176 = arith.divf %174, %175 : vector<2x16xf32>
    %177 = arith.mulf %168, %150 : vector<2x16xf32>
    %178 = arith.mulf %162, %170 : vector<2x16xf32>
    %179 = arith.addf %177, %178 : vector<2x16xf32>
    %180 = math.tanh %179 : vector<2x16xf32>
    %181 = arith.mulf %176, %180 : vector<2x16xf32>
    %c10 = arith.constant 10 : index
    %c0_39 = arith.constant 0 : index
    %182 = vector.load %arg19[%c10, %c0_39] : memref<16x32xf32, #tpu.memory_space<vmem>>, vector<2x16xf32>
    tpu.vector_store %arg19[%c10, %c0_39], %181 {strides = array<i32>} : memref<16x32xf32, #tpu.memory_space<vmem>>, vector<2x16xf32>,
    %183 = vector.extract_strided_slice %5 {offsets = [12, 0], sizes = [2, 64], strides = [1, 1]} : vector<16x64xf32> to vector<2x64xf32>
    %cst_40 = arith.constant dense<0.000000e+00> : vector<2x64xf32>
    %184 = tpu.matmul %181, %6, %cst_40 {dimension_numbers = #tpu.dot_dimension_numbers<[1], [0], [0], [1], [0, 0, 1, 1], [], []>} : vector<2x16xf32>, vector<16x64xf32>, vector<2x64xf32> -> vector<2x64xf32>
    %185 = arith.addf %183, %184 : vector<2x64xf32>
    %186 = vector.extract_strided_slice %185 {offsets = [0, 0], sizes = [2, 16], strides = [1, 1]} : vector<2x64xf32> to vector<2x16xf32>
    %187 = arith.negf %186 : vector<2x16xf32>
    %188 = math.exp %187 : vector<2x16xf32>
    %cst_41 = arith.constant 1.000000e+00 : f32
    %189 = vector.broadcast %cst_41 : f32 to vector<2x16xf32>
    %190 = arith.addf %189, %188 : vector<2x16xf32>
    %191 = arith.divf %189, %190 : vector<2x16xf32>
    %192 = vector.extract_strided_slice %185 {offsets = [0, 16], sizes = [2, 16], strides = [1, 1]} : vector<2x64xf32> to vector<2x16xf32>
    %193 = arith.negf %192 : vector<2x16xf32>
    %194 = math.exp %193 : vector<2x16xf32>
    %cst_42 = arith.constant 1.000000e+00 : f32
    %195 = vector.broadcast %cst_42 : f32 to vector<2x16xf32>
    %196 = arith.addf %195, %194 : vector<2x16xf32>
    %197 = arith.divf %195, %196 : vector<2x16xf32>
    %198 = vector.extract_strided_slice %185 {offsets = [0, 32], sizes = [2, 16], strides = [1, 1]} : vector<2x64xf32> to vector<2x16xf32>
    %199 = math.tanh %198 : vector<2x16xf32>
    %200 = vector.extract_strided_slice %185 {offsets = [0, 48], sizes = [2, 16], strides = [1, 1]} : vector<2x64xf32> to vector<2x16xf32>
    %201 = arith.negf %200 : vector<2x16xf32>
    %202 = math.exp %201 : vector<2x16xf32>
    %cst_43 = arith.constant 1.000000e+00 : f32
    %203 = vector.broadcast %cst_43 : f32 to vector<2x16xf32>
    %204 = arith.addf %203, %202 : vector<2x16xf32>
    %205 = arith.divf %203, %204 : vector<2x16xf32>
    %206 = arith.mulf %197, %179 : vector<2x16xf32>
    %207 = arith.mulf %191, %199 : vector<2x16xf32>
    %208 = arith.addf %206, %207 : vector<2x16xf32>
    %209 = math.tanh %208 : vector<2x16xf32>
    %210 = arith.mulf %205, %209 : vector<2x16xf32>
    %c12 = arith.constant 12 : index
    %c0_44 = arith.constant 0 : index
    %211 = vector.load %arg19[%c12, %c0_44] : memref<16x32xf32, #tpu.memory_space<vmem>>, vector<2x16xf32>
    tpu.vector_store %arg19[%c12, %c0_44], %210 {strides = array<i32>} : memref<16x32xf32, #tpu.memory_space<vmem>>, vector<2x16xf32>,
    %212 = vector.extract_strided_slice %5 {offsets = [14, 0], sizes = [2, 64], strides = [1, 1]} : vector<16x64xf32> to vector<2x64xf32>
    %cst_45 = arith.constant dense<0.000000e+00> : vector<2x64xf32>
    %213 = tpu.matmul %210, %6, %cst_45 {dimension_numbers = #tpu.dot_dimension_numbers<[1], [0], [0], [1], [0, 0, 1, 1], [], []>} : vector<2x16xf32>, vector<16x64xf32>, vector<2x64xf32> -> vector<2x64xf32>
    %214 = arith.addf %212, %213 : vector<2x64xf32>
    %215 = vector.extract_strided_slice %214 {offsets = [0, 0], sizes = [2, 16], strides = [1, 1]} : vector<2x64xf32> to vector<2x16xf32>
    %216 = arith.negf %215 : vector<2x16xf32>
    %217 = math.exp %216 : vector<2x16xf32>
    %cst_46 = arith.constant 1.000000e+00 : f32
    %218 = vector.broadcast %cst_46 : f32 to vector<2x16xf32>
    %219 = arith.addf %218, %217 : vector<2x16xf32>
    %220 = arith.divf %218, %219 : vector<2x16xf32>
    %221 = vector.extract_strided_slice %214 {offsets = [0, 16], sizes = [2, 16], strides = [1, 1]} : vector<2x64xf32> to vector<2x16xf32>
    %222 = arith.negf %221 : vector<2x16xf32>
    %223 = math.exp %222 : vector<2x16xf32>
    %cst_47 = arith.constant 1.000000e+00 : f32
    %224 = vector.broadcast %cst_47 : f32 to vector<2x16xf32>
    %225 = arith.addf %224, %223 : vector<2x16xf32>
    %226 = arith.divf %224, %225 : vector<2x16xf32>
    %227 = vector.extract_strided_slice %214 {offsets = [0, 32], sizes = [2, 16], strides = [1, 1]} : vector<2x64xf32> to vector<2x16xf32>
    %228 = math.tanh %227 : vector<2x16xf32>
    %229 = vector.extract_strided_slice %214 {offsets = [0, 48], sizes = [2, 16], strides = [1, 1]} : vector<2x64xf32> to vector<2x16xf32>
    %230 = arith.negf %229 : vector<2x16xf32>
    %231 = math.exp %230 : vector<2x16xf32>
    %cst_48 = arith.constant 1.000000e+00 : f32
    %232 = vector.broadcast %cst_48 : f32 to vector<2x16xf32>
    %233 = arith.addf %232, %231 : vector<2x16xf32>
    %234 = arith.divf %232, %233 : vector<2x16xf32>
    %235 = arith.mulf %226, %208 : vector<2x16xf32>
    %236 = arith.mulf %220, %228 : vector<2x16xf32>
    %237 = arith.addf %235, %236 : vector<2x16xf32>
    %238 = math.tanh %237 : vector<2x16xf32>
    %239 = arith.mulf %234, %238 : vector<2x16xf32>
    %c14 = arith.constant 14 : index
    %c0_49 = arith.constant 0 : index
    %240 = vector.load %arg19[%c14, %c0_49] : memref<16x32xf32, #tpu.memory_space<vmem>>, vector<2x16xf32>
    tpu.vector_store %arg19[%c14, %c0_49], %239 {strides = array<i32>} : memref<16x32xf32, #tpu.memory_space<vmem>>, vector<2x16xf32>,
    %c0_50 = arith.constant 0 : index
    %c0_51 = arith.constant 0 : index
    %241 = vector.load %arg5[%c0_50, %c0_51] : memref<32x64xf32, #tpu.memory_space<vmem>>, vector<32x64xf32>
    %cst_52 = arith.constant dense<0.000000e+00> : vector<16x64xf32>
    %242 = tpu.matmul %0, %241, %cst_52 {dimension_numbers = #tpu.dot_dimension_numbers<[1], [0], [0], [1], [0, 0, 1, 1], [], []>} : vector<16x32xf32>, vector<32x64xf32>, vector<16x64xf32> -> vector<16x64xf32>
    %c0_53 = arith.constant 0 : index
    %c0_54 = arith.constant 0 : index
    %243 = vector.load %arg7[%c0_53, %c0_54] : memref<1x64xf32, #tpu.memory_space<vmem>>, vector<1x64xf32>
    %244 = vector.broadcast %243 : vector<1x64xf32> to vector<16x64xf32>
    %245 = arith.addf %242, %244 : vector<16x64xf32>
    %c0_55 = arith.constant 0 : index
    %c0_56 = arith.constant 0 : index
    %246 = vector.load %arg6[%c0_55, %c0_56] : memref<16x64xf32, #tpu.memory_space<vmem>>, vector<16x64xf32>
    %cst_57 = arith.constant 0.000000e+00 : f32
    %247 = vector.broadcast %cst_57 : f32 to vector<2x16xf32>
    %cst_58 = arith.constant 0.000000e+00 : f32
    %248 = vector.broadcast %cst_58 : f32 to vector<2x16xf32>
    %249 = vector.extract_strided_slice %245 {offsets = [14, 0], sizes = [2, 64], strides = [1, 1]} : vector<16x64xf32> to vector<2x64xf32>
    %cst_59 = arith.constant dense<0.000000e+00> : vector<2x64xf32>
    %250 = tpu.matmul %247, %246, %cst_59 {dimension_numbers = #tpu.dot_dimension_numbers<[1], [0], [0], [1], [0, 0, 1, 1], [], []>} : vector<2x16xf32>, vector<16x64xf32>, vector<2x64xf32> -> vector<2x64xf32>
    %251 = arith.addf %249, %250 : vector<2x64xf32>
    %252 = vector.extract_strided_slice %251 {offsets = [0, 0], sizes = [2, 16], strides = [1, 1]} : vector<2x64xf32> to vector<2x16xf32>
    %253 = arith.negf %252 : vector<2x16xf32>
    %254 = math.exp %253 : vector<2x16xf32>
    %cst_60 = arith.constant 1.000000e+00 : f32
    %255 = vector.broadcast %cst_60 : f32 to vector<2x16xf32>
    %256 = arith.addf %255, %254 : vector<2x16xf32>
    %257 = arith.divf %255, %256 : vector<2x16xf32>
    %258 = vector.extract_strided_slice %251 {offsets = [0, 16], sizes = [2, 16], strides = [1, 1]} : vector<2x64xf32> to vector<2x16xf32>
    %259 = arith.negf %258 : vector<2x16xf32>
    %260 = math.exp %259 : vector<2x16xf32>
    %cst_61 = arith.constant 1.000000e+00 : f32
    %261 = vector.broadcast %cst_61 : f32 to vector<2x16xf32>
    %262 = arith.addf %261, %260 : vector<2x16xf32>
    %263 = arith.divf %261, %262 : vector<2x16xf32>
    %264 = vector.extract_strided_slice %251 {offsets = [0, 32], sizes = [2, 16], strides = [1, 1]} : vector<2x64xf32> to vector<2x16xf32>
    %265 = math.tanh %264 : vector<2x16xf32>
    %266 = vector.extract_strided_slice %251 {offsets = [0, 48], sizes = [2, 16], strides = [1, 1]} : vector<2x64xf32> to vector<2x16xf32>
    %267 = arith.negf %266 : vector<2x16xf32>
    %268 = math.exp %267 : vector<2x16xf32>
    %cst_62 = arith.constant 1.000000e+00 : f32
    %269 = vector.broadcast %cst_62 : f32 to vector<2x16xf32>
    %270 = arith.addf %269, %268 : vector<2x16xf32>
    %271 = arith.divf %269, %270 : vector<2x16xf32>
    %272 = arith.mulf %263, %248 : vector<2x16xf32>
    %273 = arith.mulf %257, %265 : vector<2x16xf32>
    %274 = arith.addf %272, %273 : vector<2x16xf32>
    %275 = math.tanh %274 : vector<2x16xf32>
    %276 = arith.mulf %271, %275 : vector<2x16xf32>
    %c14_63 = arith.constant 14 : index
    %c16 = arith.constant 16 : index
    %277 = vector.load %arg19[%c14_63, %c16] : memref<16x32xf32, #tpu.memory_space<vmem>>, vector<2x16xf32>
    tpu.vector_store %arg19[%c14_63, %c16], %276 {strides = array<i32>} : memref<16x32xf32, #tpu.memory_space<vmem>>, vector<2x16xf32>,
    %278 = vector.extract_strided_slice %245 {offsets = [12, 0], sizes = [2, 64], strides = [1, 1]} : vector<16x64xf32> to vector<2x64xf32>
    %cst_64 = arith.constant dense<0.000000e+00> : vector<2x64xf32>
    %279 = tpu.matmul %276, %246, %cst_64 {dimension_numbers = #tpu.dot_dimension_numbers<[1], [0], [0], [1], [0, 0, 1, 1], [], []>} : vector<2x16xf32>, vector<16x64xf32>, vector<2x64xf32> -> vector<2x64xf32>
    %280 = arith.addf %278, %279 : vector<2x64xf32>
    %281 = vector.extract_strided_slice %280 {offsets = [0, 0], sizes = [2, 16], strides = [1, 1]} : vector<2x64xf32> to vector<2x16xf32>
    %282 = arith.negf %281 : vector<2x16xf32>
    %283 = math.exp %282 : vector<2x16xf32>
    %cst_65 = arith.constant 1.000000e+00 : f32
    %284 = vector.broadcast %cst_65 : f32 to vector<2x16xf32>
    %285 = arith.addf %284, %283 : vector<2x16xf32>
    %286 = arith.divf %284, %285 : vector<2x16xf32>
    %287 = vector.extract_strided_slice %280 {offsets = [0, 16], sizes = [2, 16], strides = [1, 1]} : vector<2x64xf32> to vector<2x16xf32>
    %288 = arith.negf %287 : vector<2x16xf32>
    %289 = math.exp %288 : vector<2x16xf32>
    %cst_66 = arith.constant 1.000000e+00 : f32
    %290 = vector.broadcast %cst_66 : f32 to vector<2x16xf32>
    %291 = arith.addf %290, %289 : vector<2x16xf32>
    %292 = arith.divf %290, %291 : vector<2x16xf32>
    %293 = vector.extract_strided_slice %280 {offsets = [0, 32], sizes = [2, 16], strides = [1, 1]} : vector<2x64xf32> to vector<2x16xf32>
    %294 = math.tanh %293 : vector<2x16xf32>
    %295 = vector.extract_strided_slice %280 {offsets = [0, 48], sizes = [2, 16], strides = [1, 1]} : vector<2x64xf32> to vector<2x16xf32>
    %296 = arith.negf %295 : vector<2x16xf32>
    %297 = math.exp %296 : vector<2x16xf32>
    %cst_67 = arith.constant 1.000000e+00 : f32
    %298 = vector.broadcast %cst_67 : f32 to vector<2x16xf32>
    %299 = arith.addf %298, %297 : vector<2x16xf32>
    %300 = arith.divf %298, %299 : vector<2x16xf32>
    %301 = arith.mulf %292, %274 : vector<2x16xf32>
    %302 = arith.mulf %286, %294 : vector<2x16xf32>
    %303 = arith.addf %301, %302 : vector<2x16xf32>
    %304 = math.tanh %303 : vector<2x16xf32>
    %305 = arith.mulf %300, %304 : vector<2x16xf32>
    %c12_68 = arith.constant 12 : index
    %c16_69 = arith.constant 16 : index
    %306 = vector.load %arg19[%c12_68, %c16_69] : memref<16x32xf32, #tpu.memory_space<vmem>>, vector<2x16xf32>
    tpu.vector_store %arg19[%c12_68, %c16_69], %305 {strides = array<i32>} : memref<16x32xf32, #tpu.memory_space<vmem>>, vector<2x16xf32>,
    %307 = vector.extract_strided_slice %245 {offsets = [10, 0], sizes = [2, 64], strides = [1, 1]} : vector<16x64xf32> to vector<2x64xf32>
    %cst_70 = arith.constant dense<0.000000e+00> : vector<2x64xf32>
    %308 = tpu.matmul %305, %246, %cst_70 {dimension_numbers = #tpu.dot_dimension_numbers<[1], [0], [0], [1], [0, 0, 1, 1], [], []>} : vector<2x16xf32>, vector<16x64xf32>, vector<2x64xf32> -> vector<2x64xf32>
    %309 = arith.addf %307, %308 : vector<2x64xf32>
    %310 = vector.extract_strided_slice %309 {offsets = [0, 0], sizes = [2, 16], strides = [1, 1]} : vector<2x64xf32> to vector<2x16xf32>
    %311 = arith.negf %310 : vector<2x16xf32>
    %312 = math.exp %311 : vector<2x16xf32>
    %cst_71 = arith.constant 1.000000e+00 : f32
    %313 = vector.broadcast %cst_71 : f32 to vector<2x16xf32>
    %314 = arith.addf %313, %312 : vector<2x16xf32>
    %315 = arith.divf %313, %314 : vector<2x16xf32>
    %316 = vector.extract_strided_slice %309 {offsets = [0, 16], sizes = [2, 16], strides = [1, 1]} : vector<2x64xf32> to vector<2x16xf32>
    %317 = arith.negf %316 : vector<2x16xf32>
    %318 = math.exp %317 : vector<2x16xf32>
    %cst_72 = arith.constant 1.000000e+00 : f32
    %319 = vector.broadcast %cst_72 : f32 to vector<2x16xf32>
    %320 = arith.addf %319, %318 : vector<2x16xf32>
    %321 = arith.divf %319, %320 : vector<2x16xf32>
    %322 = vector.extract_strided_slice %309 {offsets = [0, 32], sizes = [2, 16], strides = [1, 1]} : vector<2x64xf32> to vector<2x16xf32>
    %323 = math.tanh %322 : vector<2x16xf32>
    %324 = vector.extract_strided_slice %309 {offsets = [0, 48], sizes = [2, 16], strides = [1, 1]} : vector<2x64xf32> to vector<2x16xf32>
    %325 = arith.negf %324 : vector<2x16xf32>
    %326 = math.exp %325 : vector<2x16xf32>
    %cst_73 = arith.constant 1.000000e+00 : f32
    %327 = vector.broadcast %cst_73 : f32 to vector<2x16xf32>
    %328 = arith.addf %327, %326 : vector<2x16xf32>
    %329 = arith.divf %327, %328 : vector<2x16xf32>
    %330 = arith.mulf %321, %303 : vector<2x16xf32>
    %331 = arith.mulf %315, %323 : vector<2x16xf32>
    %332 = arith.addf %330, %331 : vector<2x16xf32>
    %333 = math.tanh %332 : vector<2x16xf32>
    %334 = arith.mulf %329, %333 : vector<2x16xf32>
    %c10_74 = arith.constant 10 : index
    %c16_75 = arith.constant 16 : index
    %335 = vector.load %arg19[%c10_74, %c16_75] : memref<16x32xf32, #tpu.memory_space<vmem>>, vector<2x16xf32>
    tpu.vector_store %arg19[%c10_74, %c16_75], %334 {strides = array<i32>} : memref<16x32xf32, #tpu.memory_space<vmem>>, vector<2x16xf32>,
    %336 = vector.extract_strided_slice %245 {offsets = [8, 0], sizes = [2, 64], strides = [1, 1]} : vector<16x64xf32> to vector<2x64xf32>
    %cst_76 = arith.constant dense<0.000000e+00> : vector<2x64xf32>
    %337 = tpu.matmul %334, %246, %cst_76 {dimension_numbers = #tpu.dot_dimension_numbers<[1], [0], [0], [1], [0, 0, 1, 1], [], []>} : vector<2x16xf32>, vector<16x64xf32>, vector<2x64xf32> -> vector<2x64xf32>
    %338 = arith.addf %336, %337 : vector<2x64xf32>
    %339 = vector.extract_strided_slice %338 {offsets = [0, 0], sizes = [2, 16], strides = [1, 1]} : vector<2x64xf32> to vector<2x16xf32>
    %340 = arith.negf %339 : vector<2x16xf32>
    %341 = math.exp %340 : vector<2x16xf32>
    %cst_77 = arith.constant 1.000000e+00 : f32
    %342 = vector.broadcast %cst_77 : f32 to vector<2x16xf32>
    %343 = arith.addf %342, %341 : vector<2x16xf32>
    %344 = arith.divf %342, %343 : vector<2x16xf32>
    %345 = vector.extract_strided_slice %338 {offsets = [0, 16], sizes = [2, 16], strides = [1, 1]} : vector<2x64xf32> to vector<2x16xf32>
    %346 = arith.negf %345 : vector<2x16xf32>
    %347 = math.exp %346 : vector<2x16xf32>
    %cst_78 = arith.constant 1.000000e+00 : f32
    %348 = vector.broadcast %cst_78 : f32 to vector<2x16xf32>
    %349 = arith.addf %348, %347 : vector<2x16xf32>
    %350 = arith.divf %348, %349 : vector<2x16xf32>
    %351 = vector.extract_strided_slice %338 {offsets = [0, 32], sizes = [2, 16], strides = [1, 1]} : vector<2x64xf32> to vector<2x16xf32>
    %352 = math.tanh %351 : vector<2x16xf32>
    %353 = vector.extract_strided_slice %338 {offsets = [0, 48], sizes = [2, 16], strides = [1, 1]} : vector<2x64xf32> to vector<2x16xf32>
    %354 = arith.negf %353 : vector<2x16xf32>
    %355 = math.exp %354 : vector<2x16xf32>
    %cst_79 = arith.constant 1.000000e+00 : f32
    %356 = vector.broadcast %cst_79 : f32 to vector<2x16xf32>
    %357 = arith.addf %356, %355 : vector<2x16xf32>
    %358 = arith.divf %356, %357 : vector<2x16xf32>
    %359 = arith.mulf %350, %332 : vector<2x16xf32>
    %360 = arith.mulf %344, %352 : vector<2x16xf32>
    %361 = arith.addf %359, %360 : vector<2x16xf32>
    %362 = math.tanh %361 : vector<2x16xf32>
    %363 = arith.mulf %358, %362 : vector<2x16xf32>
    %c8_80 = arith.constant 8 : index
    %c16_81 = arith.constant 16 : index
    %364 = vector.load %arg19[%c8_80, %c16_81] : memref<16x32xf32, #tpu.memory_space<vmem>>, vector<2x16xf32>
    tpu.vector_store %arg19[%c8_80, %c16_81], %363 {strides = array<i32>} : memref<16x32xf32, #tpu.memory_space<vmem>>, vector<2x16xf32>,
    %365 = vector.extract_strided_slice %245 {offsets = [6, 0], sizes = [2, 64], strides = [1, 1]} : vector<16x64xf32> to vector<2x64xf32>
    %cst_82 = arith.constant dense<0.000000e+00> : vector<2x64xf32>
    %366 = tpu.matmul %363, %246, %cst_82 {dimension_numbers = #tpu.dot_dimension_numbers<[1], [0], [0], [1], [0, 0, 1, 1], [], []>} : vector<2x16xf32>, vector<16x64xf32>, vector<2x64xf32> -> vector<2x64xf32>
    %367 = arith.addf %365, %366 : vector<2x64xf32>
    %368 = vector.extract_strided_slice %367 {offsets = [0, 0], sizes = [2, 16], strides = [1, 1]} : vector<2x64xf32> to vector<2x16xf32>
    %369 = arith.negf %368 : vector<2x16xf32>
    %370 = math.exp %369 : vector<2x16xf32>
    %cst_83 = arith.constant 1.000000e+00 : f32
    %371 = vector.broadcast %cst_83 : f32 to vector<2x16xf32>
    %372 = arith.addf %371, %370 : vector<2x16xf32>
    %373 = arith.divf %371, %372 : vector<2x16xf32>
    %374 = vector.extract_strided_slice %367 {offsets = [0, 16], sizes = [2, 16], strides = [1, 1]} : vector<2x64xf32> to vector<2x16xf32>
    %375 = arith.negf %374 : vector<2x16xf32>
    %376 = math.exp %375 : vector<2x16xf32>
    %cst_84 = arith.constant 1.000000e+00 : f32
    %377 = vector.broadcast %cst_84 : f32 to vector<2x16xf32>
    %378 = arith.addf %377, %376 : vector<2x16xf32>
    %379 = arith.divf %377, %378 : vector<2x16xf32>
    %380 = vector.extract_strided_slice %367 {offsets = [0, 32], sizes = [2, 16], strides = [1, 1]} : vector<2x64xf32> to vector<2x16xf32>
    %381 = math.tanh %380 : vector<2x16xf32>
    %382 = vector.extract_strided_slice %367 {offsets = [0, 48], sizes = [2, 16], strides = [1, 1]} : vector<2x64xf32> to vector<2x16xf32>
    %383 = arith.negf %382 : vector<2x16xf32>
    %384 = math.exp %383 : vector<2x16xf32>
    %cst_85 = arith.constant 1.000000e+00 : f32
    %385 = vector.broadcast %cst_85 : f32 to vector<2x16xf32>
    %386 = arith.addf %385, %384 : vector<2x16xf32>
    %387 = arith.divf %385, %386 : vector<2x16xf32>
    %388 = arith.mulf %379, %361 : vector<2x16xf32>
    %389 = arith.mulf %373, %381 : vector<2x16xf32>
    %390 = arith.addf %388, %389 : vector<2x16xf32>
    %391 = math.tanh %390 : vector<2x16xf32>
    %392 = arith.mulf %387, %391 : vector<2x16xf32>
    %c6_86 = arith.constant 6 : index
    %c16_87 = arith.constant 16 : index
    %393 = vector.load %arg19[%c6_86, %c16_87] : memref<16x32xf32, #tpu.memory_space<vmem>>, vector<2x16xf32>
    tpu.vector_store %arg19[%c6_86, %c16_87], %392 {strides = array<i32>} : memref<16x32xf32, #tpu.memory_space<vmem>>, vector<2x16xf32>,
    %394 = vector.extract_strided_slice %245 {offsets = [4, 0], sizes = [2, 64], strides = [1, 1]} : vector<16x64xf32> to vector<2x64xf32>
    %cst_88 = arith.constant dense<0.000000e+00> : vector<2x64xf32>
    %395 = tpu.matmul %392, %246, %cst_88 {dimension_numbers = #tpu.dot_dimension_numbers<[1], [0], [0], [1], [0, 0, 1, 1], [], []>} : vector<2x16xf32>, vector<16x64xf32>, vector<2x64xf32> -> vector<2x64xf32>
    %396 = arith.addf %394, %395 : vector<2x64xf32>
    %397 = vector.extract_strided_slice %396 {offsets = [0, 0], sizes = [2, 16], strides = [1, 1]} : vector<2x64xf32> to vector<2x16xf32>
    %398 = arith.negf %397 : vector<2x16xf32>
    %399 = math.exp %398 : vector<2x16xf32>
    %cst_89 = arith.constant 1.000000e+00 : f32
    %400 = vector.broadcast %cst_89 : f32 to vector<2x16xf32>
    %401 = arith.addf %400, %399 : vector<2x16xf32>
    %402 = arith.divf %400, %401 : vector<2x16xf32>
    %403 = vector.extract_strided_slice %396 {offsets = [0, 16], sizes = [2, 16], strides = [1, 1]} : vector<2x64xf32> to vector<2x16xf32>
    %404 = arith.negf %403 : vector<2x16xf32>
    %405 = math.exp %404 : vector<2x16xf32>
    %cst_90 = arith.constant 1.000000e+00 : f32
    %406 = vector.broadcast %cst_90 : f32 to vector<2x16xf32>
    %407 = arith.addf %406, %405 : vector<2x16xf32>
    %408 = arith.divf %406, %407 : vector<2x16xf32>
    %409 = vector.extract_strided_slice %396 {offsets = [0, 32], sizes = [2, 16], strides = [1, 1]} : vector<2x64xf32> to vector<2x16xf32>
    %410 = math.tanh %409 : vector<2x16xf32>
    %411 = vector.extract_strided_slice %396 {offsets = [0, 48], sizes = [2, 16], strides = [1, 1]} : vector<2x64xf32> to vector<2x16xf32>
    %412 = arith.negf %411 : vector<2x16xf32>
    %413 = math.exp %412 : vector<2x16xf32>
    %cst_91 = arith.constant 1.000000e+00 : f32
    %414 = vector.broadcast %cst_91 : f32 to vector<2x16xf32>
    %415 = arith.addf %414, %413 : vector<2x16xf32>
    %416 = arith.divf %414, %415 : vector<2x16xf32>
    %417 = arith.mulf %408, %390 : vector<2x16xf32>
    %418 = arith.mulf %402, %410 : vector<2x16xf32>
    %419 = arith.addf %417, %418 : vector<2x16xf32>
    %420 = math.tanh %419 : vector<2x16xf32>
    %421 = arith.mulf %416, %420 : vector<2x16xf32>
    %c4_92 = arith.constant 4 : index
    %c16_93 = arith.constant 16 : index
    %422 = vector.load %arg19[%c4_92, %c16_93] : memref<16x32xf32, #tpu.memory_space<vmem>>, vector<2x16xf32>
    tpu.vector_store %arg19[%c4_92, %c16_93], %421 {strides = array<i32>} : memref<16x32xf32, #tpu.memory_space<vmem>>, vector<2x16xf32>,
    %423 = vector.extract_strided_slice %245 {offsets = [2, 0], sizes = [2, 64], strides = [1, 1]} : vector<16x64xf32> to vector<2x64xf32>
    %cst_94 = arith.constant dense<0.000000e+00> : vector<2x64xf32>
    %424 = tpu.matmul %421, %246, %cst_94 {dimension_numbers = #tpu.dot_dimension_numbers<[1], [0], [0], [1], [0, 0, 1, 1], [], []>} : vector<2x16xf32>, vector<16x64xf32>, vector<2x64xf32> -> vector<2x64xf32>
    %425 = arith.addf %423, %424 : vector<2x64xf32>
    %426 = vector.extract_strided_slice %425 {offsets = [0, 0], sizes = [2, 16], strides = [1, 1]} : vector<2x64xf32> to vector<2x16xf32>
    %427 = arith.negf %426 : vector<2x16xf32>
    %428 = math.exp %427 : vector<2x16xf32>
    %cst_95 = arith.constant 1.000000e+00 : f32
    %429 = vector.broadcast %cst_95 : f32 to vector<2x16xf32>
    %430 = arith.addf %429, %428 : vector<2x16xf32>
    %431 = arith.divf %429, %430 : vector<2x16xf32>
    %432 = vector.extract_strided_slice %425 {offsets = [0, 16], sizes = [2, 16], strides = [1, 1]} : vector<2x64xf32> to vector<2x16xf32>
    %433 = arith.negf %432 : vector<2x16xf32>
    %434 = math.exp %433 : vector<2x16xf32>
    %cst_96 = arith.constant 1.000000e+00 : f32
    %435 = vector.broadcast %cst_96 : f32 to vector<2x16xf32>
    %436 = arith.addf %435, %434 : vector<2x16xf32>
    %437 = arith.divf %435, %436 : vector<2x16xf32>
    %438 = vector.extract_strided_slice %425 {offsets = [0, 32], sizes = [2, 16], strides = [1, 1]} : vector<2x64xf32> to vector<2x16xf32>
    %439 = math.tanh %438 : vector<2x16xf32>
    %440 = vector.extract_strided_slice %425 {offsets = [0, 48], sizes = [2, 16], strides = [1, 1]} : vector<2x64xf32> to vector<2x16xf32>
    %441 = arith.negf %440 : vector<2x16xf32>
    %442 = math.exp %441 : vector<2x16xf32>
    %cst_97 = arith.constant 1.000000e+00 : f32
    %443 = vector.broadcast %cst_97 : f32 to vector<2x16xf32>
    %444 = arith.addf %443, %442 : vector<2x16xf32>
    %445 = arith.divf %443, %444 : vector<2x16xf32>
    %446 = arith.mulf %437, %419 : vector<2x16xf32>
    %447 = arith.mulf %431, %439 : vector<2x16xf32>
    %448 = arith.addf %446, %447 : vector<2x16xf32>
    %449 = math.tanh %448 : vector<2x16xf32>
    %450 = arith.mulf %445, %449 : vector<2x16xf32>
    %c2_98 = arith.constant 2 : index
    %c16_99 = arith.constant 16 : index
    %451 = vector.load %arg19[%c2_98, %c16_99] : memref<16x32xf32, #tpu.memory_space<vmem>>, vector<2x16xf32>
    tpu.vector_store %arg19[%c2_98, %c16_99], %450 {strides = array<i32>} : memref<16x32xf32, #tpu.memory_space<vmem>>, vector<2x16xf32>,
    %452 = vector.extract_strided_slice %245 {offsets = [0, 0], sizes = [2, 64], strides = [1, 1]} : vector<16x64xf32> to vector<2x64xf32>
    %cst_100 = arith.constant dense<0.000000e+00> : vector<2x64xf32>
    %453 = tpu.matmul %450, %246, %cst_100 {dimension_numbers = #tpu.dot_dimension_numbers<[1], [0], [0], [1], [0, 0, 1, 1], [], []>} : vector<2x16xf32>, vector<16x64xf32>, vector<2x64xf32> -> vector<2x64xf32>
    %454 = arith.addf %452, %453 : vector<2x64xf32>
    %455 = vector.extract_strided_slice %454 {offsets = [0, 0], sizes = [2, 16], strides = [1, 1]} : vector<2x64xf32> to vector<2x16xf32>
    %456 = arith.negf %455 : vector<2x16xf32>
    %457 = math.exp %456 : vector<2x16xf32>
    %cst_101 = arith.constant 1.000000e+00 : f32
    %458 = vector.broadcast %cst_101 : f32 to vector<2x16xf32>
    %459 = arith.addf %458, %457 : vector<2x16xf32>
    %460 = arith.divf %458, %459 : vector<2x16xf32>
    %461 = vector.extract_strided_slice %454 {offsets = [0, 16], sizes = [2, 16], strides = [1, 1]} : vector<2x64xf32> to vector<2x16xf32>
    %462 = arith.negf %461 : vector<2x16xf32>
    %463 = math.exp %462 : vector<2x16xf32>
    %cst_102 = arith.constant 1.000000e+00 : f32
    %464 = vector.broadcast %cst_102 : f32 to vector<2x16xf32>
    %465 = arith.addf %464, %463 : vector<2x16xf32>
    %466 = arith.divf %464, %465 : vector<2x16xf32>
    %467 = vector.extract_strided_slice %454 {offsets = [0, 32], sizes = [2, 16], strides = [1, 1]} : vector<2x64xf32> to vector<2x16xf32>
    %468 = math.tanh %467 : vector<2x16xf32>
    %469 = vector.extract_strided_slice %454 {offsets = [0, 48], sizes = [2, 16], strides = [1, 1]} : vector<2x64xf32> to vector<2x16xf32>
    %470 = arith.negf %469 : vector<2x16xf32>
    %471 = math.exp %470 : vector<2x16xf32>
    %cst_103 = arith.constant 1.000000e+00 : f32
    %472 = vector.broadcast %cst_103 : f32 to vector<2x16xf32>
    %473 = arith.addf %472, %471 : vector<2x16xf32>
    %474 = arith.divf %472, %473 : vector<2x16xf32>
    %475 = arith.mulf %466, %448 : vector<2x16xf32>
    %476 = arith.mulf %460, %468 : vector<2x16xf32>
    %477 = arith.addf %475, %476 : vector<2x16xf32>
    %478 = math.tanh %477 : vector<2x16xf32>
    %479 = arith.mulf %474, %478 : vector<2x16xf32>
    %c0_104 = arith.constant 0 : index
    %c16_105 = arith.constant 16 : index
    %480 = vector.load %arg19[%c0_104, %c16_105] : memref<16x32xf32, #tpu.memory_space<vmem>>, vector<2x16xf32>
    tpu.vector_store %arg19[%c0_104, %c16_105], %479 {strides = array<i32>} : memref<16x32xf32, #tpu.memory_space<vmem>>, vector<2x16xf32>,
    %c0_106 = arith.constant 0 : index
    %c0_107 = arith.constant 0 : index
    %481 = vector.load %arg19[%c0_106, %c0_107] : memref<16x32xf32, #tpu.memory_space<vmem>>, vector<16x32xf32>
    %c0_108 = arith.constant 0 : index
    %c0_109 = arith.constant 0 : index
    %482 = vector.load %arg8[%c0_108, %c0_109] : memref<32x64xf32, #tpu.memory_space<vmem>>, vector<32x64xf32>
    %cst_110 = arith.constant dense<0.000000e+00> : vector<16x64xf32>
    %483 = tpu.matmul %481, %482, %cst_110 {dimension_numbers = #tpu.dot_dimension_numbers<[1], [0], [0], [1], [0, 0, 1, 1], [], []>} : vector<16x32xf32>, vector<32x64xf32>, vector<16x64xf32> -> vector<16x64xf32>
    %c0_111 = arith.constant 0 : index
    %c0_112 = arith.constant 0 : index
    %484 = vector.load %arg10[%c0_111, %c0_112] : memref<1x64xf32, #tpu.memory_space<vmem>>, vector<1x64xf32>
    %485 = vector.broadcast %484 : vector<1x64xf32> to vector<16x64xf32>
    %486 = arith.addf %483, %485 : vector<16x64xf32>
    %c0_113 = arith.constant 0 : index
    %c0_114 = arith.constant 0 : index
    %487 = vector.load %arg9[%c0_113, %c0_114] : memref<16x64xf32, #tpu.memory_space<vmem>>, vector<16x64xf32>
    %cst_115 = arith.constant 0.000000e+00 : f32
    %488 = vector.broadcast %cst_115 : f32 to vector<2x16xf32>
    %cst_116 = arith.constant 0.000000e+00 : f32
    %489 = vector.broadcast %cst_116 : f32 to vector<2x16xf32>
    %cst_117 = arith.constant 0xFF800000 : f32
    %490 = vector.broadcast %cst_117 : f32 to vector<2x16xf32>
    %491 = vector.extract_strided_slice %486 {offsets = [0, 0], sizes = [2, 64], strides = [1, 1]} : vector<16x64xf32> to vector<2x64xf32>
    %cst_118 = arith.constant dense<0.000000e+00> : vector<2x64xf32>
    %492 = tpu.matmul %488, %487, %cst_118 {dimension_numbers = #tpu.dot_dimension_numbers<[1], [0], [0], [1], [0, 0, 1, 1], [], []>} : vector<2x16xf32>, vector<16x64xf32>, vector<2x64xf32> -> vector<2x64xf32>
    %493 = arith.addf %491, %492 : vector<2x64xf32>
    %494 = vector.extract_strided_slice %493 {offsets = [0, 0], sizes = [2, 16], strides = [1, 1]} : vector<2x64xf32> to vector<2x16xf32>
    %495 = arith.negf %494 : vector<2x16xf32>
    %496 = math.exp %495 : vector<2x16xf32>
    %cst_119 = arith.constant 1.000000e+00 : f32
    %497 = vector.broadcast %cst_119 : f32 to vector<2x16xf32>
    %498 = arith.addf %497, %496 : vector<2x16xf32>
    %499 = arith.divf %497, %498 : vector<2x16xf32>
    %500 = vector.extract_strided_slice %493 {offsets = [0, 16], sizes = [2, 16], strides = [1, 1]} : vector<2x64xf32> to vector<2x16xf32>
    %501 = arith.negf %500 : vector<2x16xf32>
    %502 = math.exp %501 : vector<2x16xf32>
    %cst_120 = arith.constant 1.000000e+00 : f32
    %503 = vector.broadcast %cst_120 : f32 to vector<2x16xf32>
    %504 = arith.addf %503, %502 : vector<2x16xf32>
    %505 = arith.divf %503, %504 : vector<2x16xf32>
    %506 = vector.extract_strided_slice %493 {offsets = [0, 32], sizes = [2, 16], strides = [1, 1]} : vector<2x64xf32> to vector<2x16xf32>
    %507 = math.tanh %506 : vector<2x16xf32>
    %508 = vector.extract_strided_slice %493 {offsets = [0, 48], sizes = [2, 16], strides = [1, 1]} : vector<2x64xf32> to vector<2x16xf32>
    %509 = arith.negf %508 : vector<2x16xf32>
    %510 = math.exp %509 : vector<2x16xf32>
    %cst_121 = arith.constant 1.000000e+00 : f32
    %511 = vector.broadcast %cst_121 : f32 to vector<2x16xf32>
    %512 = arith.addf %511, %510 : vector<2x16xf32>
    %513 = arith.divf %511, %512 : vector<2x16xf32>
    %514 = arith.mulf %505, %489 : vector<2x16xf32>
    %515 = arith.mulf %499, %507 : vector<2x16xf32>
    %516 = arith.addf %514, %515 : vector<2x16xf32>
    %517 = math.tanh %516 : vector<2x16xf32>
    %518 = arith.mulf %513, %517 : vector<2x16xf32>
    %519 = arith.maximumf %490, %518 : vector<2x16xf32>
    %520 = vector.extract_strided_slice %486 {offsets = [2, 0], sizes = [2, 64], strides = [1, 1]} : vector<16x64xf32> to vector<2x64xf32>
    %cst_122 = arith.constant dense<0.000000e+00> : vector<2x64xf32>
    %521 = tpu.matmul %518, %487, %cst_122 {dimension_numbers = #tpu.dot_dimension_numbers<[1], [0], [0], [1], [0, 0, 1, 1], [], []>} : vector<2x16xf32>, vector<16x64xf32>, vector<2x64xf32> -> vector<2x64xf32>
    %522 = arith.addf %520, %521 : vector<2x64xf32>
    %523 = vector.extract_strided_slice %522 {offsets = [0, 0], sizes = [2, 16], strides = [1, 1]} : vector<2x64xf32> to vector<2x16xf32>
    %524 = arith.negf %523 : vector<2x16xf32>
    %525 = math.exp %524 : vector<2x16xf32>
    %cst_123 = arith.constant 1.000000e+00 : f32
    %526 = vector.broadcast %cst_123 : f32 to vector<2x16xf32>
    %527 = arith.addf %526, %525 : vector<2x16xf32>
    %528 = arith.divf %526, %527 : vector<2x16xf32>
    %529 = vector.extract_strided_slice %522 {offsets = [0, 16], sizes = [2, 16], strides = [1, 1]} : vector<2x64xf32> to vector<2x16xf32>
    %530 = arith.negf %529 : vector<2x16xf32>
    %531 = math.exp %530 : vector<2x16xf32>
    %cst_124 = arith.constant 1.000000e+00 : f32
    %532 = vector.broadcast %cst_124 : f32 to vector<2x16xf32>
    %533 = arith.addf %532, %531 : vector<2x16xf32>
    %534 = arith.divf %532, %533 : vector<2x16xf32>
    %535 = vector.extract_strided_slice %522 {offsets = [0, 32], sizes = [2, 16], strides = [1, 1]} : vector<2x64xf32> to vector<2x16xf32>
    %536 = math.tanh %535 : vector<2x16xf32>
    %537 = vector.extract_strided_slice %522 {offsets = [0, 48], sizes = [2, 16], strides = [1, 1]} : vector<2x64xf32> to vector<2x16xf32>
    %538 = arith.negf %537 : vector<2x16xf32>
    %539 = math.exp %538 : vector<2x16xf32>
    %cst_125 = arith.constant 1.000000e+00 : f32
    %540 = vector.broadcast %cst_125 : f32 to vector<2x16xf32>
    %541 = arith.addf %540, %539 : vector<2x16xf32>
    %542 = arith.divf %540, %541 : vector<2x16xf32>
    %543 = arith.mulf %534, %516 : vector<2x16xf32>
    %544 = arith.mulf %528, %536 : vector<2x16xf32>
    %545 = arith.addf %543, %544 : vector<2x16xf32>
    %546 = math.tanh %545 : vector<2x16xf32>
    %547 = arith.mulf %542, %546 : vector<2x16xf32>
    %548 = arith.maximumf %519, %547 : vector<2x16xf32>
    %549 = vector.extract_strided_slice %486 {offsets = [4, 0], sizes = [2, 64], strides = [1, 1]} : vector<16x64xf32> to vector<2x64xf32>
    %cst_126 = arith.constant dense<0.000000e+00> : vector<2x64xf32>
    %550 = tpu.matmul %547, %487, %cst_126 {dimension_numbers = #tpu.dot_dimension_numbers<[1], [0], [0], [1], [0, 0, 1, 1], [], []>} : vector<2x16xf32>, vector<16x64xf32>, vector<2x64xf32> -> vector<2x64xf32>
    %551 = arith.addf %549, %550 : vector<2x64xf32>
    %552 = vector.extract_strided_slice %551 {offsets = [0, 0], sizes = [2, 16], strides = [1, 1]} : vector<2x64xf32> to vector<2x16xf32>
    %553 = arith.negf %552 : vector<2x16xf32>
    %554 = math.exp %553 : vector<2x16xf32>
    %cst_127 = arith.constant 1.000000e+00 : f32
    %555 = vector.broadcast %cst_127 : f32 to vector<2x16xf32>
    %556 = arith.addf %555, %554 : vector<2x16xf32>
    %557 = arith.divf %555, %556 : vector<2x16xf32>
    %558 = vector.extract_strided_slice %551 {offsets = [0, 16], sizes = [2, 16], strides = [1, 1]} : vector<2x64xf32> to vector<2x16xf32>
    %559 = arith.negf %558 : vector<2x16xf32>
    %560 = math.exp %559 : vector<2x16xf32>
    %cst_128 = arith.constant 1.000000e+00 : f32
    %561 = vector.broadcast %cst_128 : f32 to vector<2x16xf32>
    %562 = arith.addf %561, %560 : vector<2x16xf32>
    %563 = arith.divf %561, %562 : vector<2x16xf32>
    %564 = vector.extract_strided_slice %551 {offsets = [0, 32], sizes = [2, 16], strides = [1, 1]} : vector<2x64xf32> to vector<2x16xf32>
    %565 = math.tanh %564 : vector<2x16xf32>
    %566 = vector.extract_strided_slice %551 {offsets = [0, 48], sizes = [2, 16], strides = [1, 1]} : vector<2x64xf32> to vector<2x16xf32>
    %567 = arith.negf %566 : vector<2x16xf32>
    %568 = math.exp %567 : vector<2x16xf32>
    %cst_129 = arith.constant 1.000000e+00 : f32
    %569 = vector.broadcast %cst_129 : f32 to vector<2x16xf32>
    %570 = arith.addf %569, %568 : vector<2x16xf32>
    %571 = arith.divf %569, %570 : vector<2x16xf32>
    %572 = arith.mulf %563, %545 : vector<2x16xf32>
    %573 = arith.mulf %557, %565 : vector<2x16xf32>
    %574 = arith.addf %572, %573 : vector<2x16xf32>
    %575 = math.tanh %574 : vector<2x16xf32>
    %576 = arith.mulf %571, %575 : vector<2x16xf32>
    %577 = arith.maximumf %548, %576 : vector<2x16xf32>
    %578 = vector.extract_strided_slice %486 {offsets = [6, 0], sizes = [2, 64], strides = [1, 1]} : vector<16x64xf32> to vector<2x64xf32>
    %cst_130 = arith.constant dense<0.000000e+00> : vector<2x64xf32>
    %579 = tpu.matmul %576, %487, %cst_130 {dimension_numbers = #tpu.dot_dimension_numbers<[1], [0], [0], [1], [0, 0, 1, 1], [], []>} : vector<2x16xf32>, vector<16x64xf32>, vector<2x64xf32> -> vector<2x64xf32>
    %580 = arith.addf %578, %579 : vector<2x64xf32>
    %581 = vector.extract_strided_slice %580 {offsets = [0, 0], sizes = [2, 16], strides = [1, 1]} : vector<2x64xf32> to vector<2x16xf32>
    %582 = arith.negf %581 : vector<2x16xf32>
    %583 = math.exp %582 : vector<2x16xf32>
    %cst_131 = arith.constant 1.000000e+00 : f32
    %584 = vector.broadcast %cst_131 : f32 to vector<2x16xf32>
    %585 = arith.addf %584, %583 : vector<2x16xf32>
    %586 = arith.divf %584, %585 : vector<2x16xf32>
    %587 = vector.extract_strided_slice %580 {offsets = [0, 16], sizes = [2, 16], strides = [1, 1]} : vector<2x64xf32> to vector<2x16xf32>
    %588 = arith.negf %587 : vector<2x16xf32>
    %589 = math.exp %588 : vector<2x16xf32>
    %cst_132 = arith.constant 1.000000e+00 : f32
    %590 = vector.broadcast %cst_132 : f32 to vector<2x16xf32>
    %591 = arith.addf %590, %589 : vector<2x16xf32>
    %592 = arith.divf %590, %591 : vector<2x16xf32>
    %593 = vector.extract_strided_slice %580 {offsets = [0, 32], sizes = [2, 16], strides = [1, 1]} : vector<2x64xf32> to vector<2x16xf32>
    %594 = math.tanh %593 : vector<2x16xf32>
    %595 = vector.extract_strided_slice %580 {offsets = [0, 48], sizes = [2, 16], strides = [1, 1]} : vector<2x64xf32> to vector<2x16xf32>
    %596 = arith.negf %595 : vector<2x16xf32>
    %597 = math.exp %596 : vector<2x16xf32>
    %cst_133 = arith.constant 1.000000e+00 : f32
    %598 = vector.broadcast %cst_133 : f32 to vector<2x16xf32>
    %599 = arith.addf %598, %597 : vector<2x16xf32>
    %600 = arith.divf %598, %599 : vector<2x16xf32>
    %601 = arith.mulf %592, %574 : vector<2x16xf32>
    %602 = arith.mulf %586, %594 : vector<2x16xf32>
    %603 = arith.addf %601, %602 : vector<2x16xf32>
    %604 = math.tanh %603 : vector<2x16xf32>
    %605 = arith.mulf %600, %604 : vector<2x16xf32>
    %606 = arith.maximumf %577, %605 : vector<2x16xf32>
    %607 = vector.extract_strided_slice %486 {offsets = [8, 0], sizes = [2, 64], strides = [1, 1]} : vector<16x64xf32> to vector<2x64xf32>
    %cst_134 = arith.constant dense<0.000000e+00> : vector<2x64xf32>
    %608 = tpu.matmul %605, %487, %cst_134 {dimension_numbers = #tpu.dot_dimension_numbers<[1], [0], [0], [1], [0, 0, 1, 1], [], []>} : vector<2x16xf32>, vector<16x64xf32>, vector<2x64xf32> -> vector<2x64xf32>
    %609 = arith.addf %607, %608 : vector<2x64xf32>
    %610 = vector.extract_strided_slice %609 {offsets = [0, 0], sizes = [2, 16], strides = [1, 1]} : vector<2x64xf32> to vector<2x16xf32>
    %611 = arith.negf %610 : vector<2x16xf32>
    %612 = math.exp %611 : vector<2x16xf32>
    %cst_135 = arith.constant 1.000000e+00 : f32
    %613 = vector.broadcast %cst_135 : f32 to vector<2x16xf32>
    %614 = arith.addf %613, %612 : vector<2x16xf32>
    %615 = arith.divf %613, %614 : vector<2x16xf32>
    %616 = vector.extract_strided_slice %609 {offsets = [0, 16], sizes = [2, 16], strides = [1, 1]} : vector<2x64xf32> to vector<2x16xf32>
    %617 = arith.negf %616 : vector<2x16xf32>
    %618 = math.exp %617 : vector<2x16xf32>
    %cst_136 = arith.constant 1.000000e+00 : f32
    %619 = vector.broadcast %cst_136 : f32 to vector<2x16xf32>
    %620 = arith.addf %619, %618 : vector<2x16xf32>
    %621 = arith.divf %619, %620 : vector<2x16xf32>
    %622 = vector.extract_strided_slice %609 {offsets = [0, 32], sizes = [2, 16], strides = [1, 1]} : vector<2x64xf32> to vector<2x16xf32>
    %623 = math.tanh %622 : vector<2x16xf32>
    %624 = vector.extract_strided_slice %609 {offsets = [0, 48], sizes = [2, 16], strides = [1, 1]} : vector<2x64xf32> to vector<2x16xf32>
    %625 = arith.negf %624 : vector<2x16xf32>
    %626 = math.exp %625 : vector<2x16xf32>
    %cst_137 = arith.constant 1.000000e+00 : f32
    %627 = vector.broadcast %cst_137 : f32 to vector<2x16xf32>
    %628 = arith.addf %627, %626 : vector<2x16xf32>
    %629 = arith.divf %627, %628 : vector<2x16xf32>
    %630 = arith.mulf %621, %603 : vector<2x16xf32>
    %631 = arith.mulf %615, %623 : vector<2x16xf32>
    %632 = arith.addf %630, %631 : vector<2x16xf32>
    %633 = math.tanh %632 : vector<2x16xf32>
    %634 = arith.mulf %629, %633 : vector<2x16xf32>
    %635 = arith.maximumf %606, %634 : vector<2x16xf32>
    %636 = vector.extract_strided_slice %486 {offsets = [10, 0], sizes = [2, 64], strides = [1, 1]} : vector<16x64xf32> to vector<2x64xf32>
    %cst_138 = arith.constant dense<0.000000e+00> : vector<2x64xf32>
    %637 = tpu.matmul %634, %487, %cst_138 {dimension_numbers = #tpu.dot_dimension_numbers<[1], [0], [0], [1], [0, 0, 1, 1], [], []>} : vector<2x16xf32>, vector<16x64xf32>, vector<2x64xf32> -> vector<2x64xf32>
    %638 = arith.addf %636, %637 : vector<2x64xf32>
    %639 = vector.extract_strided_slice %638 {offsets = [0, 0], sizes = [2, 16], strides = [1, 1]} : vector<2x64xf32> to vector<2x16xf32>
    %640 = arith.negf %639 : vector<2x16xf32>
    %641 = math.exp %640 : vector<2x16xf32>
    %cst_139 = arith.constant 1.000000e+00 : f32
    %642 = vector.broadcast %cst_139 : f32 to vector<2x16xf32>
    %643 = arith.addf %642, %641 : vector<2x16xf32>
    %644 = arith.divf %642, %643 : vector<2x16xf32>
    %645 = vector.extract_strided_slice %638 {offsets = [0, 16], sizes = [2, 16], strides = [1, 1]} : vector<2x64xf32> to vector<2x16xf32>
    %646 = arith.negf %645 : vector<2x16xf32>
    %647 = math.exp %646 : vector<2x16xf32>
    %cst_140 = arith.constant 1.000000e+00 : f32
    %648 = vector.broadcast %cst_140 : f32 to vector<2x16xf32>
    %649 = arith.addf %648, %647 : vector<2x16xf32>
    %650 = arith.divf %648, %649 : vector<2x16xf32>
    %651 = vector.extract_strided_slice %638 {offsets = [0, 32], sizes = [2, 16], strides = [1, 1]} : vector<2x64xf32> to vector<2x16xf32>
    %652 = math.tanh %651 : vector<2x16xf32>
    %653 = vector.extract_strided_slice %638 {offsets = [0, 48], sizes = [2, 16], strides = [1, 1]} : vector<2x64xf32> to vector<2x16xf32>
    %654 = arith.negf %653 : vector<2x16xf32>
    %655 = math.exp %654 : vector<2x16xf32>
    %cst_141 = arith.constant 1.000000e+00 : f32
    %656 = vector.broadcast %cst_141 : f32 to vector<2x16xf32>
    %657 = arith.addf %656, %655 : vector<2x16xf32>
    %658 = arith.divf %656, %657 : vector<2x16xf32>
    %659 = arith.mulf %650, %632 : vector<2x16xf32>
    %660 = arith.mulf %644, %652 : vector<2x16xf32>
    %661 = arith.addf %659, %660 : vector<2x16xf32>
    %662 = math.tanh %661 : vector<2x16xf32>
    %663 = arith.mulf %658, %662 : vector<2x16xf32>
    %664 = arith.maximumf %635, %663 : vector<2x16xf32>
    %665 = vector.extract_strided_slice %486 {offsets = [12, 0], sizes = [2, 64], strides = [1, 1]} : vector<16x64xf32> to vector<2x64xf32>
    %cst_142 = arith.constant dense<0.000000e+00> : vector<2x64xf32>
    %666 = tpu.matmul %663, %487, %cst_142 {dimension_numbers = #tpu.dot_dimension_numbers<[1], [0], [0], [1], [0, 0, 1, 1], [], []>} : vector<2x16xf32>, vector<16x64xf32>, vector<2x64xf32> -> vector<2x64xf32>
    %667 = arith.addf %665, %666 : vector<2x64xf32>
    %668 = vector.extract_strided_slice %667 {offsets = [0, 0], sizes = [2, 16], strides = [1, 1]} : vector<2x64xf32> to vector<2x16xf32>
    %669 = arith.negf %668 : vector<2x16xf32>
    %670 = math.exp %669 : vector<2x16xf32>
    %cst_143 = arith.constant 1.000000e+00 : f32
    %671 = vector.broadcast %cst_143 : f32 to vector<2x16xf32>
    %672 = arith.addf %671, %670 : vector<2x16xf32>
    %673 = arith.divf %671, %672 : vector<2x16xf32>
    %674 = vector.extract_strided_slice %667 {offsets = [0, 16], sizes = [2, 16], strides = [1, 1]} : vector<2x64xf32> to vector<2x16xf32>
    %675 = arith.negf %674 : vector<2x16xf32>
    %676 = math.exp %675 : vector<2x16xf32>
    %cst_144 = arith.constant 1.000000e+00 : f32
    %677 = vector.broadcast %cst_144 : f32 to vector<2x16xf32>
    %678 = arith.addf %677, %676 : vector<2x16xf32>
    %679 = arith.divf %677, %678 : vector<2x16xf32>
    %680 = vector.extract_strided_slice %667 {offsets = [0, 32], sizes = [2, 16], strides = [1, 1]} : vector<2x64xf32> to vector<2x16xf32>
    %681 = math.tanh %680 : vector<2x16xf32>
    %682 = vector.extract_strided_slice %667 {offsets = [0, 48], sizes = [2, 16], strides = [1, 1]} : vector<2x64xf32> to vector<2x16xf32>
    %683 = arith.negf %682 : vector<2x16xf32>
    %684 = math.exp %683 : vector<2x16xf32>
    %cst_145 = arith.constant 1.000000e+00 : f32
    %685 = vector.broadcast %cst_145 : f32 to vector<2x16xf32>
    %686 = arith.addf %685, %684 : vector<2x16xf32>
    %687 = arith.divf %685, %686 : vector<2x16xf32>
    %688 = arith.mulf %679, %661 : vector<2x16xf32>
    %689 = arith.mulf %673, %681 : vector<2x16xf32>
    %690 = arith.addf %688, %689 : vector<2x16xf32>
    %691 = math.tanh %690 : vector<2x16xf32>
    %692 = arith.mulf %687, %691 : vector<2x16xf32>
    %693 = arith.maximumf %664, %692 : vector<2x16xf32>
    %694 = vector.extract_strided_slice %486 {offsets = [14, 0], sizes = [2, 64], strides = [1, 1]} : vector<16x64xf32> to vector<2x64xf32>
    %cst_146 = arith.constant dense<0.000000e+00> : vector<2x64xf32>
    %695 = tpu.matmul %692, %487, %cst_146 {dimension_numbers = #tpu.dot_dimension_numbers<[1], [0], [0], [1], [0, 0, 1, 1], [], []>} : vector<2x16xf32>, vector<16x64xf32>, vector<2x64xf32> -> vector<2x64xf32>
    %696 = arith.addf %694, %695 : vector<2x64xf32>
    %697 = vector.extract_strided_slice %696 {offsets = [0, 0], sizes = [2, 16], strides = [1, 1]} : vector<2x64xf32> to vector<2x16xf32>
    %698 = arith.negf %697 : vector<2x16xf32>
    %699 = math.exp %698 : vector<2x16xf32>
    %cst_147 = arith.constant 1.000000e+00 : f32
    %700 = vector.broadcast %cst_147 : f32 to vector<2x16xf32>
    %701 = arith.addf %700, %699 : vector<2x16xf32>
    %702 = arith.divf %700, %701 : vector<2x16xf32>
    %703 = vector.extract_strided_slice %696 {offsets = [0, 16], sizes = [2, 16], strides = [1, 1]} : vector<2x64xf32> to vector<2x16xf32>
    %704 = arith.negf %703 : vector<2x16xf32>
    %705 = math.exp %704 : vector<2x16xf32>
    %cst_148 = arith.constant 1.000000e+00 : f32
    %706 = vector.broadcast %cst_148 : f32 to vector<2x16xf32>
    %707 = arith.addf %706, %705 : vector<2x16xf32>
    %708 = arith.divf %706, %707 : vector<2x16xf32>
    %709 = vector.extract_strided_slice %696 {offsets = [0, 32], sizes = [2, 16], strides = [1, 1]} : vector<2x64xf32> to vector<2x16xf32>
    %710 = math.tanh %709 : vector<2x16xf32>
    %711 = vector.extract_strided_slice %696 {offsets = [0, 48], sizes = [2, 16], strides = [1, 1]} : vector<2x64xf32> to vector<2x16xf32>
    %712 = arith.negf %711 : vector<2x16xf32>
    %713 = math.exp %712 : vector<2x16xf32>
    %cst_149 = arith.constant 1.000000e+00 : f32
    %714 = vector.broadcast %cst_149 : f32 to vector<2x16xf32>
    %715 = arith.addf %714, %713 : vector<2x16xf32>
    %716 = arith.divf %714, %715 : vector<2x16xf32>
    %717 = arith.mulf %708, %690 : vector<2x16xf32>
    %718 = arith.mulf %702, %710 : vector<2x16xf32>
    %719 = arith.addf %717, %718 : vector<2x16xf32>
    %720 = math.tanh %719 : vector<2x16xf32>
    %721 = arith.mulf %716, %720 : vector<2x16xf32>
    %722 = arith.maximumf %693, %721 : vector<2x16xf32>
    %c0_150 = arith.constant 0 : index
    %c0_151 = arith.constant 0 : index
    %723 = vector.load %arg11[%c0_150, %c0_151] : memref<32x64xf32, #tpu.memory_space<vmem>>, vector<32x64xf32>
    %cst_152 = arith.constant dense<0.000000e+00> : vector<16x64xf32>
    %724 = tpu.matmul %481, %723, %cst_152 {dimension_numbers = #tpu.dot_dimension_numbers<[1], [0], [0], [1], [0, 0, 1, 1], [], []>} : vector<16x32xf32>, vector<32x64xf32>, vector<16x64xf32> -> vector<16x64xf32>
    %c0_153 = arith.constant 0 : index
    %c0_154 = arith.constant 0 : index
    %725 = vector.load %arg13[%c0_153, %c0_154] : memref<1x64xf32, #tpu.memory_space<vmem>>, vector<1x64xf32>
    %726 = vector.broadcast %725 : vector<1x64xf32> to vector<16x64xf32>
    %727 = arith.addf %724, %726 : vector<16x64xf32>
    %c0_155 = arith.constant 0 : index
    %c0_156 = arith.constant 0 : index
    %728 = vector.load %arg12[%c0_155, %c0_156] : memref<16x64xf32, #tpu.memory_space<vmem>>, vector<16x64xf32>
    %cst_157 = arith.constant 0.000000e+00 : f32
    %729 = vector.broadcast %cst_157 : f32 to vector<2x16xf32>
    %cst_158 = arith.constant 0.000000e+00 : f32
    %730 = vector.broadcast %cst_158 : f32 to vector<2x16xf32>
    %cst_159 = arith.constant 0xFF800000 : f32
    %731 = vector.broadcast %cst_159 : f32 to vector<2x16xf32>
    %732 = vector.extract_strided_slice %727 {offsets = [14, 0], sizes = [2, 64], strides = [1, 1]} : vector<16x64xf32> to vector<2x64xf32>
    %cst_160 = arith.constant dense<0.000000e+00> : vector<2x64xf32>
    %733 = tpu.matmul %729, %728, %cst_160 {dimension_numbers = #tpu.dot_dimension_numbers<[1], [0], [0], [1], [0, 0, 1, 1], [], []>} : vector<2x16xf32>, vector<16x64xf32>, vector<2x64xf32> -> vector<2x64xf32>
    %734 = arith.addf %732, %733 : vector<2x64xf32>
    %735 = vector.extract_strided_slice %734 {offsets = [0, 0], sizes = [2, 16], strides = [1, 1]} : vector<2x64xf32> to vector<2x16xf32>
    %736 = arith.negf %735 : vector<2x16xf32>
    %737 = math.exp %736 : vector<2x16xf32>
    %cst_161 = arith.constant 1.000000e+00 : f32
    %738 = vector.broadcast %cst_161 : f32 to vector<2x16xf32>
    %739 = arith.addf %738, %737 : vector<2x16xf32>
    %740 = arith.divf %738, %739 : vector<2x16xf32>
    %741 = vector.extract_strided_slice %734 {offsets = [0, 16], sizes = [2, 16], strides = [1, 1]} : vector<2x64xf32> to vector<2x16xf32>
    %742 = arith.negf %741 : vector<2x16xf32>
    %743 = math.exp %742 : vector<2x16xf32>
    %cst_162 = arith.constant 1.000000e+00 : f32
    %744 = vector.broadcast %cst_162 : f32 to vector<2x16xf32>
    %745 = arith.addf %744, %743 : vector<2x16xf32>
    %746 = arith.divf %744, %745 : vector<2x16xf32>
    %747 = vector.extract_strided_slice %734 {offsets = [0, 32], sizes = [2, 16], strides = [1, 1]} : vector<2x64xf32> to vector<2x16xf32>
    %748 = math.tanh %747 : vector<2x16xf32>
    %749 = vector.extract_strided_slice %734 {offsets = [0, 48], sizes = [2, 16], strides = [1, 1]} : vector<2x64xf32> to vector<2x16xf32>
    %750 = arith.negf %749 : vector<2x16xf32>
    %751 = math.exp %750 : vector<2x16xf32>
    %cst_163 = arith.constant 1.000000e+00 : f32
    %752 = vector.broadcast %cst_163 : f32 to vector<2x16xf32>
    %753 = arith.addf %752, %751 : vector<2x16xf32>
    %754 = arith.divf %752, %753 : vector<2x16xf32>
    %755 = arith.mulf %746, %730 : vector<2x16xf32>
    %756 = arith.mulf %740, %748 : vector<2x16xf32>
    %757 = arith.addf %755, %756 : vector<2x16xf32>
    %758 = math.tanh %757 : vector<2x16xf32>
    %759 = arith.mulf %754, %758 : vector<2x16xf32>
    %760 = arith.maximumf %731, %759 : vector<2x16xf32>
    %761 = vector.extract_strided_slice %727 {offsets = [12, 0], sizes = [2, 64], strides = [1, 1]} : vector<16x64xf32> to vector<2x64xf32>
    %cst_164 = arith.constant dense<0.000000e+00> : vector<2x64xf32>
    %762 = tpu.matmul %759, %728, %cst_164 {dimension_numbers = #tpu.dot_dimension_numbers<[1], [0], [0], [1], [0, 0, 1, 1], [], []>} : vector<2x16xf32>, vector<16x64xf32>, vector<2x64xf32> -> vector<2x64xf32>
    %763 = arith.addf %761, %762 : vector<2x64xf32>
    %764 = vector.extract_strided_slice %763 {offsets = [0, 0], sizes = [2, 16], strides = [1, 1]} : vector<2x64xf32> to vector<2x16xf32>
    %765 = arith.negf %764 : vector<2x16xf32>
    %766 = math.exp %765 : vector<2x16xf32>
    %cst_165 = arith.constant 1.000000e+00 : f32
    %767 = vector.broadcast %cst_165 : f32 to vector<2x16xf32>
    %768 = arith.addf %767, %766 : vector<2x16xf32>
    %769 = arith.divf %767, %768 : vector<2x16xf32>
    %770 = vector.extract_strided_slice %763 {offsets = [0, 16], sizes = [2, 16], strides = [1, 1]} : vector<2x64xf32> to vector<2x16xf32>
    %771 = arith.negf %770 : vector<2x16xf32>
    %772 = math.exp %771 : vector<2x16xf32>
    %cst_166 = arith.constant 1.000000e+00 : f32
    %773 = vector.broadcast %cst_166 : f32 to vector<2x16xf32>
    %774 = arith.addf %773, %772 : vector<2x16xf32>
    %775 = arith.divf %773, %774 : vector<2x16xf32>
    %776 = vector.extract_strided_slice %763 {offsets = [0, 32], sizes = [2, 16], strides = [1, 1]} : vector<2x64xf32> to vector<2x16xf32>
    %777 = math.tanh %776 : vector<2x16xf32>
    %778 = vector.extract_strided_slice %763 {offsets = [0, 48], sizes = [2, 16], strides = [1, 1]} : vector<2x64xf32> to vector<2x16xf32>
    %779 = arith.negf %778 : vector<2x16xf32>
    %780 = math.exp %779 : vector<2x16xf32>
    %cst_167 = arith.constant 1.000000e+00 : f32
    %781 = vector.broadcast %cst_167 : f32 to vector<2x16xf32>
    %782 = arith.addf %781, %780 : vector<2x16xf32>
    %783 = arith.divf %781, %782 : vector<2x16xf32>
    %784 = arith.mulf %775, %757 : vector<2x16xf32>
    %785 = arith.mulf %769, %777 : vector<2x16xf32>
    %786 = arith.addf %784, %785 : vector<2x16xf32>
    %787 = math.tanh %786 : vector<2x16xf32>
    %788 = arith.mulf %783, %787 : vector<2x16xf32>
    %789 = arith.maximumf %760, %788 : vector<2x16xf32>
    %790 = vector.extract_strided_slice %727 {offsets = [10, 0], sizes = [2, 64], strides = [1, 1]} : vector<16x64xf32> to vector<2x64xf32>
    %cst_168 = arith.constant dense<0.000000e+00> : vector<2x64xf32>
    %791 = tpu.matmul %788, %728, %cst_168 {dimension_numbers = #tpu.dot_dimension_numbers<[1], [0], [0], [1], [0, 0, 1, 1], [], []>} : vector<2x16xf32>, vector<16x64xf32>, vector<2x64xf32> -> vector<2x64xf32>
    %792 = arith.addf %790, %791 : vector<2x64xf32>
    %793 = vector.extract_strided_slice %792 {offsets = [0, 0], sizes = [2, 16], strides = [1, 1]} : vector<2x64xf32> to vector<2x16xf32>
    %794 = arith.negf %793 : vector<2x16xf32>
    %795 = math.exp %794 : vector<2x16xf32>
    %cst_169 = arith.constant 1.000000e+00 : f32
    %796 = vector.broadcast %cst_169 : f32 to vector<2x16xf32>
    %797 = arith.addf %796, %795 : vector<2x16xf32>
    %798 = arith.divf %796, %797 : vector<2x16xf32>
    %799 = vector.extract_strided_slice %792 {offsets = [0, 16], sizes = [2, 16], strides = [1, 1]} : vector<2x64xf32> to vector<2x16xf32>
    %800 = arith.negf %799 : vector<2x16xf32>
    %801 = math.exp %800 : vector<2x16xf32>
    %cst_170 = arith.constant 1.000000e+00 : f32
    %802 = vector.broadcast %cst_170 : f32 to vector<2x16xf32>
    %803 = arith.addf %802, %801 : vector<2x16xf32>
    %804 = arith.divf %802, %803 : vector<2x16xf32>
    %805 = vector.extract_strided_slice %792 {offsets = [0, 32], sizes = [2, 16], strides = [1, 1]} : vector<2x64xf32> to vector<2x16xf32>
    %806 = math.tanh %805 : vector<2x16xf32>
    %807 = vector.extract_strided_slice %792 {offsets = [0, 48], sizes = [2, 16], strides = [1, 1]} : vector<2x64xf32> to vector<2x16xf32>
    %808 = arith.negf %807 : vector<2x16xf32>
    %809 = math.exp %808 : vector<2x16xf32>
    %cst_171 = arith.constant 1.000000e+00 : f32
    %810 = vector.broadcast %cst_171 : f32 to vector<2x16xf32>
    %811 = arith.addf %810, %809 : vector<2x16xf32>
    %812 = arith.divf %810, %811 : vector<2x16xf32>
    %813 = arith.mulf %804, %786 : vector<2x16xf32>
    %814 = arith.mulf %798, %806 : vector<2x16xf32>
    %815 = arith.addf %813, %814 : vector<2x16xf32>
    %816 = math.tanh %815 : vector<2x16xf32>
    %817 = arith.mulf %812, %816 : vector<2x16xf32>
    %818 = arith.maximumf %789, %817 : vector<2x16xf32>
    %819 = vector.extract_strided_slice %727 {offsets = [8, 0], sizes = [2, 64], strides = [1, 1]} : vector<16x64xf32> to vector<2x64xf32>
    %cst_172 = arith.constant dense<0.000000e+00> : vector<2x64xf32>
    %820 = tpu.matmul %817, %728, %cst_172 {dimension_numbers = #tpu.dot_dimension_numbers<[1], [0], [0], [1], [0, 0, 1, 1], [], []>} : vector<2x16xf32>, vector<16x64xf32>, vector<2x64xf32> -> vector<2x64xf32>
    %821 = arith.addf %819, %820 : vector<2x64xf32>
    %822 = vector.extract_strided_slice %821 {offsets = [0, 0], sizes = [2, 16], strides = [1, 1]} : vector<2x64xf32> to vector<2x16xf32>
    %823 = arith.negf %822 : vector<2x16xf32>
    %824 = math.exp %823 : vector<2x16xf32>
    %cst_173 = arith.constant 1.000000e+00 : f32
    %825 = vector.broadcast %cst_173 : f32 to vector<2x16xf32>
    %826 = arith.addf %825, %824 : vector<2x16xf32>
    %827 = arith.divf %825, %826 : vector<2x16xf32>
    %828 = vector.extract_strided_slice %821 {offsets = [0, 16], sizes = [2, 16], strides = [1, 1]} : vector<2x64xf32> to vector<2x16xf32>
    %829 = arith.negf %828 : vector<2x16xf32>
    %830 = math.exp %829 : vector<2x16xf32>
    %cst_174 = arith.constant 1.000000e+00 : f32
    %831 = vector.broadcast %cst_174 : f32 to vector<2x16xf32>
    %832 = arith.addf %831, %830 : vector<2x16xf32>
    %833 = arith.divf %831, %832 : vector<2x16xf32>
    %834 = vector.extract_strided_slice %821 {offsets = [0, 32], sizes = [2, 16], strides = [1, 1]} : vector<2x64xf32> to vector<2x16xf32>
    %835 = math.tanh %834 : vector<2x16xf32>
    %836 = vector.extract_strided_slice %821 {offsets = [0, 48], sizes = [2, 16], strides = [1, 1]} : vector<2x64xf32> to vector<2x16xf32>
    %837 = arith.negf %836 : vector<2x16xf32>
    %838 = math.exp %837 : vector<2x16xf32>
    %cst_175 = arith.constant 1.000000e+00 : f32
    %839 = vector.broadcast %cst_175 : f32 to vector<2x16xf32>
    %840 = arith.addf %839, %838 : vector<2x16xf32>
    %841 = arith.divf %839, %840 : vector<2x16xf32>
    %842 = arith.mulf %833, %815 : vector<2x16xf32>
    %843 = arith.mulf %827, %835 : vector<2x16xf32>
    %844 = arith.addf %842, %843 : vector<2x16xf32>
    %845 = math.tanh %844 : vector<2x16xf32>
    %846 = arith.mulf %841, %845 : vector<2x16xf32>
    %847 = arith.maximumf %818, %846 : vector<2x16xf32>
    %848 = vector.extract_strided_slice %727 {offsets = [6, 0], sizes = [2, 64], strides = [1, 1]} : vector<16x64xf32> to vector<2x64xf32>
    %cst_176 = arith.constant dense<0.000000e+00> : vector<2x64xf32>
    %849 = tpu.matmul %846, %728, %cst_176 {dimension_numbers = #tpu.dot_dimension_numbers<[1], [0], [0], [1], [0, 0, 1, 1], [], []>} : vector<2x16xf32>, vector<16x64xf32>, vector<2x64xf32> -> vector<2x64xf32>
    %850 = arith.addf %848, %849 : vector<2x64xf32>
    %851 = vector.extract_strided_slice %850 {offsets = [0, 0], sizes = [2, 16], strides = [1, 1]} : vector<2x64xf32> to vector<2x16xf32>
    %852 = arith.negf %851 : vector<2x16xf32>
    %853 = math.exp %852 : vector<2x16xf32>
    %cst_177 = arith.constant 1.000000e+00 : f32
    %854 = vector.broadcast %cst_177 : f32 to vector<2x16xf32>
    %855 = arith.addf %854, %853 : vector<2x16xf32>
    %856 = arith.divf %854, %855 : vector<2x16xf32>
    %857 = vector.extract_strided_slice %850 {offsets = [0, 16], sizes = [2, 16], strides = [1, 1]} : vector<2x64xf32> to vector<2x16xf32>
    %858 = arith.negf %857 : vector<2x16xf32>
    %859 = math.exp %858 : vector<2x16xf32>
    %cst_178 = arith.constant 1.000000e+00 : f32
    %860 = vector.broadcast %cst_178 : f32 to vector<2x16xf32>
    %861 = arith.addf %860, %859 : vector<2x16xf32>
    %862 = arith.divf %860, %861 : vector<2x16xf32>
    %863 = vector.extract_strided_slice %850 {offsets = [0, 32], sizes = [2, 16], strides = [1, 1]} : vector<2x64xf32> to vector<2x16xf32>
    %864 = math.tanh %863 : vector<2x16xf32>
    %865 = vector.extract_strided_slice %850 {offsets = [0, 48], sizes = [2, 16], strides = [1, 1]} : vector<2x64xf32> to vector<2x16xf32>
    %866 = arith.negf %865 : vector<2x16xf32>
    %867 = math.exp %866 : vector<2x16xf32>
    %cst_179 = arith.constant 1.000000e+00 : f32
    %868 = vector.broadcast %cst_179 : f32 to vector<2x16xf32>
    %869 = arith.addf %868, %867 : vector<2x16xf32>
    %870 = arith.divf %868, %869 : vector<2x16xf32>
    %871 = arith.mulf %862, %844 : vector<2x16xf32>
    %872 = arith.mulf %856, %864 : vector<2x16xf32>
    %873 = arith.addf %871, %872 : vector<2x16xf32>
    %874 = math.tanh %873 : vector<2x16xf32>
    %875 = arith.mulf %870, %874 : vector<2x16xf32>
    %876 = arith.maximumf %847, %875 : vector<2x16xf32>
    %877 = vector.extract_strided_slice %727 {offsets = [4, 0], sizes = [2, 64], strides = [1, 1]} : vector<16x64xf32> to vector<2x64xf32>
    %cst_180 = arith.constant dense<0.000000e+00> : vector<2x64xf32>
    %878 = tpu.matmul %875, %728, %cst_180 {dimension_numbers = #tpu.dot_dimension_numbers<[1], [0], [0], [1], [0, 0, 1, 1], [], []>} : vector<2x16xf32>, vector<16x64xf32>, vector<2x64xf32> -> vector<2x64xf32>
    %879 = arith.addf %877, %878 : vector<2x64xf32>
    %880 = vector.extract_strided_slice %879 {offsets = [0, 0], sizes = [2, 16], strides = [1, 1]} : vector<2x64xf32> to vector<2x16xf32>
    %881 = arith.negf %880 : vector<2x16xf32>
    %882 = math.exp %881 : vector<2x16xf32>
    %cst_181 = arith.constant 1.000000e+00 : f32
    %883 = vector.broadcast %cst_181 : f32 to vector<2x16xf32>
    %884 = arith.addf %883, %882 : vector<2x16xf32>
    %885 = arith.divf %883, %884 : vector<2x16xf32>
    %886 = vector.extract_strided_slice %879 {offsets = [0, 16], sizes = [2, 16], strides = [1, 1]} : vector<2x64xf32> to vector<2x16xf32>
    %887 = arith.negf %886 : vector<2x16xf32>
    %888 = math.exp %887 : vector<2x16xf32>
    %cst_182 = arith.constant 1.000000e+00 : f32
    %889 = vector.broadcast %cst_182 : f32 to vector<2x16xf32>
    %890 = arith.addf %889, %888 : vector<2x16xf32>
    %891 = arith.divf %889, %890 : vector<2x16xf32>
    %892 = vector.extract_strided_slice %879 {offsets = [0, 32], sizes = [2, 16], strides = [1, 1]} : vector<2x64xf32> to vector<2x16xf32>
    %893 = math.tanh %892 : vector<2x16xf32>
    %894 = vector.extract_strided_slice %879 {offsets = [0, 48], sizes = [2, 16], strides = [1, 1]} : vector<2x64xf32> to vector<2x16xf32>
    %895 = arith.negf %894 : vector<2x16xf32>
    %896 = math.exp %895 : vector<2x16xf32>
    %cst_183 = arith.constant 1.000000e+00 : f32
    %897 = vector.broadcast %cst_183 : f32 to vector<2x16xf32>
    %898 = arith.addf %897, %896 : vector<2x16xf32>
    %899 = arith.divf %897, %898 : vector<2x16xf32>
    %900 = arith.mulf %891, %873 : vector<2x16xf32>
    %901 = arith.mulf %885, %893 : vector<2x16xf32>
    %902 = arith.addf %900, %901 : vector<2x16xf32>
    %903 = math.tanh %902 : vector<2x16xf32>
    %904 = arith.mulf %899, %903 : vector<2x16xf32>
    %905 = arith.maximumf %876, %904 : vector<2x16xf32>
    %906 = vector.extract_strided_slice %727 {offsets = [2, 0], sizes = [2, 64], strides = [1, 1]} : vector<16x64xf32> to vector<2x64xf32>
    %cst_184 = arith.constant dense<0.000000e+00> : vector<2x64xf32>
    %907 = tpu.matmul %904, %728, %cst_184 {dimension_numbers = #tpu.dot_dimension_numbers<[1], [0], [0], [1], [0, 0, 1, 1], [], []>} : vector<2x16xf32>, vector<16x64xf32>, vector<2x64xf32> -> vector<2x64xf32>
    %908 = arith.addf %906, %907 : vector<2x64xf32>
    %909 = vector.extract_strided_slice %908 {offsets = [0, 0], sizes = [2, 16], strides = [1, 1]} : vector<2x64xf32> to vector<2x16xf32>
    %910 = arith.negf %909 : vector<2x16xf32>
    %911 = math.exp %910 : vector<2x16xf32>
    %cst_185 = arith.constant 1.000000e+00 : f32
    %912 = vector.broadcast %cst_185 : f32 to vector<2x16xf32>
    %913 = arith.addf %912, %911 : vector<2x16xf32>
    %914 = arith.divf %912, %913 : vector<2x16xf32>
    %915 = vector.extract_strided_slice %908 {offsets = [0, 16], sizes = [2, 16], strides = [1, 1]} : vector<2x64xf32> to vector<2x16xf32>
    %916 = arith.negf %915 : vector<2x16xf32>
    %917 = math.exp %916 : vector<2x16xf32>
    %cst_186 = arith.constant 1.000000e+00 : f32
    %918 = vector.broadcast %cst_186 : f32 to vector<2x16xf32>
    %919 = arith.addf %918, %917 : vector<2x16xf32>
    %920 = arith.divf %918, %919 : vector<2x16xf32>
    %921 = vector.extract_strided_slice %908 {offsets = [0, 32], sizes = [2, 16], strides = [1, 1]} : vector<2x64xf32> to vector<2x16xf32>
    %922 = math.tanh %921 : vector<2x16xf32>
    %923 = vector.extract_strided_slice %908 {offsets = [0, 48], sizes = [2, 16], strides = [1, 1]} : vector<2x64xf32> to vector<2x16xf32>
    %924 = arith.negf %923 : vector<2x16xf32>
    %925 = math.exp %924 : vector<2x16xf32>
    %cst_187 = arith.constant 1.000000e+00 : f32
    %926 = vector.broadcast %cst_187 : f32 to vector<2x16xf32>
    %927 = arith.addf %926, %925 : vector<2x16xf32>
    %928 = arith.divf %926, %927 : vector<2x16xf32>
    %929 = arith.mulf %920, %902 : vector<2x16xf32>
    %930 = arith.mulf %914, %922 : vector<2x16xf32>
    %931 = arith.addf %929, %930 : vector<2x16xf32>
    %932 = math.tanh %931 : vector<2x16xf32>
    %933 = arith.mulf %928, %932 : vector<2x16xf32>
    %934 = arith.maximumf %905, %933 : vector<2x16xf32>
    %935 = vector.extract_strided_slice %727 {offsets = [0, 0], sizes = [2, 64], strides = [1, 1]} : vector<16x64xf32> to vector<2x64xf32>
    %cst_188 = arith.constant dense<0.000000e+00> : vector<2x64xf32>
    %936 = tpu.matmul %933, %728, %cst_188 {dimension_numbers = #tpu.dot_dimension_numbers<[1], [0], [0], [1], [0, 0, 1, 1], [], []>} : vector<2x16xf32>, vector<16x64xf32>, vector<2x64xf32> -> vector<2x64xf32>
    %937 = arith.addf %935, %936 : vector<2x64xf32>
    %938 = vector.extract_strided_slice %937 {offsets = [0, 0], sizes = [2, 16], strides = [1, 1]} : vector<2x64xf32> to vector<2x16xf32>
    %939 = arith.negf %938 : vector<2x16xf32>
    %940 = math.exp %939 : vector<2x16xf32>
    %cst_189 = arith.constant 1.000000e+00 : f32
    %941 = vector.broadcast %cst_189 : f32 to vector<2x16xf32>
    %942 = arith.addf %941, %940 : vector<2x16xf32>
    %943 = arith.divf %941, %942 : vector<2x16xf32>
    %944 = vector.extract_strided_slice %937 {offsets = [0, 16], sizes = [2, 16], strides = [1, 1]} : vector<2x64xf32> to vector<2x16xf32>
    %945 = arith.negf %944 : vector<2x16xf32>
    %946 = math.exp %945 : vector<2x16xf32>
    %cst_190 = arith.constant 1.000000e+00 : f32
    %947 = vector.broadcast %cst_190 : f32 to vector<2x16xf32>
    %948 = arith.addf %947, %946 : vector<2x16xf32>
    %949 = arith.divf %947, %948 : vector<2x16xf32>
    %950 = vector.extract_strided_slice %937 {offsets = [0, 32], sizes = [2, 16], strides = [1, 1]} : vector<2x64xf32> to vector<2x16xf32>
    %951 = math.tanh %950 : vector<2x16xf32>
    %952 = vector.extract_strided_slice %937 {offsets = [0, 48], sizes = [2, 16], strides = [1, 1]} : vector<2x64xf32> to vector<2x16xf32>
    %953 = arith.negf %952 : vector<2x16xf32>
    %954 = math.exp %953 : vector<2x16xf32>
    %cst_191 = arith.constant 1.000000e+00 : f32
    %955 = vector.broadcast %cst_191 : f32 to vector<2x16xf32>
    %956 = arith.addf %955, %954 : vector<2x16xf32>
    %957 = arith.divf %955, %956 : vector<2x16xf32>
    %958 = arith.mulf %949, %931 : vector<2x16xf32>
    %959 = arith.mulf %943, %951 : vector<2x16xf32>
    %960 = arith.addf %958, %959 : vector<2x16xf32>
    %961 = math.tanh %960 : vector<2x16xf32>
    %962 = arith.mulf %957, %961 : vector<2x16xf32>
    %963 = arith.maximumf %934, %962 : vector<2x16xf32>
    %964 = tpu.concatenate %722, %963 in 1 : vector<2x16xf32>, vector<2x16xf32> -> vector<2x32xf32>
    %c0_192 = arith.constant 0 : index
    %c0_193 = arith.constant 0 : index
    %965 = vector.load %arg14[%c0_192, %c0_193] : memref<32x64xf32, #tpu.memory_space<vmem>>, vector<32x64xf32>
    %cst_194 = arith.constant dense<0.000000e+00> : vector<2x64xf32>
    %966 = tpu.matmul %964, %965, %cst_194 {dimension_numbers = #tpu.dot_dimension_numbers<[1], [0], [0], [1], [0, 0, 1, 1], [], []>} : vector<2x32xf32>, vector<32x64xf32>, vector<2x64xf32> -> vector<2x64xf32>
    %c0_195 = arith.constant 0 : index
    %c0_196 = arith.constant 0 : index
    %967 = vector.load %arg15[%c0_195, %c0_196] : memref<1x64xf32, #tpu.memory_space<vmem>>, vector<1x64xf32>
    %968 = vector.broadcast %967 : vector<1x64xf32> to vector<2x64xf32>
    %969 = arith.addf %966, %968 : vector<2x64xf32>
    %cst_197 = arith.constant 0.000000e+00 : f32
    %970 = vector.broadcast %cst_197 : f32 to vector<2x64xf32>
    %971 = arith.maximumf %969, %970 : vector<2x64xf32>
    %c0_198 = arith.constant 0 : index
    %c0_199 = arith.constant 0 : index
    %972 = vector.load %arg16[%c0_198, %c0_199] : memref<64x1xf32, #tpu.memory_space<vmem>>, vector<64x1xf32>
    %cst_200 = arith.constant dense<0.000000e+00> : vector<2x1xf32>
    %973 = tpu.matmul %971, %972, %cst_200 {dimension_numbers = #tpu.dot_dimension_numbers<[1], [0], [0], [1], [0, 0, 1, 1], [], []>} : vector<2x64xf32>, vector<64x1xf32>, vector<2x1xf32> -> vector<2x1xf32>
    %c0_201 = arith.constant 0 : index
    %c0_202 = arith.constant 0 : index
    %974 = vector.load %arg17[%c0_201, %c0_202] : memref<1x1xf32, #tpu.memory_space<vmem>>, vector<1x1xf32>
    %975 = vector.broadcast %974 : vector<1x1xf32> to vector<2x1xf32>
    %976 = arith.addf %973, %975 : vector<2x1xf32>
    %c0_203 = arith.constant 0 : index
    %c0_204 = arith.constant 0 : index
    %977 = vector.load %arg18[%c0_203, %c0_204] : memref<2x1xf32, #tpu.memory_space<vmem>>, vector<2x1xf32>
    tpu.vector_store %arg18[%c0_203, %c0_204], %976 {strides = array<i32>} : memref<2x1xf32, #tpu.memory_space<vmem>>, vector<2x1xf32>,
    return
  }
  func.func @transform_0(%arg0: i32) -> (i32, i32) {
    %c0_i32 = arith.constant 0 : i32
    %c0_i32_0 = arith.constant 0 : i32
    %c0_i32_1 = arith.constant 0 : i32
    return %c0_i32, %c0_i32_0 : i32, i32
  }
  func.func @transform_1(%arg0: i32) -> (i32, i32) {
    %c0_i32 = arith.constant 0 : i32
    %c0_i32_0 = arith.constant 0 : i32
    %c0_i32_1 = arith.constant 0 : i32
    return %c0_i32, %c0_i32_0 : i32, i32
  }
  func.func @transform_2(%arg0: i32) -> (i32, i32) {
    %c0_i32 = arith.constant 0 : i32
    %c0_i32_0 = arith.constant 0 : i32
    %c0_i32_1 = arith.constant 0 : i32
    return %c0_i32, %c0_i32_0 : i32, i32
  }
  func.func @transform_3(%arg0: i32) -> (i32, i32) {
    %c0_i32 = arith.constant 0 : i32
    %c0_i32_0 = arith.constant 0 : i32
    %c0_i32_1 = arith.constant 0 : i32
    return %c0_i32, %c0_i32_0 : i32, i32
  }
  func.func @transform_4(%arg0: i32) -> (i32, i32) {
    %c0_i32 = arith.constant 0 : i32
    %c0_i32_0 = arith.constant 0 : i32
    %c0_i32_1 = arith.constant 0 : i32
    return %c0_i32, %c0_i32_0 : i32, i32
  }
  func.func @transform_5(%arg0: i32) -> (i32, i32) {
    %c0_i32 = arith.constant 0 : i32
    %c0_i32_0 = arith.constant 0 : i32
    %c0_i32_1 = arith.constant 0 : i32
    return %c0_i32, %c0_i32_0 : i32, i32
  }
  func.func @transform_6(%arg0: i32) -> (i32, i32) {
    %c0_i32 = arith.constant 0 : i32
    %c0_i32_0 = arith.constant 0 : i32
    %c0_i32_1 = arith.constant 0 : i32
    return %c0_i32, %c0_i32_0 : i32, i32
  }
  func.func @transform_7(%arg0: i32) -> (i32, i32) {
    %c0_i32 = arith.constant 0 : i32
    %c0_i32_0 = arith.constant 0 : i32
    %c0_i32_1 = arith.constant 0 : i32
    return %c0_i32, %c0_i32_0 : i32, i32
  }
  func.func @transform_8(%arg0: i32) -> (i32, i32) {
    %c0_i32 = arith.constant 0 : i32
    %c0_i32_0 = arith.constant 0 : i32
    %c0_i32_1 = arith.constant 0 : i32
    return %c0_i32, %c0_i32_0 : i32, i32
  }
  func.func @transform_9(%arg0: i32) -> (i32, i32) {
    %c0_i32 = arith.constant 0 : i32
    %c0_i32_0 = arith.constant 0 : i32
    %c0_i32_1 = arith.constant 0 : i32
    return %c0_i32, %c0_i32_0 : i32, i32
  }
  func.func @transform_10(%arg0: i32) -> (i32, i32) {
    %c0_i32 = arith.constant 0 : i32
    %c0_i32_0 = arith.constant 0 : i32
    %c0_i32_1 = arith.constant 0 : i32
    return %c0_i32, %c0_i32_0 : i32, i32
  }
  func.func @transform_11(%arg0: i32) -> (i32, i32) {
    %c0_i32 = arith.constant 0 : i32
    %c0_i32_0 = arith.constant 0 : i32
    %c0_i32_1 = arith.constant 0 : i32
    return %c0_i32, %c0_i32_0 : i32, i32
  }
  func.func @transform_12(%arg0: i32) -> (i32, i32) {
    %c0_i32 = arith.constant 0 : i32
    %c0_i32_0 = arith.constant 0 : i32
    %c0_i32_1 = arith.constant 0 : i32
    return %c0_i32, %c0_i32_0 : i32, i32
  }
  func.func @transform_13(%arg0: i32) -> (i32, i32) {
    %c0_i32 = arith.constant 0 : i32
    %c0_i32_0 = arith.constant 0 : i32
    %c0_i32_1 = arith.constant 0 : i32
    return %c0_i32, %c0_i32_0 : i32, i32
  }
  func.func @transform_14(%arg0: i32) -> (i32, i32) {
    %c0_i32 = arith.constant 0 : i32
    %c0_i32_0 = arith.constant 0 : i32
    %c0_i32_1 = arith.constant 0 : i32
    return %c0_i32, %c0_i32_0 : i32, i32
  }
  func.func @transform_15(%arg0: i32) -> (i32, i32) {
    %c0_i32 = arith.constant 0 : i32
    %c0_i32_0 = arith.constant 0 : i32
    %c0_i32_1 = arith.constant 0 : i32
    return %c0_i32, %c0_i32_0 : i32, i32
  }
  func.func @transform_16(%arg0: i32) -> (i32, i32) {
    %c0_i32 = arith.constant 0 : i32
    %c0_i32_0 = arith.constant 0 : i32
    %c0_i32_1 = arith.constant 0 : i32
    return %c0_i32, %c0_i32_0 : i32, i32
  }
  func.func @transform_17(%arg0: i32) -> (i32, i32) {
    %c0_i32 = arith.constant 0 : i32
    %c0_i32_0 = arith.constant 0 : i32
    %c0_i32_1 = arith.constant 0 : i32
    return %c0_i32, %c0_i32_0 : i32, i32
  }
}

</mosaic_0001>

<llo_original>
// kernel: tpu_custom_call.1
$region0: #{tpu_custom_call.1}
  #allocation0 [shape = 'u32[]', space=smem, size = 0x4, offset = 0x4, fixed_abs, tag = 'smem constant byte address 0x4 - core index']
  #allocation1 [shape = 'u32[144,128]{1,0:T(1,128)}', space=vmem, size = 0x12000, scoped, tag = 'internal scratch']
  #allocation2 [shape = 'f32[16,32]{1,0:T(8,128)}', space=vmem, size = 0x2000, scoped, tag = 'scratch operand']
  #allocation3 [shape = 'f32[1,1]{1,0:T(1,128)S(1)}', space=vmem, size = 0x200, scoped, tag = 'scoped memory for tpu_custom_call.1']
  %s0 = inlined_call_operand.hbm [shape: f32[16,32], index: 0, kind: input, shape index: {}]
  %s1 = inlined_call_operand.vmem [shape: f32[32,64], index: 1, kind: input, shape index: {}]
  %s2 = inlined_call_operand.hbm [shape: f32[16,64], index: 2, kind: input, shape index: {}]
  %s3 = inlined_call_operand.vmem [shape: f32[1,64], index: 3, kind: input, shape index: {}]
  %s4 = inlined_call_operand.vmem [shape: f32[32,64], index: 4, kind: input, shape index: {}]
  %s5 = inlined_call_operand.hbm [shape: f32[16,64], index: 5, kind: input, shape index: {}]
  %s6 = inlined_call_operand.vmem [shape: f32[1,64], index: 6, kind: input, shape index: {}]
  %s7 = inlined_call_operand.hbm [shape: f32[32,64], index: 7, kind: input, shape index: {}]
  %s8 = inlined_call_operand.hbm [shape: f32[16,64], index: 8, kind: input, shape index: {}]
  %s9 = inlined_call_operand.vmem [shape: f32[1,64], index: 9, kind: input, shape index: {}]
  %s10 = inlined_call_operand.vmem [shape: f32[32,64], index: 10, kind: input, shape index: {}]
  %s11 = inlined_call_operand.hbm [shape: f32[16,64], index: 11, kind: input, shape index: {}]
  %s12 = inlined_call_operand.vmem [shape: f32[1,64], index: 12, kind: input, shape index: {}]
  %s13 = inlined_call_operand.hbm [shape: f32[32,64], index: 13, kind: input, shape index: {}]
  %s14 = inlined_call_operand.vmem [shape: f32[1,64], index: 14, kind: input, shape index: {}]
  %s15 = inlined_call_operand.vmem [shape: f32[64,1], index: 15, kind: input, shape index: {}]
  %s16 = inlined_call_operand.<no memory space> [shape: f32[1,1], index: 16, kind: input, shape index: {}]
  %s17 = inlined_call_operand.vmem [shape: f32[2,1], index: 17, kind: output, shape index: {}]
  %s18 = sld [smem:[#allocation0]]
  $region106: #{tpu_custom_call.1} parent=0
    _
  %s20 = ssub.s32 1, %s18
  %s21 = scalar_select 0, %s20, %s18
  %v22 = vstv %s16
  %23 = vst [vmem:[#allocation3] sm:$0x1] %v22
  $region1: #{tpu_custom_call.1} parent=0
    #allocation4 [shape = 'u8[8192]{0}', space=vmem, size = 0x2000, scoped, tag = 'input window, operand 0, single buffered']
    #allocation5 [shape = 's32[1]{0}', space=sflag, size = 0x4, scoped, tag = 'scoped memory for tpu_custom_call.1']
    #allocation6 [shape = 'u8[8192]{0}', space=vmem, size = 0x2000, scoped, tag = 'input window, operand 2, single buffered']
    #allocation7 [shape = 's32[1]{0}', space=sflag, size = 0x4, scoped, tag = 'scoped memory for tpu_custom_call.1']
    #allocation8 [shape = 'u8[8192]{0}', space=vmem, size = 0x2000, scoped, tag = 'input window, operand 5, single buffered']
    #allocation9 [shape = 'u8[16384]{0}', space=vmem, size = 0x4000, scoped, tag = 'input window, operand 7, single buffered']
    #allocation10 [shape = 's32[1]{0}', space=sflag, size = 0x4, scoped, tag = 'scoped memory for tpu_custom_call.1']
    #allocation11 [shape = 'u8[8192]{0}', space=vmem, size = 0x2000, scoped, tag = 'input window, operand 8, single buffered']
    #allocation12 [shape = 'u8[8192]{0}', space=vmem, size = 0x2000, scoped, tag = 'input window, operand 11, single buffered']
    #allocation13 [shape = 's32[1]{0}', space=sflag, size = 0x4, scoped, tag = 'scoped memory for tpu_custom_call.1']
    #allocation14 [shape = 'u8[16384]{0}', space=vmem, size = 0x4000, scoped, tag = 'input window, operand 13, single buffered']
    %24 = vsyncpa [#allocation5], 0
    %25 = vsyncpa [#allocation7], 0
    %26 = vsyncpa [#allocation10], 0
    %27 = vsyncpa [#allocation13], 0
    // Predicated region
    $region2: #{tpu_custom_call.1} parent=1 // pred_check
      _
    $region3: #{tpu_custom_call.1} parent=1 // pred_check_branch
      %29 = sbr.rel (0) target = $region5
    $region4: #{tpu_custom_call.1} parent=1 // pred_region
      %s31 = ssub.s32 256, 256
      %32 = vsyncadd [#allocation5], %s31
      %s33 = sshll.u32 [#allocation4], 4
      %s34 = int_to_ptr.vmem [resolvable:$true] %s33
      %39 = dma.hbm_to_vmem [thread:$0]  %s0, 256, %s34, [#allocation5], 128, 128, 8
    $region5: #{tpu_custom_call.1} parent=1 // pred_fallthru
      _
    // Predicated region
    $region6: #{tpu_custom_call.1} parent=1 // pred_check
      _
    $region7: #{tpu_custom_call.1} parent=1 // pred_check_branch
      %41 = sbr.rel (0) target = $region9
    $region8: #{tpu_custom_call.1} parent=1 // pred_region
      _
    $region9: #{tpu_custom_call.1} parent=1 // pred_fallthru
      _
    // Predicated region
    $region10: #{tpu_custom_call.1} parent=1 // pred_check
      _
    $region11: #{tpu_custom_call.1} parent=1 // pred_check_branch
      %43 = sbr.rel (0) target = $region13
    $region12: #{tpu_custom_call.1} parent=1 // pred_region
      %s45 = ssub.s32 256, 256
      %46 = vsyncadd [#allocation7], %s45
      %s47 = sshll.u32 [#allocation6], 4
      %s48 = int_to_ptr.vmem [resolvable:$true] %s47
      %53 = dma.hbm_to_vmem [thread:$0]  %s2, 256, %s48, [#allocation7], 128, 128, 8
    $region13: #{tpu_custom_call.1} parent=1 // pred_fallthru
      _
    // Predicated region
    $region14: #{tpu_custom_call.1} parent=1 // pred_check
      _
    $region15: #{tpu_custom_call.1} parent=1 // pred_check_branch
      %55 = sbr.rel (0) target = $region17
    $region16: #{tpu_custom_call.1} parent=1 // pred_region
      _
    $region17: #{tpu_custom_call.1} parent=1 // pred_fallthru
      _
    // Predicated region
    $region18: #{tpu_custom_call.1} parent=1 // pred_check
      _
    $region19: #{tpu_custom_call.1} parent=1 // pred_check_branch
      %57 = sbr.rel (0) target = $region21
    $region20: #{tpu_custom_call.1} parent=1 // pred_region
      _
    $region21: #{tpu_custom_call.1} parent=1 // pred_fallthru
      _
    // Predicated region
    $region22: #{tpu_custom_call.1} parent=1 // pred_check
      _
    $region23: #{tpu_custom_call.1} parent=1 // pred_check_branch
      %59 = sbr.rel (0) target = $region25
    $region24: #{tpu_custom_call.1} parent=1 // pred_region
      %s61 = ssub.s32 256, 256
      %62 = vsyncadd [#allocation7], %s61
      %s63 = sshll.u32 [#allocation8], 4
      %s64 = int_to_ptr.vmem [resolvable:$true] %s63
      %69 = dma.hbm_to_vmem [thread:$0]  %s5, 256, %s64, [#allocation7], 128, 128, 8
    $region25: #{tpu_custom_call.1} parent=1 // pred_fallthru
      _
    // Predicated region
    $region26: #{tpu_custom_call.1} parent=1 // pred_check
      _
    $region27: #{tpu_custom_call.1} parent=1 // pred_check_branch
      %71 = sbr.rel (0) target = $region29
    $region28: #{tpu_custom_call.1} parent=1 // pred_region
      _
    $region29: #{tpu_custom_call.1} parent=1 // pred_fallthru
      _
    // Predicated region
    $region30: #{tpu_custom_call.1} parent=1 // pred_check
      _
    $region31: #{tpu_custom_call.1} parent=1 // pred_check_branch
      %73 = sbr.rel (0) target = $region33
    $region32: #{tpu_custom_call.1} parent=1 // pred_region
      %s75 = ssub.s32 512, 512
      %76 = vsyncadd [#allocation10], %s75
      %s77 = sshll.u32 [#allocation9], 4
      %s78 = int_to_ptr.vmem [resolvable:$true] %s77
      %83 = dma.hbm_to_vmem [thread:$0]  %s7, 512, %s78, [#allocation10], 128, 128, 8
    $region33: #{tpu_custom_call.1} parent=1 // pred_fallthru
      _
    // Predicated region
    $region34: #{tpu_custom_call.1} parent=1 // pred_check
      _
    $region35: #{tpu_custom_call.1} parent=1 // pred_check_branch
      %85 = sbr.rel (0) target = $region37
    $region36: #{tpu_custom_call.1} parent=1 // pred_region
      %s87 = ssub.s32 256, 256
      %88 = vsyncadd [#allocation10], %s87
      %s89 = sshll.u32 [#allocation11], 4
      %s90 = int_to_ptr.vmem [resolvable:$true] %s89
      %95 = dma.hbm_to_vmem [thread:$0]  %s8, 256, %s90, [#allocation10], 128, 128, 8
    $region37: #{tpu_custom_call.1} parent=1 // pred_fallthru
      _
    // Predicated region
    $region38: #{tpu_custom_call.1} parent=1 // pred_check
      _
    $region39: #{tpu_custom_call.1} parent=1 // pred_check_branch
      %97 = sbr.rel (0) target = $region41
    $region40: #{tpu_custom_call.1} parent=1 // pred_region
      _
    $region41: #{tpu_custom_call.1} parent=1 // pred_fallthru
      _
    // Predicated region
    $region42: #{tpu_custom_call.1} parent=1 // pred_check
      _
    $region43: #{tpu_custom_call.1} parent=1 // pred_check_branch
      %99 = sbr.rel (0) target = $region45
    $region44: #{tpu_custom_call.1} parent=1 // pred_region
      _
    $region45: #{tpu_custom_call.1} parent=1 // pred_fallthru
      _
    // Predicated region
    $region46: #{tpu_custom_call.1} parent=1 // pred_check
      _
    $region47: #{tpu_custom_call.1} parent=1 // pred_check_branch
      %101 = sbr.rel (0) target = $region49
    $region48: #{tpu_custom_call.1} parent=1 // pred_region
      %s103 = ssub.s32 256, 256
      %104 = vsyncadd [#allocation13], %s103
      %s105 = sshll.u32 [#allocation12], 4
      %s106 = int_to_ptr.vmem [resolvable:$true] %s105
      %111 = dma.hbm_to_vmem [thread:$0]  %s11, 256, %s106, [#allocation13], 128, 128, 8
    $region49: #{tpu_custom_call.1} parent=1 // pred_fallthru
      _
    // Predicated region
    $region50: #{tpu_custom_call.1} parent=1 // pred_check
      _
    $region51: #{tpu_custom_call.1} parent=1 // pred_check_branch
      %113 = sbr.rel (0) target = $region53
    $region52: #{tpu_custom_call.1} parent=1 // pred_region
      _
    $region53: #{tpu_custom_call.1} parent=1 // pred_fallthru
      _
    // Predicated region
    $region54: #{tpu_custom_call.1} parent=1 // pred_check
      _
    $region55: #{tpu_custom_call.1} parent=1 // pred_check_branch
      %115 = sbr.rel (0) target = $region57
    $region56: #{tpu_custom_call.1} parent=1 // pred_region
      %s117 = ssub.s32 512, 512
      %118 = vsyncadd [#allocation13], %s117
      %s119 = sshll.u32 [#allocation14], 4
      %s120 = int_to_ptr.vmem [resolvable:$true] %s119
      %125 = dma.hbm_to_vmem [thread:$0]  %s13, 512, %s120, [#allocation13], 128, 128, 8
    $region57: #{tpu_custom_call.1} parent=1 // pred_fallthru
      _
    // Predicated region
    $region58: #{tpu_custom_call.1} parent=1 // pred_check
      _
    $region59: #{tpu_custom_call.1} parent=1 // pred_check_branch
      %127 = sbr.rel (0) target = $region61
    $region60: #{tpu_custom_call.1} parent=1 // pred_region
      _
    $region61: #{tpu_custom_call.1} parent=1 // pred_fallthru
      _
    // Predicated region
    $region62: #{tpu_custom_call.1} parent=1 // pred_check
      _
    $region63: #{tpu_custom_call.1} parent=1 // pred_check_branch
      %129 = sbr.rel (0) target = $region65
    $region64: #{tpu_custom_call.1} parent=1 // pred_region
      _
    $region65: #{tpu_custom_call.1} parent=1 // pred_fallthru
      _
    // Predicated region
    $region66: #{tpu_custom_call.1} parent=1 // pred_check
      _
    $region67: #{tpu_custom_call.1} parent=1 // pred_check_branch
      %131 = sbr.rel (0) target = $region69
    $region68: #{tpu_custom_call.1} parent=1 // pred_region
      _
    $region69: #{tpu_custom_call.1} parent=1 // pred_fallthru
      _
    // Predicated region
    $region70: #{tpu_custom_call.1} parent=1 // pred_check
      _
    $region71: #{tpu_custom_call.1} parent=1 // pred_check_branch
      %133 = sbr.rel (0) target = $region73
    $region72: #{tpu_custom_call.1} parent=1 // pred_region
      %134 = dma.done [#allocation5], 256
    $region73: #{tpu_custom_call.1} parent=1 // pred_fallthru
      _
    // Predicated region
    $region74: #{tpu_custom_call.1} parent=1 // pred_check
      _
    $region75: #{tpu_custom_call.1} parent=1 // pred_check_branch
      %136 = sbr.rel (0) target = $region77
    $region76: #{tpu_custom_call.1} parent=1 // pred_region
      %137 = dma.done [#allocation7], 256
    $region77: #{tpu_custom_call.1} parent=1 // pred_fallthru
      _
    // Predicated region
    $region78: #{tpu_custom_call.1} parent=1 // pred_check
      _
    $region79: #{tpu_custom_call.1} parent=1 // pred_check_branch
      %139 = sbr.rel (0) target = $region81
    $region80: #{tpu_custom_call.1} parent=1 // pred_region
      %140 = dma.done [#allocation7], 256
    $region81: #{tpu_custom_call.1} parent=1 // pred_fallthru
      _
    // Predicated region
    $region82: #{tpu_custom_call.1} parent=1 // pred_check
      _
    $region83: #{tpu_custom_call.1} parent=1 // pred_check_branch
      %142 = sbr.rel (0) target = $region85
    $region84: #{tpu_custom_call.1} parent=1 // pred_region
      %143 = dma.done [#allocation10], 512
    $region85: #{tpu_custom_call.1} parent=1 // pred_fallthru
      _
    // Predicated region
    $region86: #{tpu_custom_call.1} parent=1 // pred_check
      _
    $region87: #{tpu_custom_call.1} parent=1 // pred_check_branch
      %145 = sbr.rel (0) target = $region89
    $region88: #{tpu_custom_call.1} parent=1 // pred_region
      %146 = dma.done [#allocation10], 256
    $region89: #{tpu_custom_call.1} parent=1 // pred_fallthru
      _
    // Predicated region
    $region90: #{tpu_custom_call.1} parent=1 // pred_check
      _
    $region91: #{tpu_custom_call.1} parent=1 // pred_check_branch
      %148 = sbr.rel (0) target = $region93
    $region92: #{tpu_custom_call.1} parent=1 // pred_region
      %149 = dma.done [#allocation13], 256
    $region93: #{tpu_custom_call.1} parent=1 // pred_fallthru
      _
    // Predicated region
    $region94: #{tpu_custom_call.1} parent=1 // pred_check
      _
    $region95: #{tpu_custom_call.1} parent=1 // pred_check_branch
      %151 = sbr.rel (0) target = $region97
    $region96: #{tpu_custom_call.1} parent=1 // pred_region
      %152 = dma.done [#allocation13], 512
    $region97: #{tpu_custom_call.1} parent=1 // pred_fallthru
      _
    %v153 = vld [vmem:[#allocation4] sm:$0xff]
    %v154 = vld [vmem:[#allocation4 + $0x8] sm:$0xff]
    %v155 = vld [vmem:[%s1] sm:$0xff]
    %v156 = vld [vmem:[%s1 + $0x8] sm:$0xff]
    %v157 = vld [vmem:[%s1 + $0x10] sm:$0xff]
    %v158 = vld [vmem:[%s1 + $0x18] sm:$0xff]
    %v159 = vld [vmem:[%s3] sm:$0x1]
    %v161 = vlaneseq
    %v162 = vshrl.u32 %v161, 7
    %v163 = vsub.s32 0, %v162
    %v164 = vrot.slane %v159, %v163
    %vm166 = vcmask 261120
    %v168 = vsel %vm166, %v153, 0
    %v171 = vsel %vm166, %v154, 0
    %173 = vmatprep.subr.mxu0 0.0
    %174 = vmatpush1.msra.mxu0 %v155
    %175 = vmatprep.subr.mxu0 0.0
    %176 = vmatpush1.msra.mxu0 %v156
    %177 = vmatprep.subr.mxu0 0.0
    %178 = vmatpush1.msra.mxu0 %v157
    %179 = vmatprep.subr.mxu0 0.0
    %180 = vmatpush1.msra.mxu0 %v158
    %181 = vmatprep.subr.mxu0 0.0
    %182 = vmatpush1.msra.mxu0 0.0
    %183 = vmatprep.subr.mxu0 0.0
    %184 = vmatpush1.msra.mxu0 0.0
    %185 = vmatprep.subr.mxu0 0.0
    %186 = vmatpush1.msra.mxu0 0.0
    %187 = vmatprep.subr.mxu0 0.0
    %188 = vmatpush1.msra.mxu0 0.0
    %189 = vmatprep.subr.mxu0 0.0
    %190 = vmatpush1.msra.mxu0 0.0
    %191 = vmatprep.subr.mxu0 0.0
    %192 = vmatpush1.msra.mxu0 0.0
    %193 = vmatprep.subr.mxu0 0.0
    %194 = vmatpush1.msra.mxu0 0.0
    %195 = vmatprep.subr.mxu0 0.0
    %196 = vmatpush1.msra.mxu0 0.0
    %197 = vmatprep.subr.mxu0 0.0
    %198 = vmatpush1.msra.mxu0 0.0
    %199 = vmatprep.subr.mxu0 0.0
    %200 = vmatpush1.msra.mxu0 0.0
    %201 = vmatprep.subr.mxu0 0.0
    %202 = vmatpush1.msra.mxu0 0.0
    %203 = vmatprep.subr.mxu0 0.0
    %204 = vmatpush1.msra.mxu0 0.0
    %205 = vmatprep.subr.mxu0 0.0
    %206 = vmatpush1.msra.mxu0 0.0
    %207 = vmatprep.subr.mxu0 0.0
    %208 = vmatpush1.msra.mxu0 0.0
    %209 = vmatprep.subr.mxu0 0.0
    %210 = vmatpush1.msra.mxu0 0.0
    %211 = vmatprep.subr.mxu0 0.0
    %212 = vmatpush1.msra.mxu0 0.0
    %213 = vmatprep.subr.mxu0 0.0
    %214 = vmatpush1.msra.mxu0 0.0
    %215 = vmatprep.subr.mxu0 0.0
    %216 = vmatpush1.msra.mxu0 0.0
    %217 = vmatprep.subr.mxu0 0.0
    %218 = vmatpush1.msra.mxu0 0.0
    %219 = vmatprep.subr.mxu0 0.0
    %220 = vmatpush1.msra.mxu0 0.0
    %221 = vmatprep.subr.mxu0 0.0
    %222 = vmatpush1.msra.mxu0 0.0
    %223 = vmatprep.subr.mxu0 0.0
    %224 = vmatpush1.msra.mxu0 0.0
    %225 = vmatprep.subr.mxu0 0.0
    %226 = vmatpush1.msra.mxu0 0.0
    %227 = vmatprep.subr.mxu0 0.0
    %228 = vmatpush1.msra.mxu0 0.0
    %229 = vmatprep.subr.mxu0 0.0
    %230 = vmatpush1.msra.mxu0 0.0
    %231 = vmatprep.subr.mxu0 0.0
    %232 = vmatpush1.msra.mxu0 0.0
    %233 = vmatprep.subr.mxu0 0.0
    %234 = vmatpush1.msra.mxu0 0.0
    %235 = vmatprep.subr.mxu0 0.0
    %236 = vmatpush1.msra.mxu0 0.0
    %237 = vmatprep.mubr.f32.mxu0 0.0
    %238 = vmatmul.mubr.f32.gmra.mrb[0].mxu0 %v168
    %v239 = vpop.f32.mrb[0].mxu0
    %v240 = vadd.f32 %v164, %v239
    %v241 = vpop.f32.mrb[0].mxu0
    %242 = vmatprep.mubr.f32.mxu0 0.0
    %243 = vmatmul.mubr.f32.gmra.mrb[0].mxu0 %v171
    %v244 = vpop.f32.mrb[0].mxu0
    %v245 = vadd.f32 %v164, %v244
    %v246 = vpop.f32.mrb[0].mxu0
    %247 = vdwg.mxu0
    %v248 = vld [vmem:[#allocation6] sm:$0xff]
    %v249 = vld [vmem:[#allocation6 + $0x8] sm:$0xff]
    %vm250 = vcmask 130048
    %v252 = vsel %vm250, 0.0, 0
    %254 = vmatprep.subr.mxu0 0.0
    %255 = vmatpush1.msra.mxu0 %v248
    %256 = vmatprep.subr.mxu0 0.0
    %257 = vmatpush1.msra.mxu0 %v249
    %258 = vmatprep.subr.mxu0 0.0
    %259 = vmatpush1.msra.mxu0 0.0
    %260 = vmatprep.subr.mxu0 0.0
    %261 = vmatpush1.msra.mxu0 0.0
    %262 = vmatprep.subr.mxu0 0.0
    %263 = vmatpush1.msra.mxu0 0.0
    %264 = vmatprep.subr.mxu0 0.0
    %265 = vmatpush1.msra.mxu0 0.0
    %266 = vmatprep.subr.mxu0 0.0
    %267 = vmatpush1.msra.mxu0 0.0
    %268 = vmatprep.subr.mxu0 0.0
    %269 = vmatpush1.msra.mxu0 0.0
    %270 = vmatprep.subr.mxu0 0.0
    %271 = vmatpush1.msra.mxu0 0.0
    %272 = vmatprep.subr.mxu0 0.0
    %273 = vmatpush1.msra.mxu0 0.0
    %274 = vmatprep.subr.mxu0 0.0
    %275 = vmatpush1.msra.mxu0 0.0
    %276 = vmatprep.subr.mxu0 0.0
    %277 = vmatpush1.msra.mxu0 0.0
    %278 = vmatprep.subr.mxu0 0.0
    %279 = vmatpush1.msra.mxu0 0.0
    %280 = vmatprep.subr.mxu0 0.0
    %281 = vmatpush1.msra.mxu0 0.0
    %282 = vmatprep.subr.mxu0 0.0
    %283 = vmatpush1.msra.mxu0 0.0
    %284 = vmatprep.subr.mxu0 0.0
    %285 = vmatpush1.msra.mxu0 0.0
    %286 = vmatprep.subr.mxu0 0.0
    %287 = vmatpush1.msra.mxu0 0.0
    %288 = vmatprep.subr.mxu0 0.0
    %289 = vmatpush1.msra.mxu0 0.0
    %290 = vmatprep.subr.mxu0 0.0
    %291 = vmatpush1.msra.mxu0 0.0
    %292 = vmatprep.subr.mxu0 0.0
    %293 = vmatpush1.msra.mxu0 0.0
    %294 = vmatprep.subr.mxu0 0.0
    %295 = vmatpush1.msra.mxu0 0.0
    %296 = vmatprep.subr.mxu0 0.0
    %297 = vmatpush1.msra.mxu0 0.0
    %298 = vmatprep.subr.mxu0 0.0
    %299 = vmatpush1.msra.mxu0 0.0
    %300 = vmatprep.subr.mxu0 0.0
    %301 = vmatpush1.msra.mxu0 0.0
    %302 = vmatprep.subr.mxu0 0.0
    %303 = vmatpush1.msra.mxu0 0.0
    %304 = vmatprep.subr.mxu0 0.0
    %305 = vmatpush1.msra.mxu0 0.0
    %306 = vmatprep.subr.mxu0 0.0
    %307 = vmatpush1.msra.mxu0 0.0
    %308 = vmatprep.subr.mxu0 0.0
    %309 = vmatpush1.msra.mxu0 0.0
    %310 = vmatprep.subr.mxu0 0.0
    %311 = vmatpush1.msra.mxu0 0.0
    %312 = vmatprep.subr.mxu0 0.0
    %313 = vmatpush1.msra.mxu0 0.0
    %314 = vmatprep.subr.mxu0 0.0
    %315 = vmatpush1.msra.mxu0 0.0
    %316 = vmatprep.subr.mxu0 0.0
    %317 = vmatpush1.msra.mxu0 0.0
    %318 = vmatprep.mubr.f32.mxu0 0.0
    %319 = vmatmul.mubr.f32.gmra.mrb[0].mxu0 %v252
    %v320 = vpop.f32.mrb[0].mxu0
    %v321 = vadd.f32 0.0, %v320
    %v322 = vpop.f32.mrb[0].mxu0
    %323 = vdwg.mxu0
    %v324 = vadd.f32 %v240, %v321
    %v325 = vxor.u32 %v324, 2147483648
    %v326 = vmul.f32 %v325, 1.442695
    %v327 = vpow.pop %v326
    %v328 = vadd.f32 %v327, 1.0
    %v329 = vrcp.pop %v328
    %v330 = vmul.f32 1.0, %v329
    %v331 = vtanh.pop %v324
    %v332 = vmul.f32 %v330, 0.0
    %334 = vrot.lane.b32.xlu0 %v331, 96
    %v335 = vpop.permute.xlu0 %334
    %v337 = vmul.f32 %v330, %v335
    %339 = vrot.lane.b32.xlu0 %v337, 16
    %v340 = vpop.permute.xlu0 %339
    %v342 = vadd.f32 %v332, %v340
    %v343 = vtanh.pop %v342
    %345 = vrot.lane.b32.xlu0 %v343, 32
    %v346 = vpop.permute.xlu0 %345
    %v348 = vmul.f32 %v330, %v346
    %350 = vrot.lane.b32.xlu0 %v348, 80
    %v351 = vpop.permute.xlu0 %350
    %vm353 = vcmask 123904
    %354 = vst.msk [vmem:[#allocation2] sm:$0x3] %vm353, %v351
    %v355 = vsel %vm250, %v351, 0
    %357 = vmatprep.subr.mxu0 0.0
    %358 = vmatpush1.msra.mxu0 %v248
    %359 = vmatprep.subr.mxu0 0.0
    %360 = vmatpush1.msra.mxu0 %v249
    %361 = vmatprep.subr.mxu0 0.0
    %362 = vmatpush1.msra.mxu0 0.0
    %363 = vmatprep.subr.mxu0 0.0
    %364 = vmatpush1.msra.mxu0 0.0
    %365 = vmatprep.subr.mxu0 0.0
    %366 = vmatpush1.msra.mxu0 0.0
    %367 = vmatprep.subr.mxu0 0.0
    %368 = vmatpush1.msra.mxu0 0.0
    %369 = vmatprep.subr.mxu0 0.0
    %370 = vmatpush1.msra.mxu0 0.0
    %371 = vmatprep.subr.mxu0 0.0
    %372 = vmatpush1.msra.mxu0 0.0
    %373 = vmatprep.subr.mxu0 0.0
    %374 = vmatpush1.msra.mxu0 0.0
    %375 = vmatprep.subr.mxu0 0.0
    %376 = vmatpush1.msra.mxu0 0.0
    %377 = vmatprep.subr.mxu0 0.0
    %378 = vmatpush1.msra.mxu0 0.0
    %379 = vmatprep.subr.mxu0 0.0
    %380 = vmatpush1.msra.mxu0 0.0
    %381 = vmatprep.subr.mxu0 0.0
    %382 = vmatpush1.msra.mxu0 0.0
    %383 = vmatprep.subr.mxu0 0.0
    %384 = vmatpush1.msra.mxu0 0.0
    %385 = vmatprep.subr.mxu0 0.0
    %386 = vmatpush1.msra.mxu0 0.0
    %387 = vmatprep.subr.mxu0 0.0
    %388 = vmatpush1.msra.mxu0 0.0
    %389 = vmatprep.subr.mxu0 0.0
    %390 = vmatpush1.msra.mxu0 0.0
    %391 = vmatprep.subr.mxu0 0.0
    %392 = vmatpush1.msra.mxu0 0.0
    %393 = vmatprep.subr.mxu0 0.0
    %394 = vmatpush1.msra.mxu0 0.0
    %395 = vmatprep.subr.mxu0 0.0
    %396 = vmatpush1.msra.mxu0 0.0
    %397 = vmatprep.subr.mxu0 0.0
    %398 = vmatpush1.msra.mxu0 0.0
    %399 = vmatprep.subr.mxu0 0.0
    %400 = vmatpush1.msra.mxu0 0.0
    %401 = vmatprep.subr.mxu0 0.0
    %402 = vmatpush1.msra.mxu0 0.0
    %403 = vmatprep.subr.mxu0 0.0
    %404 = vmatpush1.msra.mxu0 0.0
    %405 = vmatprep.subr.mxu0 0.0
    %406 = vmatpush1.msra.mxu0 0.0
    %407 = vmatprep.subr.mxu0 0.0
    %408 = vmatpush1.msra.mxu0 0.0
    %409 = vmatprep.subr.mxu0 0.0
    %410 = vmatpush1.msra.mxu0 0.0
    %411 = vmatprep.subr.mxu0 0.0
    %412 = vmatpush1.msra.mxu0 0.0
    %413 = vmatprep.subr.mxu0 0.0
    %414 = vmatpush1.msra.mxu0 0.0
    %415 = vmatprep.subr.mxu0 0.0
    %416 = vmatpush1.msra.mxu0 0.0
    %417 = vmatprep.subr.mxu0 0.0
    %418 = vmatpush1.msra.mxu0 0.0
    %419 = vmatprep.subr.mxu0 0.0
    %420 = vmatpush1.msra.mxu0 0.0
    %421 = vmatprep.mubr.f32.mxu0 0.0
    %422 = vmatmul.mubr.f32.gmra.mrb[0].mxu0 %v355
    %v423 = vpop.f32.mrb[0].mxu0
    %v424 = vadd.f32 0.0, %v423
    %v425 = vpop.f32.mrb[0].mxu0
    %426 = vdwg.mxu0
    %v428 = vrot.slane %v424, 6
    %v430 = vadd.f32 %v240, %v428
    %v431 = vxor.u32 %v430, 2147483648
    %v432 = vmul.f32 %v431, 1.442695
    %v433 = vpow.pop %v432
    %v434 = vadd.f32 %v433, 1.0
    %v435 = vrcp.pop %v434
    %v436 = vmul.f32 1.0, %v435
    %v437 = vtanh.pop %v430
    %v439 = vrot.slane %v342, 6
    %v441 = vmul.f32 %v436, %v439
    %443 = vrot.lane.b32.xlu0 %v437, 96
    %v444 = vpop.permute.xlu0 %443
    %v446 = vmul.f32 %v436, %v444
    %448 = vrot.lane.b32.xlu0 %v446, 16
    %v449 = vpop.permute.xlu0 %448
    %v451 = vadd.f32 %v441, %v449
    %v452 = vtanh.pop %v451
    %454 = vrot.lane.b32.xlu0 %v452, 32
    %v455 = vpop.permute.xlu0 %454
    %v457 = vmul.f32 %v436, %v455
    %459 = vrot.lane.b32.xlu0 %v457, 80
    %v460 = vpop.permute.xlu0 %459
    %vm462 = vcmask 125954
    %463 = vst.msk [vmem:[#allocation2] sm:$0xc] %vm462, %v460
    %v464 = vrot.slane %v457, 2
    %465 = vrot.lane.b32.xlu0 %v464, 80
    %v466 = vpop.permute.xlu0 %465
    %v467 = vsel %vm250, %v466, 0
    %469 = vmatprep.subr.mxu0 0.0
    %470 = vmatpush1.msra.mxu0 %v248
    %471 = vmatprep.subr.mxu0 0.0
    %472 = vmatpush1.msra.mxu0 %v249
    %473 = vmatprep.subr.mxu0 0.0
    %474 = vmatpush1.msra.mxu0 0.0
    %475 = vmatprep.subr.mxu0 0.0
    %476 = vmatpush1.msra.mxu0 0.0
    %477 = vmatprep.subr.mxu0 0.0
    %478 = vmatpush1.msra.mxu0 0.0
    %479 = vmatprep.subr.mxu0 0.0
    %480 = vmatpush1.msra.mxu0 0.0
    %481 = vmatprep.subr.mxu0 0.0
    %482 = vmatpush1.msra.mxu0 0.0
    %483 = vmatprep.subr.mxu0 0.0
    %484 = vmatpush1.msra.mxu0 0.0
    %485 = vmatprep.subr.mxu0 0.0
    %486 = vmatpush1.msra.mxu0 0.0
    %487 = vmatprep.subr.mxu0 0.0
    %488 = vmatpush1.msra.mxu0 0.0
    %489 = vmatprep.subr.mxu0 0.0
    %490 = vmatpush1.msra.mxu0 0.0
    %491 = vmatprep.subr.mxu0 0.0
    %492 = vmatpush1.msra.mxu0 0.0
    %493 = vmatprep.subr.mxu0 0.0
    %494 = vmatpush1.msra.mxu0 0.0
    %495 = vmatprep.subr.mxu0 0.0
    %496 = vmatpush1.msra.mxu0 0.0
    %497 = vmatprep.subr.mxu0 0.0
    %498 = vmatpush1.msra.mxu0 0.0
    %499 = vmatprep.subr.mxu0 0.0
    %500 = vmatpush1.msra.mxu0 0.0
    %501 = vmatprep.subr.mxu0 0.0
    %502 = vmatpush1.msra.mxu0 0.0
    %503 = vmatprep.subr.mxu0 0.0
    %504 = vmatpush1.msra.mxu0 0.0
    %505 = vmatprep.subr.mxu0 0.0
    %506 = vmatpush1.msra.mxu0 0.0
    %507 = vmatprep.subr.mxu0 0.0
    %508 = vmatpush1.msra.mxu0 0.0
    %509 = vmatprep.subr.mxu0 0.0
    %510 = vmatpush1.msra.mxu0 0.0
    %511 = vmatprep.subr.mxu0 0.0
    %512 = vmatpush1.msra.mxu0 0.0
    %513 = vmatprep.subr.mxu0 0.0
    %514 = vmatpush1.msra.mxu0 0.0
    %515 = vmatprep.subr.mxu0 0.0
    %516 = vmatpush1.msra.mxu0 0.0
    %517 = vmatprep.subr.mxu0 0.0
    %518 = vmatpush1.msra.mxu0 0.0
    %519 = vmatprep.subr.mxu0 0.0
    %520 = vmatpush1.msra.mxu0 0.0
    %521 = vmatprep.subr.mxu0 0.0
    %522 = vmatpush1.msra.mxu0 0.0
    %523 = vmatprep.subr.mxu0 0.0
    %524 = vmatpush1.msra.mxu0 0.0
    %525 = vmatprep.subr.mxu0 0.0
    %526 = vmatpush1.msra.mxu0 0.0
    %527 = vmatprep.subr.mxu0 0.0
    %528 = vmatpush1.msra.mxu0 0.0
    %529 = vmatprep.subr.mxu0 0.0
    %530 = vmatpush1.msra.mxu0 0.0
    %531 = vmatprep.subr.mxu0 0.0
    %532 = vmatpush1.msra.mxu0 0.0
    %533 = vmatprep.mubr.f32.mxu0 0.0
    %534 = vmatmul.mubr.f32.gmra.mrb[0].mxu0 %v467
    %v535 = vpop.f32.mrb[0].mxu0
    %v536 = vadd.f32 0.0, %v535
    %v537 = vpop.f32.mrb[0].mxu0
    %538 = vdwg.mxu0
    %v540 = vrot.slane %v536, 4
    %v542 = vadd.f32 %v240, %v540
    %v543 = vxor.u32 %v542, 2147483648
    %v544 = vmul.f32 %v543, 1.442695
    %v545 = vpow.pop %v544
    %v546 = vadd.f32 %v545, 1.0
    %v547 = vrcp.pop %v546
    %v548 = vmul.f32 1.0, %v547
    %v549 = vtanh.pop %v542
    %v551 = vrot.slane %v451, 6
    %v553 = vmul.f32 %v548, %v551
    %555 = vrot.lane.b32.xlu0 %v549, 96
    %v556 = vpop.permute.xlu0 %555
    %v558 = vmul.f32 %v548, %v556
    %560 = vrot.lane.b32.xlu0 %v558, 16
    %v561 = vpop.permute.xlu0 %560
    %v563 = vadd.f32 %v553, %v561
    %v564 = vtanh.pop %v563
    %566 = vrot.lane.b32.xlu0 %v564, 32
    %v567 = vpop.permute.xlu0 %566
    %v569 = vmul.f32 %v548, %v567
    %571 = vrot.lane.b32.xlu0 %v569, 80
    %v572 = vpop.permute.xlu0 %571
    %vm574 = vcmask 128004
    %575 = vst.msk [vmem:[#allocation2] sm:$0x30] %vm574, %v572
    %v576 = vrot.slane %v569, 4
    %577 = vrot.lane.b32.xlu0 %v576, 80
    %v578 = vpop.permute.xlu0 %577
    %v579 = vsel %vm250, %v578, 0
    %581 = vmatprep.subr.mxu0 0.0
    %582 = vmatpush1.msra.mxu0 %v248
    %583 = vmatprep.subr.mxu0 0.0
    %584 = vmatpush1.msra.mxu0 %v249
    %585 = vmatprep.subr.mxu0 0.0
    %586 = vmatpush1.msra.mxu0 0.0
    %587 = vmatprep.subr.mxu0 0.0
    %588 = vmatpush1.msra.mxu0 0.0
    %589 = vmatprep.subr.mxu0 0.0
    %590 = vmatpush1.msra.mxu0 0.0
    %591 = vmatprep.subr.mxu0 0.0
    %592 = vmatpush1.msra.mxu0 0.0
    %593 = vmatprep.subr.mxu0 0.0
    %594 = vmatpush1.msra.mxu0 0.0
    %595 = vmatprep.subr.mxu0 0.0
    %596 = vmatpush1.msra.mxu0 0.0
    %597 = vmatprep.subr.mxu0 0.0
    %598 = vmatpush1.msra.mxu0 0.0
    %599 = vmatprep.subr.mxu0 0.0
    %600 = vmatpush1.msra.mxu0 0.0
    %601 = vmatprep.subr.mxu0 0.0
    %602 = vmatpush1.msra.mxu0 0.0
    %603 = vmatprep.subr.mxu0 0.0
    %604 = vmatpush1.msra.mxu0 0.0
    %605 = vmatprep.subr.mxu0 0.0
    %606 = vmatpush1.msra.mxu0 0.0
    %607 = vmatprep.subr.mxu0 0.0
    %608 = vmatpush1.msra.mxu0 0.0
    %609 = vmatprep.subr.mxu0 0.0
    %610 = vmatpush1.msra.mxu0 0.0
    %611 = vmatprep.subr.mxu0 0.0
    %612 = vmatpush1.msra.mxu0 0.0
    %613 = vmatprep.subr.mxu0 0.0
    %614 = vmatpush1.msra.mxu0 0.0
    %615 = vmatprep.subr.mxu0 0.0
    %616 = vmatpush1.msra.mxu0 0.0
    %617 = vmatprep.subr.mxu0 0.0
    %618 = vmatpush1.msra.mxu0 0.0
    %619 = vmatprep.subr.mxu0 0.0
    %620 = vmatpush1.msra.mxu0 0.0
    %621 = vmatprep.subr.mxu0 0.0
    %622 = vmatpush1.msra.mxu0 0.0
    %623 = vmatprep.subr.mxu0 0.0
    %624 = vmatpush1.msra.mxu0 0.0
    %625 = vmatprep.subr.mxu0 0.0
    %626 = vmatpush1.msra.mxu0 0.0
    %627 = vmatprep.subr.mxu0 0.0
    %628 = vmatpush1.msra.mxu0 0.0
    %629 = vmatprep.subr.mxu0 0.0
    %630 = vmatpush1.msra.mxu0 0.0
    %631 = vmatprep.subr.mxu0 0.0
    %632 = vmatpush1.msra.mxu0 0.0
    %633 = vmatprep.subr.mxu0 0.0
    %634 = vmatpush1.msra.mxu0 0.0
    %635 = vmatprep.subr.mxu0 0.0
    %636 = vmatpush1.msra.mxu0 0.0
    %637 = vmatprep.subr.mxu0 0.0
    %638 = vmatpush1.msra.mxu0 0.0
    %639 = vmatprep.subr.mxu0 0.0
    %640 = vmatpush1.msra.mxu0 0.0
    %641 = vmatprep.subr.mxu0 0.0
    %642 = vmatpush1.msra.mxu0 0.0
    %643 = vmatprep.subr.mxu0 0.0
    %644 = vmatpush1.msra.mxu0 0.0
    %645 = vmatprep.mubr.f32.mxu0 0.0
    %646 = vmatmul.mubr.f32.gmra.mrb[0].mxu0 %v579
    %v647 = vpop.f32.mrb[0].mxu0
    %v648 = vadd.f32 0.0, %v647
    %v649 = vpop.f32.mrb[0].mxu0
    %650 = vdwg.mxu0
    %v652 = vrot.slane %v648, 2
    %v654 = vadd.f32 %v240, %v652
    %v655 = vxor.u32 %v654, 2147483648
    %v656 = vmul.f32 %v655, 1.442695
    %v657 = vpow.pop %v656
    %v658 = vadd.f32 %v657, 1.0
    %v659 = vrcp.pop %v658
    %v660 = vmul.f32 1.0, %v659
    %v661 = vtanh.pop %v654
    %v663 = vrot.slane %v563, 6
    %v665 = vmul.f32 %v660, %v663
    %667 = vrot.lane.b32.xlu0 %v661, 96
    %v668 = vpop.permute.xlu0 %667
    %v670 = vmul.f32 %v660, %v668
    %672 = vrot.lane.b32.xlu0 %v670, 16
    %v673 = vpop.permute.xlu0 %672
    %v675 = vadd.f32 %v665, %v673
    %v676 = vtanh.pop %v675
    %678 = vrot.lane.b32.xlu0 %v676, 32
    %v679 = vpop.permute.xlu0 %678
    %v681 = vmul.f32 %v660, %v679
    %683 = vrot.lane.b32.xlu0 %v681, 80
    %v684 = vpop.permute.xlu0 %683
    %vm686 = vcmask 130054
    %687 = vst.msk [vmem:[#allocation2] sm:$0xc0] %vm686, %v684
    %v688 = vrot.slane %v681, 6
    %689 = vrot.lane.b32.xlu0 %v688, 80
    %v690 = vpop.permute.xlu0 %689
    %v691 = vsel %vm250, %v690, 0
    %693 = vmatprep.subr.mxu0 0.0
    %694 = vmatpush1.msra.mxu0 %v248
    %695 = vmatprep.subr.mxu0 0.0
    %696 = vmatpush1.msra.mxu0 %v249
    %697 = vmatprep.subr.mxu0 0.0
    %698 = vmatpush1.msra.mxu0 0.0
    %699 = vmatprep.subr.mxu0 0.0
    %700 = vmatpush1.msra.mxu0 0.0
    %701 = vmatprep.subr.mxu0 0.0
    %702 = vmatpush1.msra.mxu0 0.0
    %703 = vmatprep.subr.mxu0 0.0
    %704 = vmatpush1.msra.mxu0 0.0
    %705 = vmatprep.subr.mxu0 0.0
    %706 = vmatpush1.msra.mxu0 0.0
    %707 = vmatprep.subr.mxu0 0.0
    %708 = vmatpush1.msra.mxu0 0.0
    %709 = vmatprep.subr.mxu0 0.0
    %710 = vmatpush1.msra.mxu0 0.0
    %711 = vmatprep.subr.mxu0 0.0
    %712 = vmatpush1.msra.mxu0 0.0
    %713 = vmatprep.subr.mxu0 0.0
    %714 = vmatpush1.msra.mxu0 0.0
    %715 = vmatprep.subr.mxu0 0.0
    %716 = vmatpush1.msra.mxu0 0.0
    %717 = vmatprep.subr.mxu0 0.0
    %718 = vmatpush1.msra.mxu0 0.0
    %719 = vmatprep.subr.mxu0 0.0
    %720 = vmatpush1.msra.mxu0 0.0
    %721 = vmatprep.subr.mxu0 0.0
    %722 = vmatpush1.msra.mxu0 0.0
    %723 = vmatprep.subr.mxu0 0.0
    %724 = vmatpush1.msra.mxu0 0.0
    %725 = vmatprep.subr.mxu0 0.0
    %726 = vmatpush1.msra.mxu0 0.0
    %727 = vmatprep.subr.mxu0 0.0
    %728 = vmatpush1.msra.mxu0 0.0
    %729 = vmatprep.subr.mxu0 0.0
    %730 = vmatpush1.msra.mxu0 0.0
    %731 = vmatprep.subr.mxu0 0.0
    %732 = vmatpush1.msra.mxu0 0.0
    %733 = vmatprep.subr.mxu0 0.0
    %734 = vmatpush1.msra.mxu0 0.0
    %735 = vmatprep.subr.mxu0 0.0
    %736 = vmatpush1.msra.mxu0 0.0
    %737 = vmatprep.subr.mxu0 0.0
    %738 = vmatpush1.msra.mxu0 0.0
    %739 = vmatprep.subr.mxu0 0.0
    %740 = vmatpush1.msra.mxu0 0.0
    %741 = vmatprep.subr.mxu0 0.0
    %742 = vmatpush1.msra.mxu0 0.0
    %743 = vmatprep.subr.mxu0 0.0
    %744 = vmatpush1.msra.mxu0 0.0
    %745 = vmatprep.subr.mxu0 0.0
    %746 = vmatpush1.msra.mxu0 0.0
    %747 = vmatprep.subr.mxu0 0.0
    %748 = vmatpush1.msra.mxu0 0.0
    %749 = vmatprep.subr.mxu0 0.0
    %750 = vmatpush1.msra.mxu0 0.0
    %751 = vmatprep.subr.mxu0 0.0
    %752 = vmatpush1.msra.mxu0 0.0
    %753 = vmatprep.subr.mxu0 0.0
    %754 = vmatpush1.msra.mxu0 0.0
    %755 = vmatprep.subr.mxu0 0.0
    %756 = vmatpush1.msra.mxu0 0.0
    %757 = vmatprep.mubr.f32.mxu0 0.0
    %758 = vmatmul.mubr.f32.gmra.mrb[0].mxu0 %v691
    %v759 = vpop.f32.mrb[0].mxu0
    %v760 = vadd.f32 0.0, %v759
    %v761 = vpop.f32.mrb[0].mxu0
    %762 = vdwg.mxu0
    %v763 = vadd.f32 %v245, %v760
    %v764 = vxor.u32 %v763, 2147483648
    %v765 = vmul.f32 %v764, 1.442695
    %v766 = vpow.pop %v765
    %v767 = vadd.f32 %v766, 1.0
    %v768 = vrcp.pop %v767
    %v769 = vmul.f32 1.0, %v768
    %v770 = vtanh.pop %v763
    %v772 = vrot.slane %v675, 6
    %v774 = vmul.f32 %v769, %v772
    %776 = vrot.lane.b32.xlu0 %v770, 96
    %v777 = vpop.permute.xlu0 %776
    %v779 = vmul.f32 %v769, %v777
    %781 = vrot.lane.b32.xlu0 %v779, 16
    %v782 = vpop.permute.xlu0 %781
    %v784 = vadd.f32 %v774, %v782
    %v785 = vtanh.pop %v784
    %787 = vrot.lane.b32.xlu0 %v785, 32
    %v788 = vpop.permute.xlu0 %787
    %v790 = vmul.f32 %v769, %v788
    %792 = vrot.lane.b32.xlu0 %v790, 80
    %v793 = vpop.permute.xlu0 %792
    %795 = vst.msk [vmem:[#allocation2 + $0x8] sm:$0x3] %vm353, %v793
    %v796 = vsel %vm250, %v793, 0
    %798 = vmatprep.subr.mxu0 0.0
    %799 = vmatpush1.msra.mxu0 %v248
    %800 = vmatprep.subr.mxu0 0.0
    %801 = vmatpush1.msra.mxu0 %v249
    %802 = vmatprep.subr.mxu0 0.0
    %803 = vmatpush1.msra.mxu0 0.0
    %804 = vmatprep.subr.mxu0 0.0
    %805 = vmatpush1.msra.mxu0 0.0
    %806 = vmatprep.subr.mxu0 0.0
    %807 = vmatpush1.msra.mxu0 0.0
    %808 = vmatprep.subr.mxu0 0.0
    %809 = vmatpush1.msra.mxu0 0.0
    %810 = vmatprep.subr.mxu0 0.0
    %811 = vmatpush1.msra.mxu0 0.0
    %812 = vmatprep.subr.mxu0 0.0
    %813 = vmatpush1.msra.mxu0 0.0
    %814 = vmatprep.subr.mxu0 0.0
    %815 = vmatpush1.msra.mxu0 0.0
    %816 = vmatprep.subr.mxu0 0.0
    %817 = vmatpush1.msra.mxu0 0.0
    %818 = vmatprep.subr.mxu0 0.0
    %819 = vmatpush1.msra.mxu0 0.0
    %820 = vmatprep.subr.mxu0 0.0
    %821 = vmatpush1.msra.mxu0 0.0
    %822 = vmatprep.subr.mxu0 0.0
    %823 = vmatpush1.msra.mxu0 0.0
    %824 = vmatprep.subr.mxu0 0.0
    %825 = vmatpush1.msra.mxu0 0.0
    %826 = vmatprep.subr.mxu0 0.0
    %827 = vmatpush1.msra.mxu0 0.0
    %828 = vmatprep.subr.mxu0 0.0
    %829 = vmatpush1.msra.mxu0 0.0
    %830 = vmatprep.subr.mxu0 0.0
    %831 = vmatpush1.msra.mxu0 0.0
    %832 = vmatprep.subr.mxu0 0.0
    %833 = vmatpush1.msra.mxu0 0.0
    %834 = vmatprep.subr.mxu0 0.0
    %835 = vmatpush1.msra.mxu0 0.0
    %836 = vmatprep.subr.mxu0 0.0
    %837 = vmatpush1.msra.mxu0 0.0
    %838 = vmatprep.subr.mxu0 0.0
    %839 = vmatpush1.msra.mxu0 0.0
    %840 = vmatprep.subr.mxu0 0.0
    %841 = vmatpush1.msra.mxu0 0.0
    %842 = vmatprep.subr.mxu0 0.0
    %843 = vmatpush1.msra.mxu0 0.0
    %844 = vmatprep.subr.mxu0 0.0
    %845 = vmatpush1.msra.mxu0 0.0
    %846 = vmatprep.subr.mxu0 0.0
    %847 = vmatpush1.msra.mxu0 0.0
    %848 = vmatprep.subr.mxu0 0.0
    %849 = vmatpush1.msra.mxu0 0.0
    %850 = vmatprep.subr.mxu0 0.0
    %851 = vmatpush1.msra.mxu0 0.0
    %852 = vmatprep.subr.mxu0 0.0
    %853 = vmatpush1.msra.mxu0 0.0
    %854 = vmatprep.subr.mxu0 0.0
    %855 = vmatpush1.msra.mxu0 0.0
    %856 = vmatprep.subr.mxu0 0.0
    %857 = vmatpush1.msra.mxu0 0.0
    %858 = vmatprep.subr.mxu0 0.0
    %859 = vmatpush1.msra.mxu0 0.0
    %860 = vmatprep.subr.mxu0 0.0
    %861 = vmatpush1.msra.mxu0 0.0
    %862 = vmatprep.mubr.f32.mxu0 0.0
    %863 = vmatmul.mubr.f32.gmra.mrb[0].mxu0 %v796
    %v864 = vpop.f32.mrb[0].mxu0
    %v865 = vadd.f32 0.0, %v864
    %v866 = vpop.f32.mrb[0].mxu0
    %867 = vdwg.mxu0
    %v869 = vrot.slane %v865, 6
    %v871 = vadd.f32 %v245, %v869
    %v872 = vxor.u32 %v871, 2147483648
    %v873 = vmul.f32 %v872, 1.442695
    %v874 = vpow.pop %v873
    %v875 = vadd.f32 %v874, 1.0
    %v876 = vrcp.pop %v875
    %v877 = vmul.f32 1.0, %v876
    %v878 = vtanh.pop %v871
    %v880 = vrot.slane %v784, 6
    %v882 = vmul.f32 %v877, %v880
    %884 = vrot.lane.b32.xlu0 %v878, 96
    %v885 = vpop.permute.xlu0 %884
    %v887 = vmul.f32 %v877, %v885
    %889 = vrot.lane.b32.xlu0 %v887, 16
    %v890 = vpop.permute.xlu0 %889
    %v892 = vadd.f32 %v882, %v890
    %v893 = vtanh.pop %v892
    %895 = vrot.lane.b32.xlu0 %v893, 32
    %v896 = vpop.permute.xlu0 %895
    %v898 = vmul.f32 %v877, %v896
    %900 = vrot.lane.b32.xlu0 %v898, 80
    %v901 = vpop.permute.xlu0 %900
    %903 = vst.msk [vmem:[#allocation2 + $0x8] sm:$0xc] %vm462, %v901
    %v904 = vrot.slane %v898, 2
    %905 = vrot.lane.b32.xlu0 %v904, 80
    %v906 = vpop.permute.xlu0 %905
    %v907 = vsel %vm250, %v906, 0
    %909 = vmatprep.subr.mxu0 0.0
    %910 = vmatpush1.msra.mxu0 %v248
    %911 = vmatprep.subr.mxu0 0.0
    %912 = vmatpush1.msra.mxu0 %v249
    %913 = vmatprep.subr.mxu0 0.0
    %914 = vmatpush1.msra.mxu0 0.0
    %915 = vmatprep.subr.mxu0 0.0
    %916 = vmatpush1.msra.mxu0 0.0
    %917 = vmatprep.subr.mxu0 0.0
    %918 = vmatpush1.msra.mxu0 0.0
    %919 = vmatprep.subr.mxu0 0.0
    %920 = vmatpush1.msra.mxu0 0.0
    %921 = vmatprep.subr.mxu0 0.0
    %922 = vmatpush1.msra.mxu0 0.0
    %923 = vmatprep.subr.mxu0 0.0
    %924 = vmatpush1.msra.mxu0 0.0
    %925 = vmatprep.subr.mxu0 0.0
    %926 = vmatpush1.msra.mxu0 0.0
    %927 = vmatprep.subr.mxu0 0.0
    %928 = vmatpush1.msra.mxu0 0.0
    %929 = vmatprep.subr.mxu0 0.0
    %930 = vmatpush1.msra.mxu0 0.0
    %931 = vmatprep.subr.mxu0 0.0
    %932 = vmatpush1.msra.mxu0 0.0
    %933 = vmatprep.subr.mxu0 0.0
    %934 = vmatpush1.msra.mxu0 0.0
    %935 = vmatprep.subr.mxu0 0.0
    %936 = vmatpush1.msra.mxu0 0.0
    %937 = vmatprep.subr.mxu0 0.0
    %938 = vmatpush1.msra.mxu0 0.0
    %939 = vmatprep.subr.mxu0 0.0
    %940 = vmatpush1.msra.mxu0 0.0
    %941 = vmatprep.subr.mxu0 0.0
    %942 = vmatpush1.msra.mxu0 0.0
    %943 = vmatprep.subr.mxu0 0.0
    %944 = vmatpush1.msra.mxu0 0.0
    %945 = vmatprep.subr.mxu0 0.0
    %946 = vmatpush1.msra.mxu0 0.0
    %947 = vmatprep.subr.mxu0 0.0
    %948 = vmatpush1.msra.mxu0 0.0
    %949 = vmatprep.subr.mxu0 0.0
    %950 = vmatpush1.msra.mxu0 0.0
    %951 = vmatprep.subr.mxu0 0.0
    %952 = vmatpush1.msra.mxu0 0.0
    %953 = vmatprep.subr.mxu0 0.0
    %954 = vmatpush1.msra.mxu0 0.0
    %955 = vmatprep.subr.mxu0 0.0
    %956 = vmatpush1.msra.mxu0 0.0
    %957 = vmatprep.subr.mxu0 0.0
    %958 = vmatpush1.msra.mxu0 0.0
    %959 = vmatprep.subr.mxu0 0.0
    %960 = vmatpush1.msra.mxu0 0.0
    %961 = vmatprep.subr.mxu0 0.0
    %962 = vmatpush1.msra.mxu0 0.0
    %963 = vmatprep.subr.mxu0 0.0
    %964 = vmatpush1.msra.mxu0 0.0
    %965 = vmatprep.subr.mxu0 0.0
    %966 = vmatpush1.msra.mxu0 0.0
    %967 = vmatprep.subr.mxu0 0.0
    %968 = vmatpush1.msra.mxu0 0.0
    %969 = vmatprep.subr.mxu0 0.0
    %970 = vmatpush1.msra.mxu0 0.0
    %971 = vmatprep.subr.mxu0 0.0
    %972 = vmatpush1.msra.mxu0 0.0
    %973 = vmatprep.mubr.f32.mxu0 0.0
    %974 = vmatmul.mubr.f32.gmra.mrb[0].mxu0 %v907
    %v975 = vpop.f32.mrb[0].mxu0
    %v976 = vadd.f32 0.0, %v975
    %v977 = vpop.f32.mrb[0].mxu0
    %978 = vdwg.mxu0
    %v980 = vrot.slane %v976, 4
    %v982 = vadd.f32 %v245, %v980
    %v983 = vxor.u32 %v982, 2147483648
    %v984 = vmul.f32 %v983, 1.442695
    %v985 = vpow.pop %v984
    %v986 = vadd.f32 %v985, 1.0
    %v987 = vrcp.pop %v986
    %v988 = vmul.f32 1.0, %v987
    %v989 = vtanh.pop %v982
    %v991 = vrot.slane %v892, 6
    %v993 = vmul.f32 %v988, %v991
    %995 = vrot.lane.b32.xlu0 %v989, 96
    %v996 = vpop.permute.xlu0 %995
    %v998 = vmul.f32 %v988, %v996
    %1000 = vrot.lane.b32.xlu0 %v998, 16
    %v1001 = vpop.permute.xlu0 %1000
    %v1003 = vadd.f32 %v993, %v1001
    %v1004 = vtanh.pop %v1003
    %1006 = vrot.lane.b32.xlu0 %v1004, 32
    %v1007 = vpop.permute.xlu0 %1006
    %v1009 = vmul.f32 %v988, %v1007
    %1011 = vrot.lane.b32.xlu0 %v1009, 80
    %v1012 = vpop.permute.xlu0 %1011
    %1014 = vst.msk [vmem:[#allocation2 + $0x8] sm:$0x30] %vm574, %v1012
    %v1015 = vrot.slane %v1009, 4
    %1016 = vrot.lane.b32.xlu0 %v1015, 80
    %v1017 = vpop.permute.xlu0 %1016
    %v1018 = vsel %vm250, %v1017, 0
    %1020 = vmatprep.subr.mxu0 0.0
    %1021 = vmatpush1.msra.mxu0 %v248
    %1022 = vmatprep.subr.mxu0 0.0
    %1023 = vmatpush1.msra.mxu0 %v249
    %1024 = vmatprep.subr.mxu0 0.0
    %1025 = vmatpush1.msra.mxu0 0.0
    %1026 = vmatprep.subr.mxu0 0.0
    %1027 = vmatpush1.msra.mxu0 0.0
    %1028 = vmatprep.subr.mxu0 0.0
    %1029 = vmatpush1.msra.mxu0 0.0
    %1030 = vmatprep.subr.mxu0 0.0
    %1031 = vmatpush1.msra.mxu0 0.0
    %1032 = vmatprep.subr.mxu0 0.0
    %1033 = vmatpush1.msra.mxu0 0.0
    %1034 = vmatprep.subr.mxu0 0.0
    %1035 = vmatpush1.msra.mxu0 0.0
    %1036 = vmatprep.subr.mxu0 0.0
    %1037 = vmatpush1.msra.mxu0 0.0
    %1038 = vmatprep.subr.mxu0 0.0
    %1039 = vmatpush1.msra.mxu0 0.0
    %1040 = vmatprep.subr.mxu0 0.0
    %1041 = vmatpush1.msra.mxu0 0.0
    %1042 = vmatprep.subr.mxu0 0.0
    %1043 = vmatpush1.msra.mxu0 0.0
    %1044 = vmatprep.subr.mxu0 0.0
    %1045 = vmatpush1.msra.mxu0 0.0
    %1046 = vmatprep.subr.mxu0 0.0
    %1047 = vmatpush1.msra.mxu0 0.0
    %1048 = vmatprep.subr.mxu0 0.0
    %1049 = vmatpush1.msra.mxu0 0.0
    %1050 = vmatprep.subr.mxu0 0.0
    %1051 = vmatpush1.msra.mxu0 0.0
    %1052 = vmatprep.subr.mxu0 0.0
    %1053 = vmatpush1.msra.mxu0 0.0
    %1054 = vmatprep.subr.mxu0 0.0
    %1055 = vmatpush1.msra.mxu0 0.0
    %1056 = vmatprep.subr.mxu0 0.0
    %1057 = vmatpush1.msra.mxu0 0.0
    %1058 = vmatprep.subr.mxu0 0.0
    %1059 = vmatpush1.msra.mxu0 0.0
    %1060 = vmatprep.subr.mxu0 0.0
    %1061 = vmatpush1.msra.mxu0 0.0
    %1062 = vmatprep.subr.mxu0 0.0
    %1063 = vmatpush1.msra.mxu0 0.0
    %1064 = vmatprep.subr.mxu0 0.0
    %1065 = vmatpush1.msra.mxu0 0.0
    %1066 = vmatprep.subr.mxu0 0.0
    %1067 = vmatpush1.msra.mxu0 0.0
    %1068 = vmatprep.subr.mxu0 0.0
    %1069 = vmatpush1.msra.mxu0 0.0
    %1070 = vmatprep.subr.mxu0 0.0
    %1071 = vmatpush1.msra.mxu0 0.0
    %1072 = vmatprep.subr.mxu0 0.0
    %1073 = vmatpush1.msra.mxu0 0.0
    %1074 = vmatprep.subr.mxu0 0.0
    %1075 = vmatpush1.msra.mxu0 0.0
    %1076 = vmatprep.subr.mxu0 0.0
    %1077 = vmatpush1.msra.mxu0 0.0
    %1078 = vmatprep.subr.mxu0 0.0
    %1079 = vmatpush1.msra.mxu0 0.0
    %1080 = vmatprep.subr.mxu0 0.0
    %1081 = vmatpush1.msra.mxu0 0.0
    %1082 = vmatprep.subr.mxu0 0.0
    %1083 = vmatpush1.msra.mxu0 0.0
    %1084 = vmatprep.mubr.f32.mxu0 0.0
    %1085 = vmatmul.mubr.f32.gmra.mrb[0].mxu0 %v1018
    %v1086 = vpop.f32.mrb[0].mxu0
    %v1087 = vadd.f32 0.0, %v1086
    %v1088 = vpop.f32.mrb[0].mxu0
    %1089 = vdwg.mxu0
    %v1091 = vrot.slane %v1087, 2
    %v1093 = vadd.f32 %v245, %v1091
    %v1094 = vxor.u32 %v1093, 2147483648
    %v1095 = vmul.f32 %v1094, 1.442695
    %v1096 = vpow.pop %v1095
    %v1097 = vadd.f32 %v1096, 1.0
    %v1098 = vrcp.pop %v1097
    %v1099 = vmul.f32 1.0, %v1098
    %v1100 = vtanh.pop %v1093
    %v1102 = vrot.slane %v1003, 6
    %v1104 = vmul.f32 %v1099, %v1102
    %1106 = vrot.lane.b32.xlu0 %v1100, 96
    %v1107 = vpop.permute.xlu0 %1106
    %v1109 = vmul.f32 %v1099, %v1107
    %1111 = vrot.lane.b32.xlu0 %v1109, 16
    %v1112 = vpop.permute.xlu0 %1111
    %v1114 = vadd.f32 %v1104, %v1112
    %v1115 = vtanh.pop %v1114
    %1117 = vrot.lane.b32.xlu0 %v1115, 32
    %v1118 = vpop.permute.xlu0 %1117
    %v1120 = vmul.f32 %v1099, %v1118
    %1122 = vrot.lane.b32.xlu0 %v1120, 80
    %v1123 = vpop.permute.xlu0 %1122
    %1125 = vst.msk [vmem:[#allocation2 + $0x8] sm:$0xc0] %vm686, %v1123
    %v1126 = vld [vmem:[%s4] sm:$0xff]
    %v1127 = vld [vmem:[%s4 + $0x8] sm:$0xff]
    %v1128 = vld [vmem:[%s4 + $0x10] sm:$0xff]
    %v1129 = vld [vmem:[%s4 + $0x18] sm:$0xff]
    %v1130 = vld [vmem:[%s6] sm:$0x1]
    %v1132 = vlaneseq
    %v1133 = vshrl.u32 %v1132, 7
    %v1134 = vsub.s32 0, %v1133
    %v1135 = vrot.slane %v1130, %v1134
    %1137 = vmatprep.subr.mxu0 0.0
    %1138 = vmatpush1.msra.mxu0 %v1126
    %1139 = vmatprep.subr.mxu0 0.0
    %1140 = vmatpush1.msra.mxu0 %v1127
    %1141 = vmatprep.subr.mxu0 0.0
    %1142 = vmatpush1.msra.mxu0 %v1128
    %1143 = vmatprep.subr.mxu0 0.0
    %1144 = vmatpush1.msra.mxu0 %v1129
    %1145 = vmatprep.subr.mxu0 0.0
    %1146 = vmatpush1.msra.mxu0 0.0
    %1147 = vmatprep.subr.mxu0 0.0
    %1148 = vmatpush1.msra.mxu0 0.0
    %1149 = vmatprep.subr.mxu0 0.0
    %1150 = vmatpush1.msra.mxu0 0.0
    %1151 = vmatprep.subr.mxu0 0.0
    %1152 = vmatpush1.msra.mxu0 0.0
    %1153 = vmatprep.subr.mxu0 0.0
    %1154 = vmatpush1.msra.mxu0 0.0
    %1155 = vmatprep.subr.mxu0 0.0
    %1156 = vmatpush1.msra.mxu0 0.0
    %1157 = vmatprep.subr.mxu0 0.0
    %1158 = vmatpush1.msra.mxu0 0.0
    %1159 = vmatprep.subr.mxu0 0.0
    %1160 = vmatpush1.msra.mxu0 0.0
    %1161 = vmatprep.subr.mxu0 0.0
    %1162 = vmatpush1.msra.mxu0 0.0
    %1163 = vmatprep.subr.mxu0 0.0
    %1164 = vmatpush1.msra.mxu0 0.0
    %1165 = vmatprep.subr.mxu0 0.0
    %1166 = vmatpush1.msra.mxu0 0.0
    %1167 = vmatprep.subr.mxu0 0.0
    %1168 = vmatpush1.msra.mxu0 0.0
    %1169 = vmatprep.subr.mxu0 0.0
    %1170 = vmatpush1.msra.mxu0 0.0
    %1171 = vmatprep.subr.mxu0 0.0
    %1172 = vmatpush1.msra.mxu0 0.0
    %1173 = vmatprep.subr.mxu0 0.0
    %1174 = vmatpush1.msra.mxu0 0.0
    %1175 = vmatprep.subr.mxu0 0.0
    %1176 = vmatpush1.msra.mxu0 0.0
    %1177 = vmatprep.subr.mxu0 0.0
    %1178 = vmatpush1.msra.mxu0 0.0
    %1179 = vmatprep.subr.mxu0 0.0
    %1180 = vmatpush1.msra.mxu0 0.0
    %1181 = vmatprep.subr.mxu0 0.0
    %1182 = vmatpush1.msra.mxu0 0.0
    %1183 = vmatprep.subr.mxu0 0.0
    %1184 = vmatpush1.msra.mxu0 0.0
    %1185 = vmatprep.subr.mxu0 0.0
    %1186 = vmatpush1.msra.mxu0 0.0
    %1187 = vmatprep.subr.mxu0 0.0
    %1188 = vmatpush1.msra.mxu0 0.0
    %1189 = vmatprep.subr.mxu0 0.0
    %1190 = vmatpush1.msra.mxu0 0.0
    %1191 = vmatprep.subr.mxu0 0.0
    %1192 = vmatpush1.msra.mxu0 0.0
    %1193 = vmatprep.subr.mxu0 0.0
    %1194 = vmatpush1.msra.mxu0 0.0
    %1195 = vmatprep.subr.mxu0 0.0
    %1196 = vmatpush1.msra.mxu0 0.0
    %1197 = vmatprep.subr.mxu0 0.0
    %1198 = vmatpush1.msra.mxu0 0.0
    %1199 = vmatprep.subr.mxu0 0.0
    %1200 = vmatpush1.msra.mxu0 0.0
    %1201 = vmatprep.mubr.f32.mxu0 0.0
    %1202 = vmatmul.mubr.f32.gmra.mrb[0].mxu0 %v168
    %v1203 = vpop.f32.mrb[0].mxu0
    %v1204 = vadd.f32 %v1135, %v1203
    %v1205 = vpop.f32.mrb[0].mxu0
    %1206 = vmatprep.mubr.f32.mxu0 0.0
    %1207 = vmatmul.mubr.f32.gmra.mrb[0].mxu0 %v171
    %v1208 = vpop.f32.mrb[0].mxu0
    %v1209 = vadd.f32 %v1135, %v1208
    %v1210 = vpop.f32.mrb[0].mxu0
    %1211 = vdwg.mxu0
    %v1212 = vld [vmem:[#allocation8] sm:$0xff]
    %v1213 = vld [vmem:[#allocation8 + $0x8] sm:$0xff]
    %1214 = vmatprep.subr.mxu0 0.0
    %1215 = vmatpush1.msra.mxu0 %v1212
    %1216 = vmatprep.subr.mxu0 0.0
    %1217 = vmatpush1.msra.mxu0 %v1213
    %1218 = vmatprep.subr.mxu0 0.0
    %1219 = vmatpush1.msra.mxu0 0.0
    %1220 = vmatprep.subr.mxu0 0.0
    %1221 = vmatpush1.msra.mxu0 0.0
    %1222 = vmatprep.subr.mxu0 0.0
    %1223 = vmatpush1.msra.mxu0 0.0
    %1224 = vmatprep.subr.mxu0 0.0
    %1225 = vmatpush1.msra.mxu0 0.0
    %1226 = vmatprep.subr.mxu0 0.0
    %1227 = vmatpush1.msra.mxu0 0.0
    %1228 = vmatprep.subr.mxu0 0.0
    %1229 = vmatpush1.msra.mxu0 0.0
    %1230 = vmatprep.subr.mxu0 0.0
    %1231 = vmatpush1.msra.mxu0 0.0
    %1232 = vmatprep.subr.mxu0 0.0
    %1233 = vmatpush1.msra.mxu0 0.0
    %1234 = vmatprep.subr.mxu0 0.0
    %1235 = vmatpush1.msra.mxu0 0.0
    %1236 = vmatprep.subr.mxu0 0.0
    %1237 = vmatpush1.msra.mxu0 0.0
    %1238 = vmatprep.subr.mxu0 0.0
    %1239 = vmatpush1.msra.mxu0 0.0
    %1240 = vmatprep.subr.mxu0 0.0
    %1241 = vmatpush1.msra.mxu0 0.0
    %1242 = vmatprep.subr.mxu0 0.0
    %1243 = vmatpush1.msra.mxu0 0.0
    %1244 = vmatprep.subr.mxu0 0.0
    %1245 = vmatpush1.msra.mxu0 0.0
    %1246 = vmatprep.subr.mxu0 0.0
    %1247 = vmatpush1.msra.mxu0 0.0
    %1248 = vmatprep.subr.mxu0 0.0
    %1249 = vmatpush1.msra.mxu0 0.0
    %1250 = vmatprep.subr.mxu0 0.0
    %1251 = vmatpush1.msra.mxu0 0.0
    %1252 = vmatprep.subr.mxu0 0.0
    %1253 = vmatpush1.msra.mxu0 0.0
    %1254 = vmatprep.subr.mxu0 0.0
    %1255 = vmatpush1.msra.mxu0 0.0
    %1256 = vmatprep.subr.mxu0 0.0
    %1257 = vmatpush1.msra.mxu0 0.0
    %1258 = vmatprep.subr.mxu0 0.0
    %1259 = vmatpush1.msra.mxu0 0.0
    %1260 = vmatprep.subr.mxu0 0.0
    %1261 = vmatpush1.msra.mxu0 0.0
    %1262 = vmatprep.subr.mxu0 0.0
    %1263 = vmatpush1.msra.mxu0 0.0
    %1264 = vmatprep.subr.mxu0 0.0
    %1265 = vmatpush1.msra.mxu0 0.0
    %1266 = vmatprep.subr.mxu0 0.0
    %1267 = vmatpush1.msra.mxu0 0.0
    %1268 = vmatprep.subr.mxu0 0.0
    %1269 = vmatpush1.msra.mxu0 0.0
    %1270 = vmatprep.subr.mxu0 0.0
    %1271 = vmatpush1.msra.mxu0 0.0
    %1272 = vmatprep.subr.mxu0 0.0
    %1273 = vmatpush1.msra.mxu0 0.0
    %1274 = vmatprep.subr.mxu0 0.0
    %1275 = vmatpush1.msra.mxu0 0.0
    %1276 = vmatprep.subr.mxu0 0.0
    %1277 = vmatpush1.msra.mxu0 0.0
    %1278 = vmatprep.mubr.f32.mxu0 0.0
    %1279 = vmatmul.mubr.f32.gmra.mrb[0].mxu0 %v252
    %v1280 = vpop.f32.mrb[0].mxu0
    %v1281 = vadd.f32 0.0, %v1280
    %v1282 = vpop.f32.mrb[0].mxu0
    %1283 = vdwg.mxu0
    %v1285 = vrot.slane %v1281, 2
    %v1287 = vadd.f32 %v1209, %v1285
    %v1288 = vxor.u32 %v1287, 2147483648
    %v1289 = vmul.f32 %v1288, 1.442695
    %v1290 = vpow.pop %v1289
    %v1291 = vadd.f32 %v1290, 1.0
    %v1292 = vrcp.pop %v1291
    %v1293 = vmul.f32 1.0, %v1292
    %v1294 = vtanh.pop %v1287
    %v1295 = vmul.f32 %v1293, 0.0
    %1297 = vrot.lane.b32.xlu0 %v1294, 96
    %v1298 = vpop.permute.xlu0 %1297
    %v1300 = vmul.f32 %v1293, %v1298
    %1302 = vrot.lane.b32.xlu0 %v1300, 16
    %v1303 = vpop.permute.xlu0 %1302
    %v1305 = vadd.f32 %v1295, %v1303
    %v1306 = vtanh.pop %v1305
    %1308 = vrot.lane.b32.xlu0 %v1306, 32
    %v1309 = vpop.permute.xlu0 %1308
    %v1311 = vmul.f32 %v1293, %v1309
    %1313 = vrot.lane.b32.xlu0 %v1311, 96
    %v1314 = vpop.permute.xlu0 %1313
    %vm1316 = vcmask 261254
    %1317 = vst.msk [vmem:[#allocation2 + $0x8] sm:$0xc0] %vm1316, %v1314
    %v1318 = vrot.slane %v1311, 6
    %1319 = vrot.lane.b32.xlu0 %v1318, 80
    %v1320 = vpop.permute.xlu0 %1319
    %v1321 = vsel %vm250, %v1320, 0
    %1323 = vmatprep.subr.mxu0 0.0
    %1324 = vmatpush1.msra.mxu0 %v1212
    %1325 = vmatprep.subr.mxu0 0.0
    %1326 = vmatpush1.msra.mxu0 %v1213
    %1327 = vmatprep.subr.mxu0 0.0
    %1328 = vmatpush1.msra.mxu0 0.0
    %1329 = vmatprep.subr.mxu0 0.0
    %1330 = vmatpush1.msra.mxu0 0.0
    %1331 = vmatprep.subr.mxu0 0.0
    %1332 = vmatpush1.msra.mxu0 0.0
    %1333 = vmatprep.subr.mxu0 0.0
    %1334 = vmatpush1.msra.mxu0 0.0
    %1335 = vmatprep.subr.mxu0 0.0
    %1336 = vmatpush1.msra.mxu0 0.0
    %1337 = vmatprep.subr.mxu0 0.0
    %1338 = vmatpush1.msra.mxu0 0.0
    %1339 = vmatprep.subr.mxu0 0.0
    %1340 = vmatpush1.msra.mxu0 0.0
    %1341 = vmatprep.subr.mxu0 0.0
    %1342 = vmatpush1.msra.mxu0 0.0
    %1343 = vmatprep.subr.mxu0 0.0
    %1344 = vmatpush1.msra.mxu0 0.0
    %1345 = vmatprep.subr.mxu0 0.0
    %1346 = vmatpush1.msra.mxu0 0.0
    %1347 = vmatprep.subr.mxu0 0.0
    %1348 = vmatpush1.msra.mxu0 0.0
    %1349 = vmatprep.subr.mxu0 0.0
    %1350 = vmatpush1.msra.mxu0 0.0
    %1351 = vmatprep.subr.mxu0 0.0
    %1352 = vmatpush1.msra.mxu0 0.0
    %1353 = vmatprep.subr.mxu0 0.0
    %1354 = vmatpush1.msra.mxu0 0.0
    %1355 = vmatprep.subr.mxu0 0.0
    %1356 = vmatpush1.msra.mxu0 0.0
    %1357 = vmatprep.subr.mxu0 0.0
    %1358 = vmatpush1.msra.mxu0 0.0
    %1359 = vmatprep.subr.mxu0 0.0
    %1360 = vmatpush1.msra.mxu0 0.0
    %1361 = vmatprep.subr.mxu0 0.0
    %1362 = vmatpush1.msra.mxu0 0.0
    %1363 = vmatprep.subr.mxu0 0.0
    %1364 = vmatpush1.msra.mxu0 0.0
    %1365 = vmatprep.subr.mxu0 0.0
    %1366 = vmatpush1.msra.mxu0 0.0
    %1367 = vmatprep.subr.mxu0 0.0
    %1368 = vmatpush1.msra.mxu0 0.0
    %1369 = vmatprep.subr.mxu0 0.0
    %1370 = vmatpush1.msra.mxu0 0.0
    %1371 = vmatprep.subr.mxu0 0.0
    %1372 = vmatpush1.msra.mxu0 0.0
    %1373 = vmatprep.subr.mxu0 0.0
    %1374 = vmatpush1.msra.mxu0 0.0
    %1375 = vmatprep.subr.mxu0 0.0
    %1376 = vmatpush1.msra.mxu0 0.0
    %1377 = vmatprep.subr.mxu0 0.0
    %1378 = vmatpush1.msra.mxu0 0.0
    %1379 = vmatprep.subr.mxu0 0.0
    %1380 = vmatpush1.msra.mxu0 0.0
    %1381 = vmatprep.subr.mxu0 0.0
    %1382 = vmatpush1.msra.mxu0 0.0
    %1383 = vmatprep.subr.mxu0 0.0
    %1384 = vmatpush1.msra.mxu0 0.0
    %1385 = vmatprep.subr.mxu0 0.0
    %1386 = vmatpush1.msra.mxu0 0.0
    %1387 = vmatprep.mubr.f32.mxu0 0.0
    %1388 = vmatmul.mubr.f32.gmra.mrb[0].mxu0 %v1321
    %v1389 = vpop.f32.mrb[0].mxu0
    %v1390 = vadd.f32 0.0, %v1389
    %v1391 = vpop.f32.mrb[0].mxu0
    %1392 = vdwg.mxu0
    %v1394 = vrot.slane %v1390, 4
    %v1396 = vadd.f32 %v1209, %v1394
    %v1397 = vxor.u32 %v1396, 2147483648
    %v1398 = vmul.f32 %v1397, 1.442695
    %v1399 = vpow.pop %v1398
    %v1400 = vadd.f32 %v1399, 1.0
    %v1401 = vrcp.pop %v1400
    %v1402 = vmul.f32 1.0, %v1401
    %v1403 = vtanh.pop %v1396
    %v1405 = vrot.slane %v1305, 2
    %v1407 = vmul.f32 %v1402, %v1405
    %1409 = vrot.lane.b32.xlu0 %v1403, 96
    %v1410 = vpop.permute.xlu0 %1409
    %v1412 = vmul.f32 %v1402, %v1410
    %1414 = vrot.lane.b32.xlu0 %v1412, 16
    %v1415 = vpop.permute.xlu0 %1414
    %v1417 = vadd.f32 %v1407, %v1415
    %v1418 = vtanh.pop %v1417
    %1420 = vrot.lane.b32.xlu0 %v1418, 32
    %v1421 = vpop.permute.xlu0 %1420
    %v1423 = vmul.f32 %v1402, %v1421
    %1425 = vrot.lane.b32.xlu0 %v1423, 96
    %v1426 = vpop.permute.xlu0 %1425
    %vm1428 = vcmask 259204
    %1429 = vst.msk [vmem:[#allocation2 + $0x8] sm:$0x30] %vm1428, %v1426
    %v1430 = vrot.slane %v1423, 4
    %1431 = vrot.lane.b32.xlu0 %v1430, 80
    %v1432 = vpop.permute.xlu0 %1431
    %v1433 = vsel %vm250, %v1432, 0
    %1435 = vmatprep.subr.mxu0 0.0
    %1436 = vmatpush1.msra.mxu0 %v1212
    %1437 = vmatprep.subr.mxu0 0.0
    %1438 = vmatpush1.msra.mxu0 %v1213
    %1439 = vmatprep.subr.mxu0 0.0
    %1440 = vmatpush1.msra.mxu0 0.0
    %1441 = vmatprep.subr.mxu0 0.0
    %1442 = vmatpush1.msra.mxu0 0.0
    %1443 = vmatprep.subr.mxu0 0.0
    %1444 = vmatpush1.msra.mxu0 0.0
    %1445 = vmatprep.subr.mxu0 0.0
    %1446 = vmatpush1.msra.mxu0 0.0
    %1447 = vmatprep.subr.mxu0 0.0
    %1448 = vmatpush1.msra.mxu0 0.0
    %1449 = vmatprep.subr.mxu0 0.0
    %1450 = vmatpush1.msra.mxu0 0.0
    %1451 = vmatprep.subr.mxu0 0.0
    %1452 = vmatpush1.msra.mxu0 0.0
    %1453 = vmatprep.subr.mxu0 0.0
    %1454 = vmatpush1.msra.mxu0 0.0
    %1455 = vmatprep.subr.mxu0 0.0
    %1456 = vmatpush1.msra.mxu0 0.0
    %1457 = vmatprep.subr.mxu0 0.0
    %1458 = vmatpush1.msra.mxu0 0.0
    %1459 = vmatprep.subr.mxu0 0.0
    %1460 = vmatpush1.msra.mxu0 0.0
    %1461 = vmatprep.subr.mxu0 0.0
    %1462 = vmatpush1.msra.mxu0 0.0
    %1463 = vmatprep.subr.mxu0 0.0
    %1464 = vmatpush1.msra.mxu0 0.0
    %1465 = vmatprep.subr.mxu0 0.0
    %1466 = vmatpush1.msra.mxu0 0.0
    %1467 = vmatprep.subr.mxu0 0.0
    %1468 = vmatpush1.msra.mxu0 0.0
    %1469 = vmatprep.subr.mxu0 0.0
    %1470 = vmatpush1.msra.mxu0 0.0
    %1471 = vmatprep.subr.mxu0 0.0
    %1472 = vmatpush1.msra.mxu0 0.0
    %1473 = vmatprep.subr.mxu0 0.0
    %1474 = vmatpush1.msra.mxu0 0.0
    %1475 = vmatprep.subr.mxu0 0.0
    %1476 = vmatpush1.msra.mxu0 0.0
    %1477 = vmatprep.subr.mxu0 0.0
    %1478 = vmatpush1.msra.mxu0 0.0
    %1479 = vmatprep.subr.mxu0 0.0
    %1480 = vmatpush1.msra.mxu0 0.0
    %1481 = vmatprep.subr.mxu0 0.0
    %1482 = vmatpush1.msra.mxu0 0.0
    %1483 = vmatprep.subr.mxu0 0.0
    %1484 = vmatpush1.msra.mxu0 0.0
    %1485 = vmatprep.subr.mxu0 0.0
    %1486 = vmatpush1.msra.mxu0 0.0
    %1487 = vmatprep.subr.mxu0 0.0
    %1488 = vmatpush1.msra.mxu0 0.0
    %1489 = vmatprep.subr.mxu0 0.0
    %1490 = vmatpush1.msra.mxu0 0.0
    %1491 = vmatprep.subr.mxu0 0.0
    %1492 = vmatpush1.msra.mxu0 0.0
    %1493 = vmatprep.subr.mxu0 0.0
    %1494 = vmatpush1.msra.mxu0 0.0
    %1495 = vmatprep.subr.mxu0 0.0
    %1496 = vmatpush1.msra.mxu0 0.0
    %1497 = vmatprep.subr.mxu0 0.0
    %1498 = vmatpush1.msra.mxu0 0.0
    %1499 = vmatprep.mubr.f32.mxu0 0.0
    %1500 = vmatmul.mubr.f32.gmra.mrb[0].mxu0 %v1433
    %v1501 = vpop.f32.mrb[0].mxu0
    %v1502 = vadd.f32 0.0, %v1501
    %v1503 = vpop.f32.mrb[0].mxu0
    %1504 = vdwg.mxu0
    %v1506 = vrot.slane %v1502, 6
    %v1508 = vadd.f32 %v1209, %v1506
    %v1509 = vxor.u32 %v1508, 2147483648
    %v1510 = vmul.f32 %v1509, 1.442695
    %v1511 = vpow.pop %v1510
    %v1512 = vadd.f32 %v1511, 1.0
    %v1513 = vrcp.pop %v1512
    %v1514 = vmul.f32 1.0, %v1513
    %v1515 = vtanh.pop %v1508
    %v1517 = vrot.slane %v1417, 2
    %v1519 = vmul.f32 %v1514, %v1517
    %1521 = vrot.lane.b32.xlu0 %v1515, 96
    %v1522 = vpop.permute.xlu0 %1521
    %v1524 = vmul.f32 %v1514, %v1522
    %1526 = vrot.lane.b32.xlu0 %v1524, 16
    %v1527 = vpop.permute.xlu0 %1526
    %v1529 = vadd.f32 %v1519, %v1527
    %v1530 = vtanh.pop %v1529
    %1532 = vrot.lane.b32.xlu0 %v1530, 32
    %v1533 = vpop.permute.xlu0 %1532
    %v1535 = vmul.f32 %v1514, %v1533
    %1537 = vrot.lane.b32.xlu0 %v1535, 96
    %v1538 = vpop.permute.xlu0 %1537
    %vm1540 = vcmask 257154
    %1541 = vst.msk [vmem:[#allocation2 + $0x8] sm:$0xc] %vm1540, %v1538
    %v1542 = vrot.slane %v1535, 2
    %1543 = vrot.lane.b32.xlu0 %v1542, 80
    %v1544 = vpop.permute.xlu0 %1543
    %v1545 = vsel %vm250, %v1544, 0
    %1547 = vmatprep.subr.mxu0 0.0
    %1548 = vmatpush1.msra.mxu0 %v1212
    %1549 = vmatprep.subr.mxu0 0.0
    %1550 = vmatpush1.msra.mxu0 %v1213
    %1551 = vmatprep.subr.mxu0 0.0
    %1552 = vmatpush1.msra.mxu0 0.0
    %1553 = vmatprep.subr.mxu0 0.0
    %1554 = vmatpush1.msra.mxu0 0.0
    %1555 = vmatprep.subr.mxu0 0.0
    %1556 = vmatpush1.msra.mxu0 0.0
    %1557 = vmatprep.subr.mxu0 0.0
    %1558 = vmatpush1.msra.mxu0 0.0
    %1559 = vmatprep.subr.mxu0 0.0
    %1560 = vmatpush1.msra.mxu0 0.0
    %1561 = vmatprep.subr.mxu0 0.0
    %1562 = vmatpush1.msra.mxu0 0.0
    %1563 = vmatprep.subr.mxu0 0.0
    %1564 = vmatpush1.msra.mxu0 0.0
    %1565 = vmatprep.subr.mxu0 0.0
    %1566 = vmatpush1.msra.mxu0 0.0
    %1567 = vmatprep.subr.mxu0 0.0
    %1568 = vmatpush1.msra.mxu0 0.0
    %1569 = vmatprep.subr.mxu0 0.0
    %1570 = vmatpush1.msra.mxu0 0.0
    %1571 = vmatprep.subr.mxu0 0.0
    %1572 = vmatpush1.msra.mxu0 0.0
    %1573 = vmatprep.subr.mxu0 0.0
    %1574 = vmatpush1.msra.mxu0 0.0
    %1575 = vmatprep.subr.mxu0 0.0
    %1576 = vmatpush1.msra.mxu0 0.0
    %1577 = vmatprep.subr.mxu0 0.0
    %1578 = vmatpush1.msra.mxu0 0.0
    %1579 = vmatprep.subr.mxu0 0.0
    %1580 = vmatpush1.msra.mxu0 0.0
    %1581 = vmatprep.subr.mxu0 0.0
    %1582 = vmatpush1.msra.mxu0 0.0
    %1583 = vmatprep.subr.mxu0 0.0
    %1584 = vmatpush1.msra.mxu0 0.0
    %1585 = vmatprep.subr.mxu0 0.0
    %1586 = vmatpush1.msra.mxu0 0.0
    %1587 = vmatprep.subr.mxu0 0.0
    %1588 = vmatpush1.msra.mxu0 0.0
    %1589 = vmatprep.subr.mxu0 0.0
    %1590 = vmatpush1.msra.mxu0 0.0
    %1591 = vmatprep.subr.mxu0 0.0
    %1592 = vmatpush1.msra.mxu0 0.0
    %1593 = vmatprep.subr.mxu0 0.0
    %1594 = vmatpush1.msra.mxu0 0.0
    %1595 = vmatprep.subr.mxu0 0.0
    %1596 = vmatpush1.msra.mxu0 0.0
    %1597 = vmatprep.subr.mxu0 0.0
    %1598 = vmatpush1.msra.mxu0 0.0
    %1599 = vmatprep.subr.mxu0 0.0
    %1600 = vmatpush1.msra.mxu0 0.0
    %1601 = vmatprep.subr.mxu0 0.0
    %1602 = vmatpush1.msra.mxu0 0.0
    %1603 = vmatprep.subr.mxu0 0.0
    %1604 = vmatpush1.msra.mxu0 0.0
    %1605 = vmatprep.subr.mxu0 0.0
    %1606 = vmatpush1.msra.mxu0 0.0
    %1607 = vmatprep.subr.mxu0 0.0
    %1608 = vmatpush1.msra.mxu0 0.0
    %1609 = vmatprep.subr.mxu0 0.0
    %1610 = vmatpush1.msra.mxu0 0.0
    %1611 = vmatprep.mubr.f32.mxu0 0.0
    %1612 = vmatmul.mubr.f32.gmra.mrb[0].mxu0 %v1545
    %v1613 = vpop.f32.mrb[0].mxu0
    %v1614 = vadd.f32 0.0, %v1613
    %v1615 = vpop.f32.mrb[0].mxu0
    %1616 = vdwg.mxu0
    %v1617 = vadd.f32 %v1209, %v1614
    %v1618 = vxor.u32 %v1617, 2147483648
    %v1619 = vmul.f32 %v1618, 1.442695
    %v1620 = vpow.pop %v1619
    %v1621 = vadd.f32 %v1620, 1.0
    %v1622 = vrcp.pop %v1621
    %v1623 = vmul.f32 1.0, %v1622
    %v1624 = vtanh.pop %v1617
    %v1626 = vrot.slane %v1529, 2
    %v1628 = vmul.f32 %v1623, %v1626
    %1630 = vrot.lane.b32.xlu0 %v1624, 96
    %v1631 = vpop.permute.xlu0 %1630
    %v1633 = vmul.f32 %v1623, %v1631
    %1635 = vrot.lane.b32.xlu0 %v1633, 16
    %v1636 = vpop.permute.xlu0 %1635
    %v1638 = vadd.f32 %v1628, %v1636
    %v1639 = vtanh.pop %v1638
    %1641 = vrot.lane.b32.xlu0 %v1639, 32
    %v1642 = vpop.permute.xlu0 %1641
    %v1644 = vmul.f32 %v1623, %v1642
    %1646 = vrot.lane.b32.xlu0 %v1644, 96
    %v1647 = vpop.permute.xlu0 %1646
    %vm1649 = vcmask 255104
    %1650 = vst.msk [vmem:[#allocation2 + $0x8] sm:$0x3] %vm1649, %v1647
    %1651 = vrot.lane.b32.xlu0 %v1644, 80
    %v1652 = vpop.permute.xlu0 %1651
    %v1653 = vsel %vm250, %v1652, 0
    %1655 = vmatprep.subr.mxu0 0.0
    %1656 = vmatpush1.msra.mxu0 %v1212
    %1657 = vmatprep.subr.mxu0 0.0
    %1658 = vmatpush1.msra.mxu0 %v1213
    %1659 = vmatprep.subr.mxu0 0.0
    %1660 = vmatpush1.msra.mxu0 0.0
    %1661 = vmatprep.subr.mxu0 0.0
    %1662 = vmatpush1.msra.mxu0 0.0
    %1663 = vmatprep.subr.mxu0 0.0
    %1664 = vmatpush1.msra.mxu0 0.0
    %1665 = vmatprep.subr.mxu0 0.0
    %1666 = vmatpush1.msra.mxu0 0.0
    %1667 = vmatprep.subr.mxu0 0.0
    %1668 = vmatpush1.msra.mxu0 0.0
    %1669 = vmatprep.subr.mxu0 0.0
    %1670 = vmatpush1.msra.mxu0 0.0
    %1671 = vmatprep.subr.mxu0 0.0
    %1672 = vmatpush1.msra.mxu0 0.0
    %1673 = vmatprep.subr.mxu0 0.0
    %1674 = vmatpush1.msra.mxu0 0.0
    %1675 = vmatprep.subr.mxu0 0.0
    %1676 = vmatpush1.msra.mxu0 0.0
    %1677 = vmatprep.subr.mxu0 0.0
    %1678 = vmatpush1.msra.mxu0 0.0
    %1679 = vmatprep.subr.mxu0 0.0
    %1680 = vmatpush1.msra.mxu0 0.0
    %1681 = vmatprep.subr.mxu0 0.0
    %1682 = vmatpush1.msra.mxu0 0.0
    %1683 = vmatprep.subr.mxu0 0.0
    %1684 = vmatpush1.msra.mxu0 0.0
    %1685 = vmatprep.subr.mxu0 0.0
    %1686 = vmatpush1.msra.mxu0 0.0
    %1687 = vmatprep.subr.mxu0 0.0
    %1688 = vmatpush1.msra.mxu0 0.0
    %1689 = vmatprep.subr.mxu0 0.0
    %1690 = vmatpush1.msra.mxu0 0.0
    %1691 = vmatprep.subr.mxu0 0.0
    %1692 = vmatpush1.msra.mxu0 0.0
    %1693 = vmatprep.subr.mxu0 0.0
    %1694 = vmatpush1.msra.mxu0 0.0
    %1695 = vmatprep.subr.mxu0 0.0
    %1696 = vmatpush1.msra.mxu0 0.0
    %1697 = vmatprep.subr.mxu0 0.0
    %1698 = vmatpush1.msra.mxu0 0.0
    %1699 = vmatprep.subr.mxu0 0.0
    %1700 = vmatpush1.msra.mxu0 0.0
    %1701 = vmatprep.subr.mxu0 0.0
    %1702 = vmatpush1.msra.mxu0 0.0
    %1703 = vmatprep.subr.mxu0 0.0
    %1704 = vmatpush1.msra.mxu0 0.0
    %1705 = vmatprep.subr.mxu0 0.0
    %1706 = vmatpush1.msra.mxu0 0.0
    %1707 = vmatprep.subr.mxu0 0.0
    %1708 = vmatpush1.msra.mxu0 0.0
    %1709 = vmatprep.subr.mxu0 0.0
    %1710 = vmatpush1.msra.mxu0 0.0
    %1711 = vmatprep.subr.mxu0 0.0
    %1712 = vmatpush1.msra.mxu0 0.0
    %1713 = vmatprep.subr.mxu0 0.0
    %1714 = vmatpush1.msra.mxu0 0.0
    %1715 = vmatprep.subr.mxu0 0.0
    %1716 = vmatpush1.msra.mxu0 0.0
    %1717 = vmatprep.subr.mxu0 0.0
    %1718 = vmatpush1.msra.mxu0 0.0
    %1719 = vmatprep.mubr.f32.mxu0 0.0
    %1720 = vmatmul.mubr.f32.gmra.mrb[0].mxu0 %v1653
    %v1721 = vpop.f32.mrb[0].mxu0
    %v1722 = vadd.f32 0.0, %v1721
    %v1723 = vpop.f32.mrb[0].mxu0
    %1724 = vdwg.mxu0
    %v1726 = vrot.slane %v1722, 2
    %v1728 = vadd.f32 %v1204, %v1726
    %v1729 = vxor.u32 %v1728, 2147483648
    %v1730 = vmul.f32 %v1729, 1.442695
    %v1731 = vpow.pop %v1730
    %v1732 = vadd.f32 %v1731, 1.0
    %v1733 = vrcp.pop %v1732
    %v1734 = vmul.f32 1.0, %v1733
    %v1735 = vtanh.pop %v1728
    %v1737 = vrot.slane %v1638, 2
    %v1739 = vmul.f32 %v1734, %v1737
    %1741 = vrot.lane.b32.xlu0 %v1735, 96
    %v1742 = vpop.permute.xlu0 %1741
    %v1744 = vmul.f32 %v1734, %v1742
    %1746 = vrot.lane.b32.xlu0 %v1744, 16
    %v1747 = vpop.permute.xlu0 %1746
    %v1749 = vadd.f32 %v1739, %v1747
    %v1750 = vtanh.pop %v1749
    %1752 = vrot.lane.b32.xlu0 %v1750, 32
    %v1753 = vpop.permute.xlu0 %1752
    %v1755 = vmul.f32 %v1734, %v1753
    %1757 = vrot.lane.b32.xlu0 %v1755, 96
    %v1758 = vpop.permute.xlu0 %1757
    %1760 = vst.msk [vmem:[#allocation2] sm:$0xc0] %vm1316, %v1758
    %v1761 = vrot.slane %v1755, 6
    %1762 = vrot.lane.b32.xlu0 %v1761, 80
    %v1763 = vpop.permute.xlu0 %1762
    %v1764 = vsel %vm250, %v1763, 0
    %1766 = vmatprep.subr.mxu0 0.0
    %1767 = vmatpush1.msra.mxu0 %v1212
    %1768 = vmatprep.subr.mxu0 0.0
    %1769 = vmatpush1.msra.mxu0 %v1213
    %1770 = vmatprep.subr.mxu0 0.0
    %1771 = vmatpush1.msra.mxu0 0.0
    %1772 = vmatprep.subr.mxu0 0.0
    %1773 = vmatpush1.msra.mxu0 0.0
    %1774 = vmatprep.subr.mxu0 0.0
    %1775 = vmatpush1.msra.mxu0 0.0
    %1776 = vmatprep.subr.mxu0 0.0
    %1777 = vmatpush1.msra.mxu0 0.0
    %1778 = vmatprep.subr.mxu0 0.0
    %1779 = vmatpush1.msra.mxu0 0.0
    %1780 = vmatprep.subr.mxu0 0.0
    %1781 = vmatpush1.msra.mxu0 0.0
    %1782 = vmatprep.subr.mxu0 0.0
    %1783 = vmatpush1.msra.mxu0 0.0
    %1784 = vmatprep.subr.mxu0 0.0
    %1785 = vmatpush1.msra.mxu0 0.0
    %1786 = vmatprep.subr.mxu0 0.0
    %1787 = vmatpush1.msra.mxu0 0.0
    %1788 = vmatprep.subr.mxu0 0.0
    %1789 = vmatpush1.msra.mxu0 0.0
    %1790 = vmatprep.subr.mxu0 0.0
    %1791 = vmatpush1.msra.mxu0 0.0
    %1792 = vmatprep.subr.mxu0 0.0
    %1793 = vmatpush1.msra.mxu0 0.0
    %1794 = vmatprep.subr.mxu0 0.0
    %1795 = vmatpush1.msra.mxu0 0.0
    %1796 = vmatprep.subr.mxu0 0.0
    %1797 = vmatpush1.msra.mxu0 0.0
    %1798 = vmatprep.subr.mxu0 0.0
    %1799 = vmatpush1.msra.mxu0 0.0
    %1800 = vmatprep.subr.mxu0 0.0
    %1801 = vmatpush1.msra.mxu0 0.0
    %1802 = vmatprep.subr.mxu0 0.0
    %1803 = vmatpush1.msra.mxu0 0.0
    %1804 = vmatprep.subr.mxu0 0.0
    %1805 = vmatpush1.msra.mxu0 0.0
    %1806 = vmatprep.subr.mxu0 0.0
    %1807 = vmatpush1.msra.mxu0 0.0
    %1808 = vmatprep.subr.mxu0 0.0
    %1809 = vmatpush1.msra.mxu0 0.0
    %1810 = vmatprep.subr.mxu0 0.0
    %1811 = vmatpush1.msra.mxu0 0.0
    %1812 = vmatprep.subr.mxu0 0.0
    %1813 = vmatpush1.msra.mxu0 0.0
    %1814 = vmatprep.subr.mxu0 0.0
    %1815 = vmatpush1.msra.mxu0 0.0
    %1816 = vmatprep.subr.mxu0 0.0
    %1817 = vmatpush1.msra.mxu0 0.0
    %1818 = vmatprep.subr.mxu0 0.0
    %1819 = vmatpush1.msra.mxu0 0.0
    %1820 = vmatprep.subr.mxu0 0.0
    %1821 = vmatpush1.msra.mxu0 0.0
    %1822 = vmatprep.subr.mxu0 0.0
    %1823 = vmatpush1.msra.mxu0 0.0
    %1824 = vmatprep.subr.mxu0 0.0
    %1825 = vmatpush1.msra.mxu0 0.0
    %1826 = vmatprep.subr.mxu0 0.0
    %1827 = vmatpush1.msra.mxu0 0.0
    %1828 = vmatprep.subr.mxu0 0.0
    %1829 = vmatpush1.msra.mxu0 0.0
    %1830 = vmatprep.mubr.f32.mxu0 0.0
    %1831 = vmatmul.mubr.f32.gmra.mrb[0].mxu0 %v1764
    %v1832 = vpop.f32.mrb[0].mxu0
    %v1833 = vadd.f32 0.0, %v1832
    %v1834 = vpop.f32.mrb[0].mxu0
    %1835 = vdwg.mxu0
    %v1837 = vrot.slane %v1833, 4
    %v1839 = vadd.f32 %v1204, %v1837
    %v1840 = vxor.u32 %v1839, 2147483648
    %v1841 = vmul.f32 %v1840, 1.442695
    %v1842 = vpow.pop %v1841
    %v1843 = vadd.f32 %v1842, 1.0
    %v1844 = vrcp.pop %v1843
    %v1845 = vmul.f32 1.0, %v1844
    %v1846 = vtanh.pop %v1839
    %v1848 = vrot.slane %v1749, 2
    %v1850 = vmul.f32 %v1845, %v1848
    %1852 = vrot.lane.b32.xlu0 %v1846, 96
    %v1853 = vpop.permute.xlu0 %1852
    %v1855 = vmul.f32 %v1845, %v1853
    %1857 = vrot.lane.b32.xlu0 %v1855, 16
    %v1858 = vpop.permute.xlu0 %1857
    %v1860 = vadd.f32 %v1850, %v1858
    %v1861 = vtanh.pop %v1860
    %1863 = vrot.lane.b32.xlu0 %v1861, 32
    %v1864 = vpop.permute.xlu0 %1863
    %v1866 = vmul.f32 %v1845, %v1864
    %1868 = vrot.lane.b32.xlu0 %v1866, 96
    %v1869 = vpop.permute.xlu0 %1868
    %1871 = vst.msk [vmem:[#allocation2] sm:$0x30] %vm1428, %v1869
    %v1872 = vrot.slane %v1866, 4
    %1873 = vrot.lane.b32.xlu0 %v1872, 80
    %v1874 = vpop.permute.xlu0 %1873
    %v1875 = vsel %vm250, %v1874, 0
    %1877 = vmatprep.subr.mxu0 0.0
    %1878 = vmatpush1.msra.mxu0 %v1212
    %1879 = vmatprep.subr.mxu0 0.0
    %1880 = vmatpush1.msra.mxu0 %v1213
    %1881 = vmatprep.subr.mxu0 0.0
    %1882 = vmatpush1.msra.mxu0 0.0
    %1883 = vmatprep.subr.mxu0 0.0
    %1884 = vmatpush1.msra.mxu0 0.0
    %1885 = vmatprep.subr.mxu0 0.0
    %1886 = vmatpush1.msra.mxu0 0.0
    %1887 = vmatprep.subr.mxu0 0.0
    %1888 = vmatpush1.msra.mxu0 0.0
    %1889 = vmatprep.subr.mxu0 0.0
    %1890 = vmatpush1.msra.mxu0 0.0
    %1891 = vmatprep.subr.mxu0 0.0
    %1892 = vmatpush1.msra.mxu0 0.0
    %1893 = vmatprep.subr.mxu0 0.0
    %1894 = vmatpush1.msra.mxu0 0.0
    %1895 = vmatprep.subr.mxu0 0.0
    %1896 = vmatpush1.msra.mxu0 0.0
    %1897 = vmatprep.subr.mxu0 0.0
    %1898 = vmatpush1.msra.mxu0 0.0
    %1899 = vmatprep.subr.mxu0 0.0
    %1900 = vmatpush1.msra.mxu0 0.0
    %1901 = vmatprep.subr.mxu0 0.0
    %1902 = vmatpush1.msra.mxu0 0.0
    %1903 = vmatprep.subr.mxu0 0.0
    %1904 = vmatpush1.msra.mxu0 0.0
    %1905 = vmatprep.subr.mxu0 0.0
    %1906 = vmatpush1.msra.mxu0 0.0
    %1907 = vmatprep.subr.mxu0 0.0
    %1908 = vmatpush1.msra.mxu0 0.0
    %1909 = vmatprep.subr.mxu0 0.0
    %1910 = vmatpush1.msra.mxu0 0.0
    %1911 = vmatprep.subr.mxu0 0.0
    %1912 = vmatpush1.msra.mxu0 0.0
    %1913 = vmatprep.subr.mxu0 0.0
    %1914 = vmatpush1.msra.mxu0 0.0
    %1915 = vmatprep.subr.mxu0 0.0
    %1916 = vmatpush1.msra.mxu0 0.0
    %1917 = vmatprep.subr.mxu0 0.0
    %1918 = vmatpush1.msra.mxu0 0.0
    %1919 = vmatprep.subr.mxu0 0.0
    %1920 = vmatpush1.msra.mxu0 0.0
    %1921 = vmatprep.subr.mxu0 0.0
    %1922 = vmatpush1.msra.mxu0 0.0
    %1923 = vmatprep.subr.mxu0 0.0
    %1924 = vmatpush1.msra.mxu0 0.0
    %1925 = vmatprep.subr.mxu0 0.0
    %1926 = vmatpush1.msra.mxu0 0.0
    %1927 = vmatprep.subr.mxu0 0.0
    %1928 = vmatpush1.msra.mxu0 0.0
    %1929 = vmatprep.subr.mxu0 0.0
    %1930 = vmatpush1.msra.mxu0 0.0
    %1931 = vmatprep.subr.mxu0 0.0
    %1932 = vmatpush1.msra.mxu0 0.0
    %1933 = vmatprep.subr.mxu0 0.0
    %1934 = vmatpush1.msra.mxu0 0.0
    %1935 = vmatprep.subr.mxu0 0.0
    %1936 = vmatpush1.msra.mxu0 0.0
    %1937 = vmatprep.subr.mxu0 0.0
    %1938 = vmatpush1.msra.mxu0 0.0
    %1939 = vmatprep.subr.mxu0 0.0
    %1940 = vmatpush1.msra.mxu0 0.0
    %1941 = vmatprep.mubr.f32.mxu0 0.0
    %1942 = vmatmul.mubr.f32.gmra.mrb[0].mxu0 %v1875
    %v1943 = vpop.f32.mrb[0].mxu0
    %v1944 = vadd.f32 0.0, %v1943
    %v1945 = vpop.f32.mrb[0].mxu0
    %1946 = vdwg.mxu0
    %v1948 = vrot.slane %v1944, 6
    %v1950 = vadd.f32 %v1204, %v1948
    %v1951 = vxor.u32 %v1950, 2147483648
    %v1952 = vmul.f32 %v1951, 1.442695
    %v1953 = vpow.pop %v1952
    %v1954 = vadd.f32 %v1953, 1.0
    %v1955 = vrcp.pop %v1954
    %v1956 = vmul.f32 1.0, %v1955
    %v1957 = vtanh.pop %v1950
    %v1959 = vrot.slane %v1860, 2
    %v1961 = vmul.f32 %v1956, %v1959
    %1963 = vrot.lane.b32.xlu0 %v1957, 96
    %v1964 = vpop.permute.xlu0 %1963
    %v1966 = vmul.f32 %v1956, %v1964
    %1968 = vrot.lane.b32.xlu0 %v1966, 16
    %v1969 = vpop.permute.xlu0 %1968
    %v1971 = vadd.f32 %v1961, %v1969
    %v1972 = vtanh.pop %v1971
    %1974 = vrot.lane.b32.xlu0 %v1972, 32
    %v1975 = vpop.permute.xlu0 %1974
    %v1977 = vmul.f32 %v1956, %v1975
    %1979 = vrot.lane.b32.xlu0 %v1977, 96
    %v1980 = vpop.permute.xlu0 %1979
    %1982 = vst.msk [vmem:[#allocation2] sm:$0xc] %vm1540, %v1980
    %v1983 = vrot.slane %v1977, 2
    %1984 = vrot.lane.b32.xlu0 %v1983, 80
    %v1985 = vpop.permute.xlu0 %1984
    %v1986 = vsel %vm250, %v1985, 0
    %1988 = vmatprep.subr.mxu0 0.0
    %1989 = vmatpush1.msra.mxu0 %v1212
    %1990 = vmatprep.subr.mxu0 0.0
    %1991 = vmatpush1.msra.mxu0 %v1213
    %1992 = vmatprep.subr.mxu0 0.0
    %1993 = vmatpush1.msra.mxu0 0.0
    %1994 = vmatprep.subr.mxu0 0.0
    %1995 = vmatpush1.msra.mxu0 0.0
    %1996 = vmatprep.subr.mxu0 0.0
    %1997 = vmatpush1.msra.mxu0 0.0
    %1998 = vmatprep.subr.mxu0 0.0
    %1999 = vmatpush1.msra.mxu0 0.0
    %2000 = vmatprep.subr.mxu0 0.0
    %2001 = vmatpush1.msra.mxu0 0.0
    %2002 = vmatprep.subr.mxu0 0.0
    %2003 = vmatpush1.msra.mxu0 0.0
    %2004 = vmatprep.subr.mxu0 0.0
    %2005 = vmatpush1.msra.mxu0 0.0
    %2006 = vmatprep.subr.mxu0 0.0
    %2007 = vmatpush1.msra.mxu0 0.0
    %2008 = vmatprep.subr.mxu0 0.0
    %2009 = vmatpush1.msra.mxu0 0.0
    %2010 = vmatprep.subr.mxu0 0.0
    %2011 = vmatpush1.msra.mxu0 0.0
    %2012 = vmatprep.subr.mxu0 0.0
    %2013 = vmatpush1.msra.mxu0 0.0
    %2014 = vmatprep.subr.mxu0 0.0
    %2015 = vmatpush1.msra.mxu0 0.0
    %2016 = vmatprep.subr.mxu0 0.0
    %2017 = vmatpush1.msra.mxu0 0.0
    %2018 = vmatprep.subr.mxu0 0.0
    %2019 = vmatpush1.msra.mxu0 0.0
    %2020 = vmatprep.subr.mxu0 0.0
    %2021 = vmatpush1.msra.mxu0 0.0
    %2022 = vmatprep.subr.mxu0 0.0
    %2023 = vmatpush1.msra.mxu0 0.0
    %2024 = vmatprep.subr.mxu0 0.0
    %2025 = vmatpush1.msra.mxu0 0.0
    %2026 = vmatprep.subr.mxu0 0.0
    %2027 = vmatpush1.msra.mxu0 0.0
    %2028 = vmatprep.subr.mxu0 0.0
    %2029 = vmatpush1.msra.mxu0 0.0
    %2030 = vmatprep.subr.mxu0 0.0
    %2031 = vmatpush1.msra.mxu0 0.0
    %2032 = vmatprep.subr.mxu0 0.0
    %2033 = vmatpush1.msra.mxu0 0.0
    %2034 = vmatprep.subr.mxu0 0.0
    %2035 = vmatpush1.msra.mxu0 0.0
    %2036 = vmatprep.subr.mxu0 0.0
    %2037 = vmatpush1.msra.mxu0 0.0
    %2038 = vmatprep.subr.mxu0 0.0
    %2039 = vmatpush1.msra.mxu0 0.0
    %2040 = vmatprep.subr.mxu0 0.0
    %2041 = vmatpush1.msra.mxu0 0.0
    %2042 = vmatprep.subr.mxu0 0.0
    %2043 = vmatpush1.msra.mxu0 0.0
    %2044 = vmatprep.subr.mxu0 0.0
    %2045 = vmatpush1.msra.mxu0 0.0
    %2046 = vmatprep.subr.mxu0 0.0
    %2047 = vmatpush1.msra.mxu0 0.0
    %2048 = vmatprep.subr.mxu0 0.0
    %2049 = vmatpush1.msra.mxu0 0.0
    %2050 = vmatprep.subr.mxu0 0.0
    %2051 = vmatpush1.msra.mxu0 0.0
    %2052 = vmatprep.mubr.f32.mxu0 0.0
    %2053 = vmatmul.mubr.f32.gmra.mrb[0].mxu0 %v1986
    %v2054 = vpop.f32.mrb[0].mxu0
    %v2055 = vadd.f32 0.0, %v2054
    %v2056 = vpop.f32.mrb[0].mxu0
    %2057 = vdwg.mxu0
    %v2058 = vadd.f32 %v1204, %v2055
    %v2059 = vxor.u32 %v2058, 2147483648
    %v2060 = vmul.f32 %v2059, 1.442695
    %v2061 = vpow.pop %v2060
    %v2062 = vadd.f32 %v2061, 1.0
    %v2063 = vrcp.pop %v2062
    %v2064 = vmul.f32 1.0, %v2063
    %v2065 = vtanh.pop %v2058
    %v2067 = vrot.slane %v1971, 2
    %v2069 = vmul.f32 %v2064, %v2067
    %2071 = vrot.lane.b32.xlu0 %v2065, 96
    %v2072 = vpop.permute.xlu0 %2071
    %v2074 = vmul.f32 %v2064, %v2072
    %2076 = vrot.lane.b32.xlu0 %v2074, 16
    %v2077 = vpop.permute.xlu0 %2076
    %v2079 = vadd.f32 %v2069, %v2077
    %v2080 = vtanh.pop %v2079
    %2082 = vrot.lane.b32.xlu0 %v2080, 32
    %v2083 = vpop.permute.xlu0 %2082
    %v2085 = vmul.f32 %v2064, %v2083
    %2087 = vrot.lane.b32.xlu0 %v2085, 96
    %v2088 = vpop.permute.xlu0 %2087
    %2090 = vst.msk [vmem:[#allocation2] sm:$0x3] %vm1649, %v2088
    %v2091 = vld [vmem:[#allocation2] sm:$0xff]
    %v2092 = vld [vmem:[#allocation2 + $0x8] sm:$0xff]
    %v2093 = vld [vmem:[#allocation9] sm:$0xff]
    %v2094 = vld [vmem:[#allocation9 + $0x8] sm:$0xff]
    %v2095 = vld [vmem:[#allocation9 + $0x10] sm:$0xff]
    %v2096 = vld [vmem:[#allocation9 + $0x18] sm:$0xff]
    %v2097 = vld [vmem:[%s9] sm:$0x1]
    %v2099 = vlaneseq
    %v2100 = vshrl.u32 %v2099, 7
    %v2101 = vsub.s32 0, %v2100
    %v2102 = vrot.slane %v2097, %v2101
    %v2105 = vsel %vm166, %v2091, 0
    %v2108 = vsel %vm166, %v2092, 0
    %2110 = vmatprep.subr.mxu0 0.0
    %2111 = vmatpush1.msra.mxu0 %v2093
    %2112 = vmatprep.subr.mxu0 0.0
    %2113 = vmatpush1.msra.mxu0 %v2094
    %2114 = vmatprep.subr.mxu0 0.0
    %2115 = vmatpush1.msra.mxu0 %v2095
    %2116 = vmatprep.subr.mxu0 0.0
    %2117 = vmatpush1.msra.mxu0 %v2096
    %2118 = vmatprep.subr.mxu0 0.0
    %2119 = vmatpush1.msra.mxu0 0.0
    %2120 = vmatprep.subr.mxu0 0.0
    %2121 = vmatpush1.msra.mxu0 0.0
    %2122 = vmatprep.subr.mxu0 0.0
    %2123 = vmatpush1.msra.mxu0 0.0
    %2124 = vmatprep.subr.mxu0 0.0
    %2125 = vmatpush1.msra.mxu0 0.0
    %2126 = vmatprep.subr.mxu0 0.0
    %2127 = vmatpush1.msra.mxu0 0.0
    %2128 = vmatprep.subr.mxu0 0.0
    %2129 = vmatpush1.msra.mxu0 0.0
    %2130 = vmatprep.subr.mxu0 0.0
    %2131 = vmatpush1.msra.mxu0 0.0
    %2132 = vmatprep.subr.mxu0 0.0
    %2133 = vmatpush1.msra.mxu0 0.0
    %2134 = vmatprep.subr.mxu0 0.0
    %2135 = vmatpush1.msra.mxu0 0.0
    %2136 = vmatprep.subr.mxu0 0.0
    %2137 = vmatpush1.msra.mxu0 0.0
    %2138 = vmatprep.subr.mxu0 0.0
    %2139 = vmatpush1.msra.mxu0 0.0
    %2140 = vmatprep.subr.mxu0 0.0
    %2141 = vmatpush1.msra.mxu0 0.0
    %2142 = vmatprep.subr.mxu0 0.0
    %2143 = vmatpush1.msra.mxu0 0.0
    %2144 = vmatprep.subr.mxu0 0.0
    %2145 = vmatpush1.msra.mxu0 0.0
    %2146 = vmatprep.subr.mxu0 0.0
    %2147 = vmatpush1.msra.mxu0 0.0
    %2148 = vmatprep.subr.mxu0 0.0
    %2149 = vmatpush1.msra.mxu0 0.0
    %2150 = vmatprep.subr.mxu0 0.0
    %2151 = vmatpush1.msra.mxu0 0.0
    %2152 = vmatprep.subr.mxu0 0.0
    %2153 = vmatpush1.msra.mxu0 0.0
    %2154 = vmatprep.subr.mxu0 0.0
    %2155 = vmatpush1.msra.mxu0 0.0
    %2156 = vmatprep.subr.mxu0 0.0
    %2157 = vmatpush1.msra.mxu0 0.0
    %2158 = vmatprep.subr.mxu0 0.0
    %2159 = vmatpush1.msra.mxu0 0.0
    %2160 = vmatprep.subr.mxu0 0.0
    %2161 = vmatpush1.msra.mxu0 0.0
    %2162 = vmatprep.subr.mxu0 0.0
    %2163 = vmatpush1.msra.mxu0 0.0
    %2164 = vmatprep.subr.mxu0 0.0
    %2165 = vmatpush1.msra.mxu0 0.0
    %2166 = vmatprep.subr.mxu0 0.0
    %2167 = vmatpush1.msra.mxu0 0.0
    %2168 = vmatprep.subr.mxu0 0.0
    %2169 = vmatpush1.msra.mxu0 0.0
    %2170 = vmatprep.subr.mxu0 0.0
    %2171 = vmatpush1.msra.mxu0 0.0
    %2172 = vmatprep.subr.mxu0 0.0
    %2173 = vmatpush1.msra.mxu0 0.0
    %2174 = vmatprep.mubr.f32.mxu0 0.0
    %2175 = vmatmul.mubr.f32.gmra.mrb[0].mxu0 %v2105
    %v2176 = vpop.f32.mrb[0].mxu0
    %v2177 = vadd.f32 %v2102, %v2176
    %v2178 = vpop.f32.mrb[0].mxu0
    %2179 = vmatprep.mubr.f32.mxu0 0.0
    %2180 = vmatmul.mubr.f32.gmra.mrb[0].mxu0 %v2108
    %v2181 = vpop.f32.mrb[0].mxu0
    %v2182 = vadd.f32 %v2102, %v2181
    %v2183 = vpop.f32.mrb[0].mxu0
    %2184 = vdwg.mxu0
    %v2185 = vld [vmem:[#allocation11] sm:$0xff]
    %v2186 = vld [vmem:[#allocation11 + $0x8] sm:$0xff]
    %2187 = vmatprep.subr.mxu0 0.0
    %2188 = vmatpush1.msra.mxu0 %v2185
    %2189 = vmatprep.subr.mxu0 0.0
    %2190 = vmatpush1.msra.mxu0 %v2186
    %2191 = vmatprep.subr.mxu0 0.0
    %2192 = vmatpush1.msra.mxu0 0.0
    %2193 = vmatprep.subr.mxu0 0.0
    %2194 = vmatpush1.msra.mxu0 0.0
    %2195 = vmatprep.subr.mxu0 0.0
    %2196 = vmatpush1.msra.mxu0 0.0
    %2197 = vmatprep.subr.mxu0 0.0
    %2198 = vmatpush1.msra.mxu0 0.0
    %2199 = vmatprep.subr.mxu0 0.0
    %2200 = vmatpush1.msra.mxu0 0.0
    %2201 = vmatprep.subr.mxu0 0.0
    %2202 = vmatpush1.msra.mxu0 0.0
    %2203 = vmatprep.subr.mxu0 0.0
    %2204 = vmatpush1.msra.mxu0 0.0
    %2205 = vmatprep.subr.mxu0 0.0
    %2206 = vmatpush1.msra.mxu0 0.0
    %2207 = vmatprep.subr.mxu0 0.0
    %2208 = vmatpush1.msra.mxu0 0.0
    %2209 = vmatprep.subr.mxu0 0.0
    %2210 = vmatpush1.msra.mxu0 0.0
    %2211 = vmatprep.subr.mxu0 0.0
    %2212 = vmatpush1.msra.mxu0 0.0
    %2213 = vmatprep.subr.mxu0 0.0
    %2214 = vmatpush1.msra.mxu0 0.0
    %2215 = vmatprep.subr.mxu0 0.0
    %2216 = vmatpush1.msra.mxu0 0.0
    %2217 = vmatprep.subr.mxu0 0.0
    %2218 = vmatpush1.msra.mxu0 0.0
    %2219 = vmatprep.subr.mxu0 0.0
    %2220 = vmatpush1.msra.mxu0 0.0
    %2221 = vmatprep.subr.mxu0 0.0
    %2222 = vmatpush1.msra.mxu0 0.0
    %2223 = vmatprep.subr.mxu0 0.0
    %2224 = vmatpush1.msra.mxu0 0.0
    %2225 = vmatprep.subr.mxu0 0.0
    %2226 = vmatpush1.msra.mxu0 0.0
    %2227 = vmatprep.subr.mxu0 0.0
    %2228 = vmatpush1.msra.mxu0 0.0
    %2229 = vmatprep.subr.mxu0 0.0
    %2230 = vmatpush1.msra.mxu0 0.0
    %2231 = vmatprep.subr.mxu0 0.0
    %2232 = vmatpush1.msra.mxu0 0.0
    %2233 = vmatprep.subr.mxu0 0.0
    %2234 = vmatpush1.msra.mxu0 0.0
    %2235 = vmatprep.subr.mxu0 0.0
    %2236 = vmatpush1.msra.mxu0 0.0
    %2237 = vmatprep.subr.mxu0 0.0
    %2238 = vmatpush1.msra.mxu0 0.0
    %2239 = vmatprep.subr.mxu0 0.0
    %2240 = vmatpush1.msra.mxu0 0.0
    %2241 = vmatprep.subr.mxu0 0.0
    %2242 = vmatpush1.msra.mxu0 0.0
    %2243 = vmatprep.subr.mxu0 0.0
    %2244 = vmatpush1.msra.mxu0 0.0
    %2245 = vmatprep.subr.mxu0 0.0
    %2246 = vmatpush1.msra.mxu0 0.0
    %2247 = vmatprep.subr.mxu0 0.0
    %2248 = vmatpush1.msra.mxu0 0.0
    %2249 = vmatprep.subr.mxu0 0.0
    %2250 = vmatpush1.msra.mxu0 0.0
    %2251 = vmatprep.mubr.f32.mxu0 0.0
    %2252 = vmatmul.mubr.f32.gmra.mrb[0].mxu0 %v252
    %v2253 = vpop.f32.mrb[0].mxu0
    %v2254 = vadd.f32 0.0, %v2253
    %v2255 = vpop.f32.mrb[0].mxu0
    %2256 = vdwg.mxu0
    %v2257 = vadd.f32 %v2177, %v2254
    %v2258 = vxor.u32 %v2257, 2147483648
    %v2259 = vmul.f32 %v2258, 1.442695
    %v2260 = vpow.pop %v2259
    %v2261 = vadd.f32 %v2260, 1.0
    %v2262 = vrcp.pop %v2261
    %v2263 = vmul.f32 1.0, %v2262
    %v2264 = vtanh.pop %v2257
    %v2265 = vmul.f32 %v2263, 0.0
    %2267 = vrot.lane.b32.xlu0 %v2264, 96
    %v2268 = vpop.permute.xlu0 %2267
    %v2270 = vmul.f32 %v2263, %v2268
    %2272 = vrot.lane.b32.xlu0 %v2270, 16
    %v2273 = vpop.permute.xlu0 %2272
    %v2275 = vadd.f32 %v2265, %v2273
    %v2276 = vtanh.pop %v2275
    %2278 = vrot.lane.b32.xlu0 %v2276, 32
    %v2279 = vpop.permute.xlu0 %2278
    %v2281 = vmul.f32 %v2263, %v2279
    %2283 = vrot.lane.b32.xlu0 %v2281, 80
    %v2284 = vpop.permute.xlu0 %2283
    %v2285 = vsel %vm250, %v2284, 0
    %2287 = vmatprep.subr.mxu0 0.0
    %2288 = vmatpush1.msra.mxu0 %v2185
    %2289 = vmatprep.subr.mxu0 0.0
    %2290 = vmatpush1.msra.mxu0 %v2186
    %2291 = vmatprep.subr.mxu0 0.0
    %2292 = vmatpush1.msra.mxu0 0.0
    %2293 = vmatprep.subr.mxu0 0.0
    %2294 = vmatpush1.msra.mxu0 0.0
    %2295 = vmatprep.subr.mxu0 0.0
    %2296 = vmatpush1.msra.mxu0 0.0
    %2297 = vmatprep.subr.mxu0 0.0
    %2298 = vmatpush1.msra.mxu0 0.0
    %2299 = vmatprep.subr.mxu0 0.0
    %2300 = vmatpush1.msra.mxu0 0.0
    %2301 = vmatprep.subr.mxu0 0.0
    %2302 = vmatpush1.msra.mxu0 0.0
    %2303 = vmatprep.subr.mxu0 0.0
    %2304 = vmatpush1.msra.mxu0 0.0
    %2305 = vmatprep.subr.mxu0 0.0
    %2306 = vmatpush1.msra.mxu0 0.0
    %2307 = vmatprep.subr.mxu0 0.0
    %2308 = vmatpush1.msra.mxu0 0.0
    %2309 = vmatprep.subr.mxu0 0.0
    %2310 = vmatpush1.msra.mxu0 0.0
    %2311 = vmatprep.subr.mxu0 0.0
    %2312 = vmatpush1.msra.mxu0 0.0
    %2313 = vmatprep.subr.mxu0 0.0
    %2314 = vmatpush1.msra.mxu0 0.0
    %2315 = vmatprep.subr.mxu0 0.0
    %2316 = vmatpush1.msra.mxu0 0.0
    %2317 = vmatprep.subr.mxu0 0.0
    %2318 = vmatpush1.msra.mxu0 0.0
    %2319 = vmatprep.subr.mxu0 0.0
    %2320 = vmatpush1.msra.mxu0 0.0
    %2321 = vmatprep.subr.mxu0 0.0
    %2322 = vmatpush1.msra.mxu0 0.0
    %2323 = vmatprep.subr.mxu0 0.0
    %2324 = vmatpush1.msra.mxu0 0.0
    %2325 = vmatprep.subr.mxu0 0.0
    %2326 = vmatpush1.msra.mxu0 0.0
    %2327 = vmatprep.subr.mxu0 0.0
    %2328 = vmatpush1.msra.mxu0 0.0
    %2329 = vmatprep.subr.mxu0 0.0
    %2330 = vmatpush1.msra.mxu0 0.0
    %2331 = vmatprep.subr.mxu0 0.0
    %2332 = vmatpush1.msra.mxu0 0.0
    %2333 = vmatprep.subr.mxu0 0.0
    %2334 = vmatpush1.msra.mxu0 0.0
    %2335 = vmatprep.subr.mxu0 0.0
    %2336 = vmatpush1.msra.mxu0 0.0
    %2337 = vmatprep.subr.mxu0 0.0
    %2338 = vmatpush1.msra.mxu0 0.0
    %2339 = vmatprep.subr.mxu0 0.0
    %2340 = vmatpush1.msra.mxu0 0.0
    %2341 = vmatprep.subr.mxu0 0.0
    %2342 = vmatpush1.msra.mxu0 0.0
    %2343 = vmatprep.subr.mxu0 0.0
    %2344 = vmatpush1.msra.mxu0 0.0
    %2345 = vmatprep.subr.mxu0 0.0
    %2346 = vmatpush1.msra.mxu0 0.0
    %2347 = vmatprep.subr.mxu0 0.0
    %2348 = vmatpush1.msra.mxu0 0.0
    %2349 = vmatprep.subr.mxu0 0.0
    %2350 = vmatpush1.msra.mxu0 0.0
    %2351 = vmatprep.mubr.f32.mxu0 0.0
    %2352 = vmatmul.mubr.f32.gmra.mrb[0].mxu0 %v2285
    %v2353 = vpop.f32.mrb[0].mxu0
    %v2354 = vadd.f32 0.0, %v2353
    %v2355 = vpop.f32.mrb[0].mxu0
    %2356 = vdwg.mxu0
    %v2358 = vrot.slane %v2354, 6
    %v2360 = vadd.f32 %v2177, %v2358
    %v2361 = vxor.u32 %v2360, 2147483648
    %v2362 = vmul.f32 %v2361, 1.442695
    %v2363 = vpow.pop %v2362
    %v2364 = vadd.f32 %v2363, 1.0
    %v2365 = vrcp.pop %v2364
    %v2366 = vmul.f32 1.0, %v2365
    %v2367 = vtanh.pop %v2360
    %v2369 = vrot.slane %v2275, 6
    %v2371 = vmul.f32 %v2366, %v2369
    %2373 = vrot.lane.b32.xlu0 %v2367, 96
    %v2374 = vpop.permute.xlu0 %2373
    %v2376 = vmul.f32 %v2366, %v2374
    %2378 = vrot.lane.b32.xlu0 %v2376, 16
    %v2379 = vpop.permute.xlu0 %2378
    %v2381 = vadd.f32 %v2371, %v2379
    %v2382 = vtanh.pop %v2381
    %2384 = vrot.lane.b32.xlu0 %v2382, 32
    %v2385 = vpop.permute.xlu0 %2384
    %v2387 = vmul.f32 %v2366, %v2385
    %v2389 = vrot.slane %v2387, 2
    %v2391 = vmax.f32 %v2281, %v2389
    %2392 = vrot.lane.b32.xlu0 %v2389, 80
    %v2393 = vpop.permute.xlu0 %2392
    %v2394 = vsel %vm250, %v2393, 0
    %2396 = vmatprep.subr.mxu0 0.0
    %2397 = vmatpush1.msra.mxu0 %v2185
    %2398 = vmatprep.subr.mxu0 0.0
    %2399 = vmatpush1.msra.mxu0 %v2186
    %2400 = vmatprep.subr.mxu0 0.0
    %2401 = vmatpush1.msra.mxu0 0.0
    %2402 = vmatprep.subr.mxu0 0.0
    %2403 = vmatpush1.msra.mxu0 0.0
    %2404 = vmatprep.subr.mxu0 0.0
    %2405 = vmatpush1.msra.mxu0 0.0
    %2406 = vmatprep.subr.mxu0 0.0
    %2407 = vmatpush1.msra.mxu0 0.0
    %2408 = vmatprep.subr.mxu0 0.0
    %2409 = vmatpush1.msra.mxu0 0.0
    %2410 = vmatprep.subr.mxu0 0.0
    %2411 = vmatpush1.msra.mxu0 0.0
    %2412 = vmatprep.subr.mxu0 0.0
    %2413 = vmatpush1.msra.mxu0 0.0
    %2414 = vmatprep.subr.mxu0 0.0
    %2415 = vmatpush1.msra.mxu0 0.0
    %2416 = vmatprep.subr.mxu0 0.0
    %2417 = vmatpush1.msra.mxu0 0.0
    %2418 = vmatprep.subr.mxu0 0.0
    %2419 = vmatpush1.msra.mxu0 0.0
    %2420 = vmatprep.subr.mxu0 0.0
    %2421 = vmatpush1.msra.mxu0 0.0
    %2422 = vmatprep.subr.mxu0 0.0
    %2423 = vmatpush1.msra.mxu0 0.0
    %2424 = vmatprep.subr.mxu0 0.0
    %2425 = vmatpush1.msra.mxu0 0.0
    %2426 = vmatprep.subr.mxu0 0.0
    %2427 = vmatpush1.msra.mxu0 0.0
    %2428 = vmatprep.subr.mxu0 0.0
    %2429 = vmatpush1.msra.mxu0 0.0
    %2430 = vmatprep.subr.mxu0 0.0
    %2431 = vmatpush1.msra.mxu0 0.0
    %2432 = vmatprep.subr.mxu0 0.0
    %2433 = vmatpush1.msra.mxu0 0.0
    %2434 = vmatprep.subr.mxu0 0.0
    %2435 = vmatpush1.msra.mxu0 0.0
    %2436 = vmatprep.subr.mxu0 0.0
    %2437 = vmatpush1.msra.mxu0 0.0
    %2438 = vmatprep.subr.mxu0 0.0
    %2439 = vmatpush1.msra.mxu0 0.0
    %2440 = vmatprep.subr.mxu0 0.0
    %2441 = vmatpush1.msra.mxu0 0.0
    %2442 = vmatprep.subr.mxu0 0.0
    %2443 = vmatpush1.msra.mxu0 0.0
    %2444 = vmatprep.subr.mxu0 0.0
    %2445 = vmatpush1.msra.mxu0 0.0
    %2446 = vmatprep.subr.mxu0 0.0
    %2447 = vmatpush1.msra.mxu0 0.0
    %2448 = vmatprep.subr.mxu0 0.0
    %2449 = vmatpush1.msra.mxu0 0.0
    %2450 = vmatprep.subr.mxu0 0.0
    %2451 = vmatpush1.msra.mxu0 0.0
    %2452 = vmatprep.subr.mxu0 0.0
    %2453 = vmatpush1.msra.mxu0 0.0
    %2454 = vmatprep.subr.mxu0 0.0
    %2455 = vmatpush1.msra.mxu0 0.0
    %2456 = vmatprep.subr.mxu0 0.0
    %2457 = vmatpush1.msra.mxu0 0.0
    %2458 = vmatprep.subr.mxu0 0.0
    %2459 = vmatpush1.msra.mxu0 0.0
    %2460 = vmatprep.mubr.f32.mxu0 0.0
    %2461 = vmatmul.mubr.f32.gmra.mrb[0].mxu0 %v2394
    %v2462 = vpop.f32.mrb[0].mxu0
    %v2463 = vadd.f32 0.0, %v2462
    %v2464 = vpop.f32.mrb[0].mxu0
    %2465 = vdwg.mxu0
    %v2467 = vrot.slane %v2463, 4
    %v2469 = vadd.f32 %v2177, %v2467
    %v2470 = vxor.u32 %v2469, 2147483648
    %v2471 = vmul.f32 %v2470, 1.442695
    %v2472 = vpow.pop %v2471
    %v2473 = vadd.f32 %v2472, 1.0
    %v2474 = vrcp.pop %v2473
    %v2475 = vmul.f32 1.0, %v2474
    %v2476 = vtanh.pop %v2469
    %v2478 = vrot.slane %v2381, 6
    %v2480 = vmul.f32 %v2475, %v2478
    %2482 = vrot.lane.b32.xlu0 %v2476, 96
    %v2483 = vpop.permute.xlu0 %2482
    %v2485 = vmul.f32 %v2475, %v2483
    %2487 = vrot.lane.b32.xlu0 %v2485, 16
    %v2488 = vpop.permute.xlu0 %2487
    %v2490 = vadd.f32 %v2480, %v2488
    %v2491 = vtanh.pop %v2490
    %2493 = vrot.lane.b32.xlu0 %v2491, 32
    %v2494 = vpop.permute.xlu0 %2493
    %v2496 = vmul.f32 %v2475, %v2494
    %v2498 = vrot.slane %v2496, 4
    %v2500 = vmax.f32 %v2391, %v2498
    %2501 = vrot.lane.b32.xlu0 %v2498, 80
    %v2502 = vpop.permute.xlu0 %2501
    %v2503 = vsel %vm250, %v2502, 0
    %2505 = vmatprep.subr.mxu0 0.0
    %2506 = vmatpush1.msra.mxu0 %v2185
    %2507 = vmatprep.subr.mxu0 0.0
    %2508 = vmatpush1.msra.mxu0 %v2186
    %2509 = vmatprep.subr.mxu0 0.0
    %2510 = vmatpush1.msra.mxu0 0.0
    %2511 = vmatprep.subr.mxu0 0.0
    %2512 = vmatpush1.msra.mxu0 0.0
    %2513 = vmatprep.subr.mxu0 0.0
    %2514 = vmatpush1.msra.mxu0 0.0
    %2515 = vmatprep.subr.mxu0 0.0
    %2516 = vmatpush1.msra.mxu0 0.0
    %2517 = vmatprep.subr.mxu0 0.0
    %2518 = vmatpush1.msra.mxu0 0.0
    %2519 = vmatprep.subr.mxu0 0.0
    %2520 = vmatpush1.msra.mxu0 0.0
    %2521 = vmatprep.subr.mxu0 0.0
    %2522 = vmatpush1.msra.mxu0 0.0
    %2523 = vmatprep.subr.mxu0 0.0
    %2524 = vmatpush1.msra.mxu0 0.0
    %2525 = vmatprep.subr.mxu0 0.0
    %2526 = vmatpush1.msra.mxu0 0.0
    %2527 = vmatprep.subr.mxu0 0.0
    %2528 = vmatpush1.msra.mxu0 0.0
    %2529 = vmatprep.subr.mxu0 0.0
    %2530 = vmatpush1.msra.mxu0 0.0
    %2531 = vmatprep.subr.mxu0 0.0
    %2532 = vmatpush1.msra.mxu0 0.0
    %2533 = vmatprep.subr.mxu0 0.0
    %2534 = vmatpush1.msra.mxu0 0.0
    %2535 = vmatprep.subr.mxu0 0.0
    %2536 = vmatpush1.msra.mxu0 0.0
    %2537 = vmatprep.subr.mxu0 0.0
    %2538 = vmatpush1.msra.mxu0 0.0
    %2539 = vmatprep.subr.mxu0 0.0
    %2540 = vmatpush1.msra.mxu0 0.0
    %2541 = vmatprep.subr.mxu0 0.0
    %2542 = vmatpush1.msra.mxu0 0.0
    %2543 = vmatprep.subr.mxu0 0.0
    %2544 = vmatpush1.msra.mxu0 0.0
    %2545 = vmatprep.subr.mxu0 0.0
    %2546 = vmatpush1.msra.mxu0 0.0
    %2547 = vmatprep.subr.mxu0 0.0
    %2548 = vmatpush1.msra.mxu0 0.0
    %2549 = vmatprep.subr.mxu0 0.0
    %2550 = vmatpush1.msra.mxu0 0.0
    %2551 = vmatprep.subr.mxu0 0.0
    %2552 = vmatpush1.msra.mxu0 0.0
    %2553 = vmatprep.subr.mxu0 0.0
    %2554 = vmatpush1.msra.mxu0 0.0
    %2555 = vmatprep.subr.mxu0 0.0
    %2556 = vmatpush1.msra.mxu0 0.0
    %2557 = vmatprep.subr.mxu0 0.0
    %2558 = vmatpush1.msra.mxu0 0.0
    %2559 = vmatprep.subr.mxu0 0.0
    %2560 = vmatpush1.msra.mxu0 0.0
    %2561 = vmatprep.subr.mxu0 0.0
    %2562 = vmatpush1.msra.mxu0 0.0
    %2563 = vmatprep.subr.mxu0 0.0
    %2564 = vmatpush1.msra.mxu0 0.0
    %2565 = vmatprep.subr.mxu0 0.0
    %2566 = vmatpush1.msra.mxu0 0.0
    %2567 = vmatprep.subr.mxu0 0.0
    %2568 = vmatpush1.msra.mxu0 0.0
    %2569 = vmatprep.mubr.f32.mxu0 0.0
    %2570 = vmatmul.mubr.f32.gmra.mrb[0].mxu0 %v2503
    %v2571 = vpop.f32.mrb[0].mxu0
    %v2572 = vadd.f32 0.0, %v2571
    %v2573 = vpop.f32.mrb[0].mxu0
    %2574 = vdwg.mxu0
    %v2576 = vrot.slane %v2572, 2
    %v2578 = vadd.f32 %v2177, %v2576
    %v2579 = vxor.u32 %v2578, 2147483648
    %v2580 = vmul.f32 %v2579, 1.442695
    %v2581 = vpow.pop %v2580
    %v2582 = vadd.f32 %v2581, 1.0
    %v2583 = vrcp.pop %v2582
    %v2584 = vmul.f32 1.0, %v2583
    %v2585 = vtanh.pop %v2578
    %v2587 = vrot.slane %v2490, 6
    %v2589 = vmul.f32 %v2584, %v2587
    %2591 = vrot.lane.b32.xlu0 %v2585, 96
    %v2592 = vpop.permute.xlu0 %2591
    %v2594 = vmul.f32 %v2584, %v2592
    %2596 = vrot.lane.b32.xlu0 %v2594, 16
    %v2597 = vpop.permute.xlu0 %2596
    %v2599 = vadd.f32 %v2589, %v2597
    %v2600 = vtanh.pop %v2599
    %2602 = vrot.lane.b32.xlu0 %v2600, 32
    %v2603 = vpop.permute.xlu0 %2602
    %v2605 = vmul.f32 %v2584, %v2603
    %v2607 = vrot.slane %v2605, 6
    %v2609 = vmax.f32 %v2500, %v2607
    %2610 = vrot.lane.b32.xlu0 %v2607, 80
    %v2611 = vpop.permute.xlu0 %2610
    %v2612 = vsel %vm250, %v2611, 0
    %2614 = vmatprep.subr.mxu0 0.0
    %2615 = vmatpush1.msra.mxu0 %v2185
    %2616 = vmatprep.subr.mxu0 0.0
    %2617 = vmatpush1.msra.mxu0 %v2186
    %2618 = vmatprep.subr.mxu0 0.0
    %2619 = vmatpush1.msra.mxu0 0.0
    %2620 = vmatprep.subr.mxu0 0.0
    %2621 = vmatpush1.msra.mxu0 0.0
    %2622 = vmatprep.subr.mxu0 0.0
    %2623 = vmatpush1.msra.mxu0 0.0
    %2624 = vmatprep.subr.mxu0 0.0
    %2625 = vmatpush1.msra.mxu0 0.0
    %2626 = vmatprep.subr.mxu0 0.0
    %2627 = vmatpush1.msra.mxu0 0.0
    %2628 = vmatprep.subr.mxu0 0.0
    %2629 = vmatpush1.msra.mxu0 0.0
    %2630 = vmatprep.subr.mxu0 0.0
    %2631 = vmatpush1.msra.mxu0 0.0
    %2632 = vmatprep.subr.mxu0 0.0
    %2633 = vmatpush1.msra.mxu0 0.0
    %2634 = vmatprep.subr.mxu0 0.0
    %2635 = vmatpush1.msra.mxu0 0.0
    %2636 = vmatprep.subr.mxu0 0.0
    %2637 = vmatpush1.msra.mxu0 0.0
    %2638 = vmatprep.subr.mxu0 0.0
    %2639 = vmatpush1.msra.mxu0 0.0
    %2640 = vmatprep.subr.mxu0 0.0
    %2641 = vmatpush1.msra.mxu0 0.0
    %2642 = vmatprep.subr.mxu0 0.0
    %2643 = vmatpush1.msra.mxu0 0.0
    %2644 = vmatprep.subr.mxu0 0.0
    %2645 = vmatpush1.msra.mxu0 0.0
    %2646 = vmatprep.subr.mxu0 0.0
    %2647 = vmatpush1.msra.mxu0 0.0
    %2648 = vmatprep.subr.mxu0 0.0
    %2649 = vmatpush1.msra.mxu0 0.0
    %2650 = vmatprep.subr.mxu0 0.0
    %2651 = vmatpush1.msra.mxu0 0.0
    %2652 = vmatprep.subr.mxu0 0.0
    %2653 = vmatpush1.msra.mxu0 0.0
    %2654 = vmatprep.subr.mxu0 0.0
    %2655 = vmatpush1.msra.mxu0 0.0
    %2656 = vmatprep.subr.mxu0 0.0
    %2657 = vmatpush1.msra.mxu0 0.0
    %2658 = vmatprep.subr.mxu0 0.0
    %2659 = vmatpush1.msra.mxu0 0.0
    %2660 = vmatprep.subr.mxu0 0.0
    %2661 = vmatpush1.msra.mxu0 0.0
    %2662 = vmatprep.subr.mxu0 0.0
    %2663 = vmatpush1.msra.mxu0 0.0
    %2664 = vmatprep.subr.mxu0 0.0
    %2665 = vmatpush1.msra.mxu0 0.0
    %2666 = vmatprep.subr.mxu0 0.0
    %2667 = vmatpush1.msra.mxu0 0.0
    %2668 = vmatprep.subr.mxu0 0.0
    %2669 = vmatpush1.msra.mxu0 0.0
    %2670 = vmatprep.subr.mxu0 0.0
    %2671 = vmatpush1.msra.mxu0 0.0
    %2672 = vmatprep.subr.mxu0 0.0
    %2673 = vmatpush1.msra.mxu0 0.0
    %2674 = vmatprep.subr.mxu0 0.0
    %2675 = vmatpush1.msra.mxu0 0.0
    %2676 = vmatprep.subr.mxu0 0.0
    %2677 = vmatpush1.msra.mxu0 0.0
    %2678 = vmatprep.mubr.f32.mxu0 0.0
    %2679 = vmatmul.mubr.f32.gmra.mrb[0].mxu0 %v2612
    %v2680 = vpop.f32.mrb[0].mxu0
    %v2681 = vadd.f32 0.0, %v2680
    %v2682 = vpop.f32.mrb[0].mxu0
    %2683 = vdwg.mxu0
    %v2684 = vadd.f32 %v2182, %v2681
    %v2685 = vxor.u32 %v2684, 2147483648
    %v2686 = vmul.f32 %v2685, 1.442695
    %v2687 = vpow.pop %v2686
    %v2688 = vadd.f32 %v2687, 1.0
    %v2689 = vrcp.pop %v2688
    %v2690 = vmul.f32 1.0, %v2689
    %v2691 = vtanh.pop %v2684
    %v2693 = vrot.slane %v2599, 6
    %v2695 = vmul.f32 %v2690, %v2693
    %2697 = vrot.lane.b32.xlu0 %v2691, 96
    %v2698 = vpop.permute.xlu0 %2697
    %v2700 = vmul.f32 %v2690, %v2698
    %2702 = vrot.lane.b32.xlu0 %v2700, 16
    %v2703 = vpop.permute.xlu0 %2702
    %v2705 = vadd.f32 %v2695, %v2703
    %v2706 = vtanh.pop %v2705
    %2708 = vrot.lane.b32.xlu0 %v2706, 32
    %v2709 = vpop.permute.xlu0 %2708
    %v2711 = vmul.f32 %v2690, %v2709
    %v2712 = vmax.f32 %v2609, %v2711
    %2714 = vrot.lane.b32.xlu0 %v2711, 80
    %v2715 = vpop.permute.xlu0 %2714
    %v2716 = vsel %vm250, %v2715, 0
    %2718 = vmatprep.subr.mxu0 0.0
    %2719 = vmatpush1.msra.mxu0 %v2185
    %2720 = vmatprep.subr.mxu0 0.0
    %2721 = vmatpush1.msra.mxu0 %v2186
    %2722 = vmatprep.subr.mxu0 0.0
    %2723 = vmatpush1.msra.mxu0 0.0
    %2724 = vmatprep.subr.mxu0 0.0
    %2725 = vmatpush1.msra.mxu0 0.0
    %2726 = vmatprep.subr.mxu0 0.0
    %2727 = vmatpush1.msra.mxu0 0.0
    %2728 = vmatprep.subr.mxu0 0.0
    %2729 = vmatpush1.msra.mxu0 0.0
    %2730 = vmatprep.subr.mxu0 0.0
    %2731 = vmatpush1.msra.mxu0 0.0
    %2732 = vmatprep.subr.mxu0 0.0
    %2733 = vmatpush1.msra.mxu0 0.0
    %2734 = vmatprep.subr.mxu0 0.0
    %2735 = vmatpush1.msra.mxu0 0.0
    %2736 = vmatprep.subr.mxu0 0.0
    %2737 = vmatpush1.msra.mxu0 0.0
    %2738 = vmatprep.subr.mxu0 0.0
    %2739 = vmatpush1.msra.mxu0 0.0
    %2740 = vmatprep.subr.mxu0 0.0
    %2741 = vmatpush1.msra.mxu0 0.0
    %2742 = vmatprep.subr.mxu0 0.0
    %2743 = vmatpush1.msra.mxu0 0.0
    %2744 = vmatprep.subr.mxu0 0.0
    %2745 = vmatpush1.msra.mxu0 0.0
    %2746 = vmatprep.subr.mxu0 0.0
    %2747 = vmatpush1.msra.mxu0 0.0
    %2748 = vmatprep.subr.mxu0 0.0
    %2749 = vmatpush1.msra.mxu0 0.0
    %2750 = vmatprep.subr.mxu0 0.0
    %2751 = vmatpush1.msra.mxu0 0.0
    %2752 = vmatprep.subr.mxu0 0.0
    %2753 = vmatpush1.msra.mxu0 0.0
    %2754 = vmatprep.subr.mxu0 0.0
    %2755 = vmatpush1.msra.mxu0 0.0
    %2756 = vmatprep.subr.mxu0 0.0
    %2757 = vmatpush1.msra.mxu0 0.0
    %2758 = vmatprep.subr.mxu0 0.0
    %2759 = vmatpush1.msra.mxu0 0.0
    %2760 = vmatprep.subr.mxu0 0.0
    %2761 = vmatpush1.msra.mxu0 0.0
    %2762 = vmatprep.subr.mxu0 0.0
    %2763 = vmatpush1.msra.mxu0 0.0
    %2764 = vmatprep.subr.mxu0 0.0
    %2765 = vmatpush1.msra.mxu0 0.0
    %2766 = vmatprep.subr.mxu0 0.0
    %2767 = vmatpush1.msra.mxu0 0.0
    %2768 = vmatprep.subr.mxu0 0.0
    %2769 = vmatpush1.msra.mxu0 0.0
    %2770 = vmatprep.subr.mxu0 0.0
    %2771 = vmatpush1.msra.mxu0 0.0
    %2772 = vmatprep.subr.mxu0 0.0
    %2773 = vmatpush1.msra.mxu0 0.0
    %2774 = vmatprep.subr.mxu0 0.0
    %2775 = vmatpush1.msra.mxu0 0.0
    %2776 = vmatprep.subr.mxu0 0.0
    %2777 = vmatpush1.msra.mxu0 0.0
    %2778 = vmatprep.subr.mxu0 0.0
    %2779 = vmatpush1.msra.mxu0 0.0
    %2780 = vmatprep.subr.mxu0 0.0
    %2781 = vmatpush1.msra.mxu0 0.0
    %2782 = vmatprep.mubr.f32.mxu0 0.0
    %2783 = vmatmul.mubr.f32.gmra.mrb[0].mxu0 %v2716
    %v2784 = vpop.f32.mrb[0].mxu0
    %v2785 = vadd.f32 0.0, %v2784
    %v2786 = vpop.f32.mrb[0].mxu0
    %2787 = vdwg.mxu0
    %v2789 = vrot.slane %v2785, 6
    %v2791 = vadd.f32 %v2182, %v2789
    %v2792 = vxor.u32 %v2791, 2147483648
    %v2793 = vmul.f32 %v2792, 1.442695
    %v2794 = vpow.pop %v2793
    %v2795 = vadd.f32 %v2794, 1.0
    %v2796 = vrcp.pop %v2795
    %v2797 = vmul.f32 1.0, %v2796
    %v2798 = vtanh.pop %v2791
    %v2800 = vrot.slane %v2705, 6
    %v2802 = vmul.f32 %v2797, %v2800
    %2804 = vrot.lane.b32.xlu0 %v2798, 96
    %v2805 = vpop.permute.xlu0 %2804
    %v2807 = vmul.f32 %v2797, %v2805
    %2809 = vrot.lane.b32.xlu0 %v2807, 16
    %v2810 = vpop.permute.xlu0 %2809
    %v2812 = vadd.f32 %v2802, %v2810
    %v2813 = vtanh.pop %v2812
    %2815 = vrot.lane.b32.xlu0 %v2813, 32
    %v2816 = vpop.permute.xlu0 %2815
    %v2818 = vmul.f32 %v2797, %v2816
    %v2820 = vrot.slane %v2818, 2
    %v2822 = vmax.f32 %v2712, %v2820
    %2823 = vrot.lane.b32.xlu0 %v2820, 80
    %v2824 = vpop.permute.xlu0 %2823
    %v2825 = vsel %vm250, %v2824, 0
    %2827 = vmatprep.subr.mxu0 0.0
    %2828 = vmatpush1.msra.mxu0 %v2185
    %2829 = vmatprep.subr.mxu0 0.0
    %2830 = vmatpush1.msra.mxu0 %v2186
    %2831 = vmatprep.subr.mxu0 0.0
    %2832 = vmatpush1.msra.mxu0 0.0
    %2833 = vmatprep.subr.mxu0 0.0
    %2834 = vmatpush1.msra.mxu0 0.0
    %2835 = vmatprep.subr.mxu0 0.0
    %2836 = vmatpush1.msra.mxu0 0.0
    %2837 = vmatprep.subr.mxu0 0.0
    %2838 = vmatpush1.msra.mxu0 0.0
    %2839 = vmatprep.subr.mxu0 0.0
    %2840 = vmatpush1.msra.mxu0 0.0
    %2841 = vmatprep.subr.mxu0 0.0
    %2842 = vmatpush1.msra.mxu0 0.0
    %2843 = vmatprep.subr.mxu0 0.0
    %2844 = vmatpush1.msra.mxu0 0.0
    %2845 = vmatprep.subr.mxu0 0.0
    %2846 = vmatpush1.msra.mxu0 0.0
    %2847 = vmatprep.subr.mxu0 0.0
    %2848 = vmatpush1.msra.mxu0 0.0
    %2849 = vmatprep.subr.mxu0 0.0
    %2850 = vmatpush1.msra.mxu0 0.0
    %2851 = vmatprep.subr.mxu0 0.0
    %2852 = vmatpush1.msra.mxu0 0.0
    %2853 = vmatprep.subr.mxu0 0.0
    %2854 = vmatpush1.msra.mxu0 0.0
    %2855 = vmatprep.subr.mxu0 0.0
    %2856 = vmatpush1.msra.mxu0 0.0
    %2857 = vmatprep.subr.mxu0 0.0
    %2858 = vmatpush1.msra.mxu0 0.0
    %2859 = vmatprep.subr.mxu0 0.0
    %2860 = vmatpush1.msra.mxu0 0.0
    %2861 = vmatprep.subr.mxu0 0.0
    %2862 = vmatpush1.msra.mxu0 0.0
    %2863 = vmatprep.subr.mxu0 0.0
    %2864 = vmatpush1.msra.mxu0 0.0
    %2865 = vmatprep.subr.mxu0 0.0
    %2866 = vmatpush1.msra.mxu0 0.0
    %2867 = vmatprep.subr.mxu0 0.0
    %2868 = vmatpush1.msra.mxu0 0.0
    %2869 = vmatprep.subr.mxu0 0.0
    %2870 = vmatpush1.msra.mxu0 0.0
    %2871 = vmatprep.subr.mxu0 0.0
    %2872 = vmatpush1.msra.mxu0 0.0
    %2873 = vmatprep.subr.mxu0 0.0
    %2874 = vmatpush1.msra.mxu0 0.0
    %2875 = vmatprep.subr.mxu0 0.0
    %2876 = vmatpush1.msra.mxu0 0.0
    %2877 = vmatprep.subr.mxu0 0.0
    %2878 = vmatpush1.msra.mxu0 0.0
    %2879 = vmatprep.subr.mxu0 0.0
    %2880 = vmatpush1.msra.mxu0 0.0
    %2881 = vmatprep.subr.mxu0 0.0
    %2882 = vmatpush1.msra.mxu0 0.0
    %2883 = vmatprep.subr.mxu0 0.0
    %2884 = vmatpush1.msra.mxu0 0.0
    %2885 = vmatprep.subr.mxu0 0.0
    %2886 = vmatpush1.msra.mxu0 0.0
    %2887 = vmatprep.subr.mxu0 0.0
    %2888 = vmatpush1.msra.mxu0 0.0
    %2889 = vmatprep.subr.mxu0 0.0
    %2890 = vmatpush1.msra.mxu0 0.0
    %2891 = vmatprep.mubr.f32.mxu0 0.0
    %2892 = vmatmul.mubr.f32.gmra.mrb[0].mxu0 %v2825
    %v2893 = vpop.f32.mrb[0].mxu0
    %v2894 = vadd.f32 0.0, %v2893
    %v2895 = vpop.f32.mrb[0].mxu0
    %2896 = vdwg.mxu0
    %v2898 = vrot.slane %v2894, 4
    %v2900 = vadd.f32 %v2182, %v2898
    %v2901 = vxor.u32 %v2900, 2147483648
    %v2902 = vmul.f32 %v2901, 1.442695
    %v2903 = vpow.pop %v2902
    %v2904 = vadd.f32 %v2903, 1.0
    %v2905 = vrcp.pop %v2904
    %v2906 = vmul.f32 1.0, %v2905
    %v2907 = vtanh.pop %v2900
    %v2909 = vrot.slane %v2812, 6
    %v2911 = vmul.f32 %v2906, %v2909
    %2913 = vrot.lane.b32.xlu0 %v2907, 96
    %v2914 = vpop.permute.xlu0 %2913
    %v2916 = vmul.f32 %v2906, %v2914
    %2918 = vrot.lane.b32.xlu0 %v2916, 16
    %v2919 = vpop.permute.xlu0 %2918
    %v2921 = vadd.f32 %v2911, %v2919
    %v2922 = vtanh.pop %v2921
    %2924 = vrot.lane.b32.xlu0 %v2922, 32
    %v2925 = vpop.permute.xlu0 %2924
    %v2927 = vmul.f32 %v2906, %v2925
    %v2929 = vrot.slane %v2927, 4
    %v2931 = vmax.f32 %v2822, %v2929
    %2932 = vrot.lane.b32.xlu0 %v2929, 80
    %v2933 = vpop.permute.xlu0 %2932
    %v2934 = vsel %vm250, %v2933, 0
    %2936 = vmatprep.subr.mxu0 0.0
    %2937 = vmatpush1.msra.mxu0 %v2185
    %2938 = vmatprep.subr.mxu0 0.0
    %2939 = vmatpush1.msra.mxu0 %v2186
    %2940 = vmatprep.subr.mxu0 0.0
    %2941 = vmatpush1.msra.mxu0 0.0
    %2942 = vmatprep.subr.mxu0 0.0
    %2943 = vmatpush1.msra.mxu0 0.0
    %2944 = vmatprep.subr.mxu0 0.0
    %2945 = vmatpush1.msra.mxu0 0.0
    %2946 = vmatprep.subr.mxu0 0.0
    %2947 = vmatpush1.msra.mxu0 0.0
    %2948 = vmatprep.subr.mxu0 0.0
    %2949 = vmatpush1.msra.mxu0 0.0
    %2950 = vmatprep.subr.mxu0 0.0
    %2951 = vmatpush1.msra.mxu0 0.0
    %2952 = vmatprep.subr.mxu0 0.0
    %2953 = vmatpush1.msra.mxu0 0.0
    %2954 = vmatprep.subr.mxu0 0.0
    %2955 = vmatpush1.msra.mxu0 0.0
    %2956 = vmatprep.subr.mxu0 0.0
    %2957 = vmatpush1.msra.mxu0 0.0
    %2958 = vmatprep.subr.mxu0 0.0
    %2959 = vmatpush1.msra.mxu0 0.0
    %2960 = vmatprep.subr.mxu0 0.0
    %2961 = vmatpush1.msra.mxu0 0.0
    %2962 = vmatprep.subr.mxu0 0.0
    %2963 = vmatpush1.msra.mxu0 0.0
    %2964 = vmatprep.subr.mxu0 0.0
    %2965 = vmatpush1.msra.mxu0 0.0
    %2966 = vmatprep.subr.mxu0 0.0
    %2967 = vmatpush1.msra.mxu0 0.0
    %2968 = vmatprep.subr.mxu0 0.0
    %2969 = vmatpush1.msra.mxu0 0.0
    %2970 = vmatprep.subr.mxu0 0.0
    %2971 = vmatpush1.msra.mxu0 0.0
    %2972 = vmatprep.subr.mxu0 0.0
    %2973 = vmatpush1.msra.mxu0 0.0
    %2974 = vmatprep.subr.mxu0 0.0
    %2975 = vmatpush1.msra.mxu0 0.0
    %2976 = vmatprep.subr.mxu0 0.0
    %2977 = vmatpush1.msra.mxu0 0.0
    %2978 = vmatprep.subr.mxu0 0.0
    %2979 = vmatpush1.msra.mxu0 0.0
    %2980 = vmatprep.subr.mxu0 0.0
    %2981 = vmatpush1.msra.mxu0 0.0
    %2982 = vmatprep.subr.mxu0 0.0
    %2983 = vmatpush1.msra.mxu0 0.0
    %2984 = vmatprep.subr.mxu0 0.0
    %2985 = vmatpush1.msra.mxu0 0.0
    %2986 = vmatprep.subr.mxu0 0.0
    %2987 = vmatpush1.msra.mxu0 0.0
    %2988 = vmatprep.subr.mxu0 0.0
    %2989 = vmatpush1.msra.mxu0 0.0
    %2990 = vmatprep.subr.mxu0 0.0
    %2991 = vmatpush1.msra.mxu0 0.0
    %2992 = vmatprep.subr.mxu0 0.0
    %2993 = vmatpush1.msra.mxu0 0.0
    %2994 = vmatprep.subr.mxu0 0.0
    %2995 = vmatpush1.msra.mxu0 0.0
    %2996 = vmatprep.subr.mxu0 0.0
    %2997 = vmatpush1.msra.mxu0 0.0
    %2998 = vmatprep.subr.mxu0 0.0
    %2999 = vmatpush1.msra.mxu0 0.0
    %3000 = vmatprep.mubr.f32.mxu0 0.0
    %3001 = vmatmul.mubr.f32.gmra.mrb[0].mxu0 %v2934
    %v3002 = vpop.f32.mrb[0].mxu0
    %v3003 = vadd.f32 0.0, %v3002
    %v3004 = vpop.f32.mrb[0].mxu0
    %3005 = vdwg.mxu0
    %v3007 = vrot.slane %v3003, 2
    %v3009 = vadd.f32 %v2182, %v3007
    %v3010 = vxor.u32 %v3009, 2147483648
    %v3011 = vmul.f32 %v3010, 1.442695
    %v3012 = vpow.pop %v3011
    %v3013 = vadd.f32 %v3012, 1.0
    %v3014 = vrcp.pop %v3013
    %v3015 = vmul.f32 1.0, %v3014
    %v3016 = vtanh.pop %v3009
    %v3018 = vrot.slane %v2921, 6
    %v3020 = vmul.f32 %v3015, %v3018
    %3022 = vrot.lane.b32.xlu0 %v3016, 96
    %v3023 = vpop.permute.xlu0 %3022
    %v3025 = vmul.f32 %v3015, %v3023
    %3027 = vrot.lane.b32.xlu0 %v3025, 16
    %v3028 = vpop.permute.xlu0 %3027
    %v3030 = vadd.f32 %v3020, %v3028
    %v3031 = vtanh.pop %v3030
    %3033 = vrot.lane.b32.xlu0 %v3031, 32
    %v3034 = vpop.permute.xlu0 %3033
    %v3036 = vmul.f32 %v3015, %v3034
    %v3038 = vrot.slane %v3036, 6
    %v3040 = vmax.f32 %v2931, %v3038
    %v3041 = vld [vmem:[%s10] sm:$0xff]
    %v3042 = vld [vmem:[%s10 + $0x8] sm:$0xff]
    %v3043 = vld [vmem:[%s10 + $0x10] sm:$0xff]
    %v3044 = vld [vmem:[%s10 + $0x18] sm:$0xff]
    %v3045 = vld [vmem:[%s12] sm:$0x1]
    %v3047 = vlaneseq
    %v3048 = vshrl.u32 %v3047, 7
    %v3049 = vsub.s32 0, %v3048
    %v3050 = vrot.slane %v3045, %v3049
    %3052 = vmatprep.subr.mxu0 0.0
    %3053 = vmatpush1.msra.mxu0 %v3041
    %3054 = vmatprep.subr.mxu0 0.0
    %3055 = vmatpush1.msra.mxu0 %v3042
    %3056 = vmatprep.subr.mxu0 0.0
    %3057 = vmatpush1.msra.mxu0 %v3043
    %3058 = vmatprep.subr.mxu0 0.0
    %3059 = vmatpush1.msra.mxu0 %v3044
    %3060 = vmatprep.subr.mxu0 0.0
    %3061 = vmatpush1.msra.mxu0 0.0
    %3062 = vmatprep.subr.mxu0 0.0
    %3063 = vmatpush1.msra.mxu0 0.0
    %3064 = vmatprep.subr.mxu0 0.0
    %3065 = vmatpush1.msra.mxu0 0.0
    %3066 = vmatprep.subr.mxu0 0.0
    %3067 = vmatpush1.msra.mxu0 0.0
    %3068 = vmatprep.subr.mxu0 0.0
    %3069 = vmatpush1.msra.mxu0 0.0
    %3070 = vmatprep.subr.mxu0 0.0
    %3071 = vmatpush1.msra.mxu0 0.0
    %3072 = vmatprep.subr.mxu0 0.0
    %3073 = vmatpush1.msra.mxu0 0.0
    %3074 = vmatprep.subr.mxu0 0.0
    %3075 = vmatpush1.msra.mxu0 0.0
    %3076 = vmatprep.subr.mxu0 0.0
    %3077 = vmatpush1.msra.mxu0 0.0
    %3078 = vmatprep.subr.mxu0 0.0
    %3079 = vmatpush1.msra.mxu0 0.0
    %3080 = vmatprep.subr.mxu0 0.0
    %3081 = vmatpush1.msra.mxu0 0.0
    %3082 = vmatprep.subr.mxu0 0.0
    %3083 = vmatpush1.msra.mxu0 0.0
    %3084 = vmatprep.subr.mxu0 0.0
    %3085 = vmatpush1.msra.mxu0 0.0
    %3086 = vmatprep.subr.mxu0 0.0
    %3087 = vmatpush1.msra.mxu0 0.0
    %3088 = vmatprep.subr.mxu0 0.0
    %3089 = vmatpush1.msra.mxu0 0.0
    %3090 = vmatprep.subr.mxu0 0.0
    %3091 = vmatpush1.msra.mxu0 0.0
    %3092 = vmatprep.subr.mxu0 0.0
    %3093 = vmatpush1.msra.mxu0 0.0
    %3094 = vmatprep.subr.mxu0 0.0
    %3095 = vmatpush1.msra.mxu0 0.0
    %3096 = vmatprep.subr.mxu0 0.0
    %3097 = vmatpush1.msra.mxu0 0.0
    %3098 = vmatprep.subr.mxu0 0.0
    %3099 = vmatpush1.msra.mxu0 0.0
    %3100 = vmatprep.subr.mxu0 0.0
    %3101 = vmatpush1.msra.mxu0 0.0
    %3102 = vmatprep.subr.mxu0 0.0
    %3103 = vmatpush1.msra.mxu0 0.0
    %3104 = vmatprep.subr.mxu0 0.0
    %3105 = vmatpush1.msra.mxu0 0.0
    %3106 = vmatprep.subr.mxu0 0.0
    %3107 = vmatpush1.msra.mxu0 0.0
    %3108 = vmatprep.subr.mxu0 0.0
    %3109 = vmatpush1.msra.mxu0 0.0
    %3110 = vmatprep.subr.mxu0 0.0
    %3111 = vmatpush1.msra.mxu0 0.0
    %3112 = vmatprep.subr.mxu0 0.0
    %3113 = vmatpush1.msra.mxu0 0.0
    %3114 = vmatprep.subr.mxu0 0.0
    %3115 = vmatpush1.msra.mxu0 0.0
    %3116 = vmatprep.mubr.f32.mxu0 0.0
    %3117 = vmatmul.mubr.f32.gmra.mrb[0].mxu0 %v2105
    %v3118 = vpop.f32.mrb[0].mxu0
    %v3119 = vadd.f32 %v3050, %v3118
    %v3120 = vpop.f32.mrb[0].mxu0
    %3121 = vmatprep.mubr.f32.mxu0 0.0
    %3122 = vmatmul.mubr.f32.gmra.mrb[0].mxu0 %v2108
    %v3123 = vpop.f32.mrb[0].mxu0
    %v3124 = vadd.f32 %v3050, %v3123
    %v3125 = vpop.f32.mrb[0].mxu0
    %3126 = vdwg.mxu0
    %v3127 = vld [vmem:[#allocation12] sm:$0xff]
    %v3128 = vld [vmem:[#allocation12 + $0x8] sm:$0xff]
    %3129 = vmatprep.subr.mxu0 0.0
    %3130 = vmatpush1.msra.mxu0 %v3127
    %3131 = vmatprep.subr.mxu0 0.0
    %3132 = vmatpush1.msra.mxu0 %v3128
    %3133 = vmatprep.subr.mxu0 0.0
    %3134 = vmatpush1.msra.mxu0 0.0
    %3135 = vmatprep.subr.mxu0 0.0
    %3136 = vmatpush1.msra.mxu0 0.0
    %3137 = vmatprep.subr.mxu0 0.0
    %3138 = vmatpush1.msra.mxu0 0.0
    %3139 = vmatprep.subr.mxu0 0.0
    %3140 = vmatpush1.msra.mxu0 0.0
    %3141 = vmatprep.subr.mxu0 0.0
    %3142 = vmatpush1.msra.mxu0 0.0
    %3143 = vmatprep.subr.mxu0 0.0
    %3144 = vmatpush1.msra.mxu0 0.0
    %3145 = vmatprep.subr.mxu0 0.0
    %3146 = vmatpush1.msra.mxu0 0.0
    %3147 = vmatprep.subr.mxu0 0.0
    %3148 = vmatpush1.msra.mxu0 0.0
    %3149 = vmatprep.subr.mxu0 0.0
    %3150 = vmatpush1.msra.mxu0 0.0
    %3151 = vmatprep.subr.mxu0 0.0
    %3152 = vmatpush1.msra.mxu0 0.0
    %3153 = vmatprep.subr.mxu0 0.0
    %3154 = vmatpush1.msra.mxu0 0.0
    %3155 = vmatprep.subr.mxu0 0.0
    %3156 = vmatpush1.msra.mxu0 0.0
    %3157 = vmatprep.subr.mxu0 0.0
    %3158 = vmatpush1.msra.mxu0 0.0
    %3159 = vmatprep.subr.mxu0 0.0
    %3160 = vmatpush1.msra.mxu0 0.0
    %3161 = vmatprep.subr.mxu0 0.0
    %3162 = vmatpush1.msra.mxu0 0.0
    %3163 = vmatprep.subr.mxu0 0.0
    %3164 = vmatpush1.msra.mxu0 0.0
    %3165 = vmatprep.subr.mxu0 0.0
    %3166 = vmatpush1.msra.mxu0 0.0
    %3167 = vmatprep.subr.mxu0 0.0
    %3168 = vmatpush1.msra.mxu0 0.0
    %3169 = vmatprep.subr.mxu0 0.0
    %3170 = vmatpush1.msra.mxu0 0.0
    %3171 = vmatprep.subr.mxu0 0.0
    %3172 = vmatpush1.msra.mxu0 0.0
    %3173 = vmatprep.subr.mxu0 0.0
    %3174 = vmatpush1.msra.mxu0 0.0
    %3175 = vmatprep.subr.mxu0 0.0
    %3176 = vmatpush1.msra.mxu0 0.0
    %3177 = vmatprep.subr.mxu0 0.0
    %3178 = vmatpush1.msra.mxu0 0.0
    %3179 = vmatprep.subr.mxu0 0.0
    %3180 = vmatpush1.msra.mxu0 0.0
    %3181 = vmatprep.subr.mxu0 0.0
    %3182 = vmatpush1.msra.mxu0 0.0
    %3183 = vmatprep.subr.mxu0 0.0
    %3184 = vmatpush1.msra.mxu0 0.0
    %3185 = vmatprep.subr.mxu0 0.0
    %3186 = vmatpush1.msra.mxu0 0.0
    %3187 = vmatprep.subr.mxu0 0.0
    %3188 = vmatpush1.msra.mxu0 0.0
    %3189 = vmatprep.subr.mxu0 0.0
    %3190 = vmatpush1.msra.mxu0 0.0
    %3191 = vmatprep.subr.mxu0 0.0
    %3192 = vmatpush1.msra.mxu0 0.0
    %3193 = vmatprep.mubr.f32.mxu0 0.0
    %3194 = vmatmul.mubr.f32.gmra.mrb[0].mxu0 %v252
    %v3195 = vpop.f32.mrb[0].mxu0
    %v3196 = vadd.f32 0.0, %v3195
    %v3197 = vpop.f32.mrb[0].mxu0
    %3198 = vdwg.mxu0
    %v3200 = vrot.slane %v3196, 2
    %v3202 = vadd.f32 %v3124, %v3200
    %v3203 = vxor.u32 %v3202, 2147483648
    %v3204 = vmul.f32 %v3203, 1.442695
    %v3205 = vpow.pop %v3204
    %v3206 = vadd.f32 %v3205, 1.0
    %v3207 = vrcp.pop %v3206
    %v3208 = vmul.f32 1.0, %v3207
    %v3209 = vtanh.pop %v3202
    %v3210 = vmul.f32 %v3208, 0.0
    %3212 = vrot.lane.b32.xlu0 %v3209, 96
    %v3213 = vpop.permute.xlu0 %3212
    %v3215 = vmul.f32 %v3208, %v3213
    %3217 = vrot.lane.b32.xlu0 %v3215, 16
    %v3218 = vpop.permute.xlu0 %3217
    %v3220 = vadd.f32 %v3210, %v3218
    %v3221 = vtanh.pop %v3220
    %3223 = vrot.lane.b32.xlu0 %v3221, 32
    %v3224 = vpop.permute.xlu0 %3223
    %v3226 = vmul.f32 %v3208, %v3224
    %v3228 = vrot.slane %v3226, 6
    %3229 = vrot.lane.b32.xlu0 %v3228, 80
    %v3230 = vpop.permute.xlu0 %3229
    %v3231 = vsel %vm250, %v3230, 0
    %3233 = vmatprep.subr.mxu0 0.0
    %3234 = vmatpush1.msra.mxu0 %v3127
    %3235 = vmatprep.subr.mxu0 0.0
    %3236 = vmatpush1.msra.mxu0 %v3128
    %3237 = vmatprep.subr.mxu0 0.0
    %3238 = vmatpush1.msra.mxu0 0.0
    %3239 = vmatprep.subr.mxu0 0.0
    %3240 = vmatpush1.msra.mxu0 0.0
    %3241 = vmatprep.subr.mxu0 0.0
    %3242 = vmatpush1.msra.mxu0 0.0
    %3243 = vmatprep.subr.mxu0 0.0
    %3244 = vmatpush1.msra.mxu0 0.0
    %3245 = vmatprep.subr.mxu0 0.0
    %3246 = vmatpush1.msra.mxu0 0.0
    %3247 = vmatprep.subr.mxu0 0.0
    %3248 = vmatpush1.msra.mxu0 0.0
    %3249 = vmatprep.subr.mxu0 0.0
    %3250 = vmatpush1.msra.mxu0 0.0
    %3251 = vmatprep.subr.mxu0 0.0
    %3252 = vmatpush1.msra.mxu0 0.0
    %3253 = vmatprep.subr.mxu0 0.0
    %3254 = vmatpush1.msra.mxu0 0.0
    %3255 = vmatprep.subr.mxu0 0.0
    %3256 = vmatpush1.msra.mxu0 0.0
    %3257 = vmatprep.subr.mxu0 0.0
    %3258 = vmatpush1.msra.mxu0 0.0
    %3259 = vmatprep.subr.mxu0 0.0
    %3260 = vmatpush1.msra.mxu0 0.0
    %3261 = vmatprep.subr.mxu0 0.0
    %3262 = vmatpush1.msra.mxu0 0.0
    %3263 = vmatprep.subr.mxu0 0.0
    %3264 = vmatpush1.msra.mxu0 0.0
    %3265 = vmatprep.subr.mxu0 0.0
    %3266 = vmatpush1.msra.mxu0 0.0
    %3267 = vmatprep.subr.mxu0 0.0
    %3268 = vmatpush1.msra.mxu0 0.0
    %3269 = vmatprep.subr.mxu0 0.0
    %3270 = vmatpush1.msra.mxu0 0.0
    %3271 = vmatprep.subr.mxu0 0.0
    %3272 = vmatpush1.msra.mxu0 0.0
    %3273 = vmatprep.subr.mxu0 0.0
    %3274 = vmatpush1.msra.mxu0 0.0
    %3275 = vmatprep.subr.mxu0 0.0
    %3276 = vmatpush1.msra.mxu0 0.0
    %3277 = vmatprep.subr.mxu0 0.0
    %3278 = vmatpush1.msra.mxu0 0.0
    %3279 = vmatprep.subr.mxu0 0.0
    %3280 = vmatpush1.msra.mxu0 0.0
    %3281 = vmatprep.subr.mxu0 0.0
    %3282 = vmatpush1.msra.mxu0 0.0
    %3283 = vmatprep.subr.mxu0 0.0
    %3284 = vmatpush1.msra.mxu0 0.0
    %3285 = vmatprep.subr.mxu0 0.0
    %3286 = vmatpush1.msra.mxu0 0.0
    %3287 = vmatprep.subr.mxu0 0.0
    %3288 = vmatpush1.msra.mxu0 0.0
    %3289 = vmatprep.subr.mxu0 0.0
    %3290 = vmatpush1.msra.mxu0 0.0
    %3291 = vmatprep.subr.mxu0 0.0
    %3292 = vmatpush1.msra.mxu0 0.0
    %3293 = vmatprep.subr.mxu0 0.0
    %3294 = vmatpush1.msra.mxu0 0.0
    %3295 = vmatprep.subr.mxu0 0.0
    %3296 = vmatpush1.msra.mxu0 0.0
    %3297 = vmatprep.mubr.f32.mxu0 0.0
    %3298 = vmatmul.mubr.f32.gmra.mrb[0].mxu0 %v3231
    %v3299 = vpop.f32.mrb[0].mxu0
    %v3300 = vadd.f32 0.0, %v3299
    %v3301 = vpop.f32.mrb[0].mxu0
    %3302 = vdwg.mxu0
    %v3304 = vrot.slane %v3300, 4
    %v3306 = vadd.f32 %v3124, %v3304
    %v3307 = vxor.u32 %v3306, 2147483648
    %v3308 = vmul.f32 %v3307, 1.442695
    %v3309 = vpow.pop %v3308
    %v3310 = vadd.f32 %v3309, 1.0
    %v3311 = vrcp.pop %v3310
    %v3312 = vmul.f32 1.0, %v3311
    %v3313 = vtanh.pop %v3306
    %v3315 = vrot.slane %v3220, 2
    %v3317 = vmul.f32 %v3312, %v3315
    %3319 = vrot.lane.b32.xlu0 %v3313, 96
    %v3320 = vpop.permute.xlu0 %3319
    %v3322 = vmul.f32 %v3312, %v3320
    %3324 = vrot.lane.b32.xlu0 %v3322, 16
    %v3325 = vpop.permute.xlu0 %3324
    %v3327 = vadd.f32 %v3317, %v3325
    %v3328 = vtanh.pop %v3327
    %3330 = vrot.lane.b32.xlu0 %v3328, 32
    %v3331 = vpop.permute.xlu0 %3330
    %v3333 = vmul.f32 %v3312, %v3331
    %v3335 = vrot.slane %v3333, 6
    %v3337 = vmax.f32 %v3226, %v3335
    %v3338 = vrot.slane %v3333, 4
    %3339 = vrot.lane.b32.xlu0 %v3338, 80
    %v3340 = vpop.permute.xlu0 %3339
    %v3341 = vsel %vm250, %v3340, 0
    %3343 = vmatprep.subr.mxu0 0.0
    %3344 = vmatpush1.msra.mxu0 %v3127
    %3345 = vmatprep.subr.mxu0 0.0
    %3346 = vmatpush1.msra.mxu0 %v3128
    %3347 = vmatprep.subr.mxu0 0.0
    %3348 = vmatpush1.msra.mxu0 0.0
    %3349 = vmatprep.subr.mxu0 0.0
    %3350 = vmatpush1.msra.mxu0 0.0
    %3351 = vmatprep.subr.mxu0 0.0
    %3352 = vmatpush1.msra.mxu0 0.0
    %3353 = vmatprep.subr.mxu0 0.0
    %3354 = vmatpush1.msra.mxu0 0.0
    %3355 = vmatprep.subr.mxu0 0.0
    %3356 = vmatpush1.msra.mxu0 0.0
    %3357 = vmatprep.subr.mxu0 0.0
    %3358 = vmatpush1.msra.mxu0 0.0
    %3359 = vmatprep.subr.mxu0 0.0
    %3360 = vmatpush1.msra.mxu0 0.0
    %3361 = vmatprep.subr.mxu0 0.0
    %3362 = vmatpush1.msra.mxu0 0.0
    %3363 = vmatprep.subr.mxu0 0.0
    %3364 = vmatpush1.msra.mxu0 0.0
    %3365 = vmatprep.subr.mxu0 0.0
    %3366 = vmatpush1.msra.mxu0 0.0
    %3367 = vmatprep.subr.mxu0 0.0
    %3368 = vmatpush1.msra.mxu0 0.0
    %3369 = vmatprep.subr.mxu0 0.0
    %3370 = vmatpush1.msra.mxu0 0.0
    %3371 = vmatprep.subr.mxu0 0.0
    %3372 = vmatpush1.msra.mxu0 0.0
    %3373 = vmatprep.subr.mxu0 0.0
    %3374 = vmatpush1.msra.mxu0 0.0
    %3375 = vmatprep.subr.mxu0 0.0
    %3376 = vmatpush1.msra.mxu0 0.0
    %3377 = vmatprep.subr.mxu0 0.0
    %3378 = vmatpush1.msra.mxu0 0.0
    %3379 = vmatprep.subr.mxu0 0.0
    %3380 = vmatpush1.msra.mxu0 0.0
    %3381 = vmatprep.subr.mxu0 0.0
    %3382 = vmatpush1.msra.mxu0 0.0
    %3383 = vmatprep.subr.mxu0 0.0
    %3384 = vmatpush1.msra.mxu0 0.0
    %3385 = vmatprep.subr.mxu0 0.0
    %3386 = vmatpush1.msra.mxu0 0.0
    %3387 = vmatprep.subr.mxu0 0.0
    %3388 = vmatpush1.msra.mxu0 0.0
    %3389 = vmatprep.subr.mxu0 0.0
    %3390 = vmatpush1.msra.mxu0 0.0
    %3391 = vmatprep.subr.mxu0 0.0
    %3392 = vmatpush1.msra.mxu0 0.0
    %3393 = vmatprep.subr.mxu0 0.0
    %3394 = vmatpush1.msra.mxu0 0.0
    %3395 = vmatprep.subr.mxu0 0.0
    %3396 = vmatpush1.msra.mxu0 0.0
    %3397 = vmatprep.subr.mxu0 0.0
    %3398 = vmatpush1.msra.mxu0 0.0
    %3399 = vmatprep.subr.mxu0 0.0
    %3400 = vmatpush1.msra.mxu0 0.0
    %3401 = vmatprep.subr.mxu0 0.0
    %3402 = vmatpush1.msra.mxu0 0.0
    %3403 = vmatprep.subr.mxu0 0.0
    %3404 = vmatpush1.msra.mxu0 0.0
    %3405 = vmatprep.subr.mxu0 0.0
    %3406 = vmatpush1.msra.mxu0 0.0
    %3407 = vmatprep.mubr.f32.mxu0 0.0
    %3408 = vmatmul.mubr.f32.gmra.mrb[0].mxu0 %v3341
    %v3409 = vpop.f32.mrb[0].mxu0
    %v3410 = vadd.f32 0.0, %v3409
    %v3411 = vpop.f32.mrb[0].mxu0
    %3412 = vdwg.mxu0
    %v3414 = vrot.slane %v3410, 6
    %v3416 = vadd.f32 %v3124, %v3414
    %v3417 = vxor.u32 %v3416, 2147483648
    %v3418 = vmul.f32 %v3417, 1.442695
    %v3419 = vpow.pop %v3418
    %v3420 = vadd.f32 %v3419, 1.0
    %v3421 = vrcp.pop %v3420
    %v3422 = vmul.f32 1.0, %v3421
    %v3423 = vtanh.pop %v3416
    %v3425 = vrot.slane %v3327, 2
    %v3427 = vmul.f32 %v3422, %v3425
    %3429 = vrot.lane.b32.xlu0 %v3423, 96
    %v3430 = vpop.permute.xlu0 %3429
    %v3432 = vmul.f32 %v3422, %v3430
    %3434 = vrot.lane.b32.xlu0 %v3432, 16
    %v3435 = vpop.permute.xlu0 %3434
    %v3437 = vadd.f32 %v3427, %v3435
    %v3438 = vtanh.pop %v3437
    %3440 = vrot.lane.b32.xlu0 %v3438, 32
    %v3441 = vpop.permute.xlu0 %3440
    %v3443 = vmul.f32 %v3422, %v3441
    %v3445 = vrot.slane %v3443, 4
    %v3447 = vmax.f32 %v3337, %v3445
    %v3448 = vrot.slane %v3443, 2
    %3449 = vrot.lane.b32.xlu0 %v3448, 80
    %v3450 = vpop.permute.xlu0 %3449
    %v3451 = vsel %vm250, %v3450, 0
    %3453 = vmatprep.subr.mxu0 0.0
    %3454 = vmatpush1.msra.mxu0 %v3127
    %3455 = vmatprep.subr.mxu0 0.0
    %3456 = vmatpush1.msra.mxu0 %v3128
    %3457 = vmatprep.subr.mxu0 0.0
    %3458 = vmatpush1.msra.mxu0 0.0
    %3459 = vmatprep.subr.mxu0 0.0
    %3460 = vmatpush1.msra.mxu0 0.0
    %3461 = vmatprep.subr.mxu0 0.0
    %3462 = vmatpush1.msra.mxu0 0.0
    %3463 = vmatprep.subr.mxu0 0.0
    %3464 = vmatpush1.msra.mxu0 0.0
    %3465 = vmatprep.subr.mxu0 0.0
    %3466 = vmatpush1.msra.mxu0 0.0
    %3467 = vmatprep.subr.mxu0 0.0
    %3468 = vmatpush1.msra.mxu0 0.0
    %3469 = vmatprep.subr.mxu0 0.0
    %3470 = vmatpush1.msra.mxu0 0.0
    %3471 = vmatprep.subr.mxu0 0.0
    %3472 = vmatpush1.msra.mxu0 0.0
    %3473 = vmatprep.subr.mxu0 0.0
    %3474 = vmatpush1.msra.mxu0 0.0
    %3475 = vmatprep.subr.mxu0 0.0
    %3476 = vmatpush1.msra.mxu0 0.0
    %3477 = vmatprep.subr.mxu0 0.0
    %3478 = vmatpush1.msra.mxu0 0.0
    %3479 = vmatprep.subr.mxu0 0.0
    %3480 = vmatpush1.msra.mxu0 0.0
    %3481 = vmatprep.subr.mxu0 0.0
    %3482 = vmatpush1.msra.mxu0 0.0
    %3483 = vmatprep.subr.mxu0 0.0
    %3484 = vmatpush1.msra.mxu0 0.0
    %3485 = vmatprep.subr.mxu0 0.0
    %3486 = vmatpush1.msra.mxu0 0.0
    %3487 = vmatprep.subr.mxu0 0.0
    %3488 = vmatpush1.msra.mxu0 0.0
    %3489 = vmatprep.subr.mxu0 0.0
    %3490 = vmatpush1.msra.mxu0 0.0
    %3491 = vmatprep.subr.mxu0 0.0
    %3492 = vmatpush1.msra.mxu0 0.0
    %3493 = vmatprep.subr.mxu0 0.0
    %3494 = vmatpush1.msra.mxu0 0.0
    %3495 = vmatprep.subr.mxu0 0.0
    %3496 = vmatpush1.msra.mxu0 0.0
    %3497 = vmatprep.subr.mxu0 0.0
    %3498 = vmatpush1.msra.mxu0 0.0
    %3499 = vmatprep.subr.mxu0 0.0
    %3500 = vmatpush1.msra.mxu0 0.0
    %3501 = vmatprep.subr.mxu0 0.0
    %3502 = vmatpush1.msra.mxu0 0.0
    %3503 = vmatprep.subr.mxu0 0.0
    %3504 = vmatpush1.msra.mxu0 0.0
    %3505 = vmatprep.subr.mxu0 0.0
    %3506 = vmatpush1.msra.mxu0 0.0
    %3507 = vmatprep.subr.mxu0 0.0
    %3508 = vmatpush1.msra.mxu0 0.0
    %3509 = vmatprep.subr.mxu0 0.0
    %3510 = vmatpush1.msra.mxu0 0.0
    %3511 = vmatprep.subr.mxu0 0.0
    %3512 = vmatpush1.msra.mxu0 0.0
    %3513 = vmatprep.subr.mxu0 0.0
    %3514 = vmatpush1.msra.mxu0 0.0
    %3515 = vmatprep.subr.mxu0 0.0
    %3516 = vmatpush1.msra.mxu0 0.0
    %3517 = vmatprep.mubr.f32.mxu0 0.0
    %3518 = vmatmul.mubr.f32.gmra.mrb[0].mxu0 %v3451
    %v3519 = vpop.f32.mrb[0].mxu0
    %v3520 = vadd.f32 0.0, %v3519
    %v3521 = vpop.f32.mrb[0].mxu0
    %3522 = vdwg.mxu0
    %v3523 = vadd.f32 %v3124, %v3520
    %v3524 = vxor.u32 %v3523, 2147483648
    %v3525 = vmul.f32 %v3524, 1.442695
    %v3526 = vpow.pop %v3525
    %v3527 = vadd.f32 %v3526, 1.0
    %v3528 = vrcp.pop %v3527
    %v3529 = vmul.f32 1.0, %v3528
    %v3530 = vtanh.pop %v3523
    %v3532 = vrot.slane %v3437, 2
    %v3534 = vmul.f32 %v3529, %v3532
    %3536 = vrot.lane.b32.xlu0 %v3530, 96
    %v3537 = vpop.permute.xlu0 %3536
    %v3539 = vmul.f32 %v3529, %v3537
    %3541 = vrot.lane.b32.xlu0 %v3539, 16
    %v3542 = vpop.permute.xlu0 %3541
    %v3544 = vadd.f32 %v3534, %v3542
    %v3545 = vtanh.pop %v3544
    %3547 = vrot.lane.b32.xlu0 %v3545, 32
    %v3548 = vpop.permute.xlu0 %3547
    %v3550 = vmul.f32 %v3529, %v3548
    %v3552 = vrot.slane %v3550, 2
    %v3554 = vmax.f32 %v3447, %v3552
    %3555 = vrot.lane.b32.xlu0 %v3550, 80
    %v3556 = vpop.permute.xlu0 %3555
    %v3557 = vsel %vm250, %v3556, 0
    %3559 = vmatprep.subr.mxu0 0.0
    %3560 = vmatpush1.msra.mxu0 %v3127
    %3561 = vmatprep.subr.mxu0 0.0
    %3562 = vmatpush1.msra.mxu0 %v3128
    %3563 = vmatprep.subr.mxu0 0.0
    %3564 = vmatpush1.msra.mxu0 0.0
    %3565 = vmatprep.subr.mxu0 0.0
    %3566 = vmatpush1.msra.mxu0 0.0
    %3567 = vmatprep.subr.mxu0 0.0
    %3568 = vmatpush1.msra.mxu0 0.0
    %3569 = vmatprep.subr.mxu0 0.0
    %3570 = vmatpush1.msra.mxu0 0.0
    %3571 = vmatprep.subr.mxu0 0.0
    %3572 = vmatpush1.msra.mxu0 0.0
    %3573 = vmatprep.subr.mxu0 0.0
    %3574 = vmatpush1.msra.mxu0 0.0
    %3575 = vmatprep.subr.mxu0 0.0
    %3576 = vmatpush1.msra.mxu0 0.0
    %3577 = vmatprep.subr.mxu0 0.0
    %3578 = vmatpush1.msra.mxu0 0.0
    %3579 = vmatprep.subr.mxu0 0.0
    %3580 = vmatpush1.msra.mxu0 0.0
    %3581 = vmatprep.subr.mxu0 0.0
    %3582 = vmatpush1.msra.mxu0 0.0
    %3583 = vmatprep.subr.mxu0 0.0
    %3584 = vmatpush1.msra.mxu0 0.0
    %3585 = vmatprep.subr.mxu0 0.0
    %3586 = vmatpush1.msra.mxu0 0.0
    %3587 = vmatprep.subr.mxu0 0.0
    %3588 = vmatpush1.msra.mxu0 0.0
    %3589 = vmatprep.subr.mxu0 0.0
    %3590 = vmatpush1.msra.mxu0 0.0
    %3591 = vmatprep.subr.mxu0 0.0
    %3592 = vmatpush1.msra.mxu0 0.0
    %3593 = vmatprep.subr.mxu0 0.0
    %3594 = vmatpush1.msra.mxu0 0.0
    %3595 = vmatprep.subr.mxu0 0.0
    %3596 = vmatpush1.msra.mxu0 0.0
    %3597 = vmatprep.subr.mxu0 0.0
    %3598 = vmatpush1.msra.mxu0 0.0
    %3599 = vmatprep.subr.mxu0 0.0
    %3600 = vmatpush1.msra.mxu0 0.0
    %3601 = vmatprep.subr.mxu0 0.0
    %3602 = vmatpush1.msra.mxu0 0.0
    %3603 = vmatprep.subr.mxu0 0.0
    %3604 = vmatpush1.msra.mxu0 0.0
    %3605 = vmatprep.subr.mxu0 0.0
    %3606 = vmatpush1.msra.mxu0 0.0
    %3607 = vmatprep.subr.mxu0 0.0
    %3608 = vmatpush1.msra.mxu0 0.0
    %3609 = vmatprep.subr.mxu0 0.0
    %3610 = vmatpush1.msra.mxu0 0.0
    %3611 = vmatprep.subr.mxu0 0.0
    %3612 = vmatpush1.msra.mxu0 0.0
    %3613 = vmatprep.subr.mxu0 0.0
    %3614 = vmatpush1.msra.mxu0 0.0
    %3615 = vmatprep.subr.mxu0 0.0
    %3616 = vmatpush1.msra.mxu0 0.0
    %3617 = vmatprep.subr.mxu0 0.0
    %3618 = vmatpush1.msra.mxu0 0.0
    %3619 = vmatprep.subr.mxu0 0.0
    %3620 = vmatpush1.msra.mxu0 0.0
    %3621 = vmatprep.subr.mxu0 0.0
    %3622 = vmatpush1.msra.mxu0 0.0
    %3623 = vmatprep.mubr.f32.mxu0 0.0
    %3624 = vmatmul.mubr.f32.gmra.mrb[0].mxu0 %v3557
    %v3625 = vpop.f32.mrb[0].mxu0
    %v3626 = vadd.f32 0.0, %v3625
    %v3627 = vpop.f32.mrb[0].mxu0
    %3628 = vdwg.mxu0
    %v3630 = vrot.slane %v3626, 2
    %v3632 = vadd.f32 %v3119, %v3630
    %v3633 = vxor.u32 %v3632, 2147483648
    %v3634 = vmul.f32 %v3633, 1.442695
    %v3635 = vpow.pop %v3634
    %v3636 = vadd.f32 %v3635, 1.0
    %v3637 = vrcp.pop %v3636
    %v3638 = vmul.f32 1.0, %v3637
    %v3639 = vtanh.pop %v3632
    %v3641 = vrot.slane %v3544, 2
    %v3643 = vmul.f32 %v3638, %v3641
    %3645 = vrot.lane.b32.xlu0 %v3639, 96
    %v3646 = vpop.permute.xlu0 %3645
    %v3648 = vmul.f32 %v3638, %v3646
    %3650 = vrot.lane.b32.xlu0 %v3648, 16
    %v3651 = vpop.permute.xlu0 %3650
    %v3653 = vadd.f32 %v3643, %v3651
    %v3654 = vtanh.pop %v3653
    %3656 = vrot.lane.b32.xlu0 %v3654, 32
    %v3657 = vpop.permute.xlu0 %3656
    %v3659 = vmul.f32 %v3638, %v3657
    %v3660 = vmax.f32 %v3554, %v3659
    %v3662 = vrot.slane %v3659, 6
    %3663 = vrot.lane.b32.xlu0 %v3662, 80
    %v3664 = vpop.permute.xlu0 %3663
    %v3665 = vsel %vm250, %v3664, 0
    %3667 = vmatprep.subr.mxu0 0.0
    %3668 = vmatpush1.msra.mxu0 %v3127
    %3669 = vmatprep.subr.mxu0 0.0
    %3670 = vmatpush1.msra.mxu0 %v3128
    %3671 = vmatprep.subr.mxu0 0.0
    %3672 = vmatpush1.msra.mxu0 0.0
    %3673 = vmatprep.subr.mxu0 0.0
    %3674 = vmatpush1.msra.mxu0 0.0
    %3675 = vmatprep.subr.mxu0 0.0
    %3676 = vmatpush1.msra.mxu0 0.0
    %3677 = vmatprep.subr.mxu0 0.0
    %3678 = vmatpush1.msra.mxu0 0.0
    %3679 = vmatprep.subr.mxu0 0.0
    %3680 = vmatpush1.msra.mxu0 0.0
    %3681 = vmatprep.subr.mxu0 0.0
    %3682 = vmatpush1.msra.mxu0 0.0
    %3683 = vmatprep.subr.mxu0 0.0
    %3684 = vmatpush1.msra.mxu0 0.0
    %3685 = vmatprep.subr.mxu0 0.0
    %3686 = vmatpush1.msra.mxu0 0.0
    %3687 = vmatprep.subr.mxu0 0.0
    %3688 = vmatpush1.msra.mxu0 0.0
    %3689 = vmatprep.subr.mxu0 0.0
    %3690 = vmatpush1.msra.mxu0 0.0
    %3691 = vmatprep.subr.mxu0 0.0
    %3692 = vmatpush1.msra.mxu0 0.0
    %3693 = vmatprep.subr.mxu0 0.0
    %3694 = vmatpush1.msra.mxu0 0.0
    %3695 = vmatprep.subr.mxu0 0.0
    %3696 = vmatpush1.msra.mxu0 0.0
    %3697 = vmatprep.subr.mxu0 0.0
    %3698 = vmatpush1.msra.mxu0 0.0
    %3699 = vmatprep.subr.mxu0 0.0
    %3700 = vmatpush1.msra.mxu0 0.0
    %3701 = vmatprep.subr.mxu0 0.0
    %3702 = vmatpush1.msra.mxu0 0.0
    %3703 = vmatprep.subr.mxu0 0.0
    %3704 = vmatpush1.msra.mxu0 0.0
    %3705 = vmatprep.subr.mxu0 0.0
    %3706 = vmatpush1.msra.mxu0 0.0
    %3707 = vmatprep.subr.mxu0 0.0
    %3708 = vmatpush1.msra.mxu0 0.0
    %3709 = vmatprep.subr.mxu0 0.0
    %3710 = vmatpush1.msra.mxu0 0.0
    %3711 = vmatprep.subr.mxu0 0.0
    %3712 = vmatpush1.msra.mxu0 0.0
    %3713 = vmatprep.subr.mxu0 0.0
    %3714 = vmatpush1.msra.mxu0 0.0
    %3715 = vmatprep.subr.mxu0 0.0
    %3716 = vmatpush1.msra.mxu0 0.0
    %3717 = vmatprep.subr.mxu0 0.0
    %3718 = vmatpush1.msra.mxu0 0.0
    %3719 = vmatprep.subr.mxu0 0.0
    %3720 = vmatpush1.msra.mxu0 0.0
    %3721 = vmatprep.subr.mxu0 0.0
    %3722 = vmatpush1.msra.mxu0 0.0
    %3723 = vmatprep.subr.mxu0 0.0
    %3724 = vmatpush1.msra.mxu0 0.0
    %3725 = vmatprep.subr.mxu0 0.0
    %3726 = vmatpush1.msra.mxu0 0.0
    %3727 = vmatprep.subr.mxu0 0.0
    %3728 = vmatpush1.msra.mxu0 0.0
    %3729 = vmatprep.subr.mxu0 0.0
    %3730 = vmatpush1.msra.mxu0 0.0
    %3731 = vmatprep.mubr.f32.mxu0 0.0
    %3732 = vmatmul.mubr.f32.gmra.mrb[0].mxu0 %v3665
    %v3733 = vpop.f32.mrb[0].mxu0
    %v3734 = vadd.f32 0.0, %v3733
    %v3735 = vpop.f32.mrb[0].mxu0
    %3736 = vdwg.mxu0
    %v3738 = vrot.slane %v3734, 4
    %v3740 = vadd.f32 %v3119, %v3738
    %v3741 = vxor.u32 %v3740, 2147483648
    %v3742 = vmul.f32 %v3741, 1.442695
    %v3743 = vpow.pop %v3742
    %v3744 = vadd.f32 %v3743, 1.0
    %v3745 = vrcp.pop %v3744
    %v3746 = vmul.f32 1.0, %v3745
    %v3747 = vtanh.pop %v3740
    %v3749 = vrot.slane %v3653, 2
    %v3751 = vmul.f32 %v3746, %v3749
    %3753 = vrot.lane.b32.xlu0 %v3747, 96
    %v3754 = vpop.permute.xlu0 %3753
    %v3756 = vmul.f32 %v3746, %v3754
    %3758 = vrot.lane.b32.xlu0 %v3756, 16
    %v3759 = vpop.permute.xlu0 %3758
    %v3761 = vadd.f32 %v3751, %v3759
    %v3762 = vtanh.pop %v3761
    %3764 = vrot.lane.b32.xlu0 %v3762, 32
    %v3765 = vpop.permute.xlu0 %3764
    %v3767 = vmul.f32 %v3746, %v3765
    %v3769 = vrot.slane %v3767, 6
    %v3771 = vmax.f32 %v3660, %v3769
    %v3772 = vrot.slane %v3767, 4
    %3773 = vrot.lane.b32.xlu0 %v3772, 80
    %v3774 = vpop.permute.xlu0 %3773
    %v3775 = vsel %vm250, %v3774, 0
    %3777 = vmatprep.subr.mxu0 0.0
    %3778 = vmatpush1.msra.mxu0 %v3127
    %3779 = vmatprep.subr.mxu0 0.0
    %3780 = vmatpush1.msra.mxu0 %v3128
    %3781 = vmatprep.subr.mxu0 0.0
    %3782 = vmatpush1.msra.mxu0 0.0
    %3783 = vmatprep.subr.mxu0 0.0
    %3784 = vmatpush1.msra.mxu0 0.0
    %3785 = vmatprep.subr.mxu0 0.0
    %3786 = vmatpush1.msra.mxu0 0.0
    %3787 = vmatprep.subr.mxu0 0.0
    %3788 = vmatpush1.msra.mxu0 0.0
    %3789 = vmatprep.subr.mxu0 0.0
    %3790 = vmatpush1.msra.mxu0 0.0
    %3791 = vmatprep.subr.mxu0 0.0
    %3792 = vmatpush1.msra.mxu0 0.0
    %3793 = vmatprep.subr.mxu0 0.0
    %3794 = vmatpush1.msra.mxu0 0.0
    %3795 = vmatprep.subr.mxu0 0.0
    %3796 = vmatpush1.msra.mxu0 0.0
    %3797 = vmatprep.subr.mxu0 0.0
    %3798 = vmatpush1.msra.mxu0 0.0
    %3799 = vmatprep.subr.mxu0 0.0
    %3800 = vmatpush1.msra.mxu0 0.0
    %3801 = vmatprep.subr.mxu0 0.0
    %3802 = vmatpush1.msra.mxu0 0.0
    %3803 = vmatprep.subr.mxu0 0.0
    %3804 = vmatpush1.msra.mxu0 0.0
    %3805 = vmatprep.subr.mxu0 0.0
    %3806 = vmatpush1.msra.mxu0 0.0
    %3807 = vmatprep.subr.mxu0 0.0
    %3808 = vmatpush1.msra.mxu0 0.0
    %3809 = vmatprep.subr.mxu0 0.0
    %3810 = vmatpush1.msra.mxu0 0.0
    %3811 = vmatprep.subr.mxu0 0.0
    %3812 = vmatpush1.msra.mxu0 0.0
    %3813 = vmatprep.subr.mxu0 0.0
    %3814 = vmatpush1.msra.mxu0 0.0
    %3815 = vmatprep.subr.mxu0 0.0
    %3816 = vmatpush1.msra.mxu0 0.0
    %3817 = vmatprep.subr.mxu0 0.0
    %3818 = vmatpush1.msra.mxu0 0.0
    %3819 = vmatprep.subr.mxu0 0.0
    %3820 = vmatpush1.msra.mxu0 0.0
    %3821 = vmatprep.subr.mxu0 0.0
    %3822 = vmatpush1.msra.mxu0 0.0
    %3823 = vmatprep.subr.mxu0 0.0
    %3824 = vmatpush1.msra.mxu0 0.0
    %3825 = vmatprep.subr.mxu0 0.0
    %3826 = vmatpush1.msra.mxu0 0.0
    %3827 = vmatprep.subr.mxu0 0.0
    %3828 = vmatpush1.msra.mxu0 0.0
    %3829 = vmatprep.subr.mxu0 0.0
    %3830 = vmatpush1.msra.mxu0 0.0
    %3831 = vmatprep.subr.mxu0 0.0
    %3832 = vmatpush1.msra.mxu0 0.0
    %3833 = vmatprep.subr.mxu0 0.0
    %3834 = vmatpush1.msra.mxu0 0.0
    %3835 = vmatprep.subr.mxu0 0.0
    %3836 = vmatpush1.msra.mxu0 0.0
    %3837 = vmatprep.subr.mxu0 0.0
    %3838 = vmatpush1.msra.mxu0 0.0
    %3839 = vmatprep.subr.mxu0 0.0
    %3840 = vmatpush1.msra.mxu0 0.0
    %3841 = vmatprep.mubr.f32.mxu0 0.0
    %3842 = vmatmul.mubr.f32.gmra.mrb[0].mxu0 %v3775
    %v3843 = vpop.f32.mrb[0].mxu0
    %v3844 = vadd.f32 0.0, %v3843
    %v3845 = vpop.f32.mrb[0].mxu0
    %3846 = vdwg.mxu0
    %v3848 = vrot.slane %v3844, 6
    %v3850 = vadd.f32 %v3119, %v3848
    %v3851 = vxor.u32 %v3850, 2147483648
    %v3852 = vmul.f32 %v3851, 1.442695
    %v3853 = vpow.pop %v3852
    %v3854 = vadd.f32 %v3853, 1.0
    %v3855 = vrcp.pop %v3854
    %v3856 = vmul.f32 1.0, %v3855
    %v3857 = vtanh.pop %v3850
    %v3859 = vrot.slane %v3761, 2
    %v3861 = vmul.f32 %v3856, %v3859
    %3863 = vrot.lane.b32.xlu0 %v3857, 96
    %v3864 = vpop.permute.xlu0 %3863
    %v3866 = vmul.f32 %v3856, %v3864
    %3868 = vrot.lane.b32.xlu0 %v3866, 16
    %v3869 = vpop.permute.xlu0 %3868
    %v3871 = vadd.f32 %v3861, %v3869
    %v3872 = vtanh.pop %v3871
    %3874 = vrot.lane.b32.xlu0 %v3872, 32
    %v3875 = vpop.permute.xlu0 %3874
    %v3877 = vmul.f32 %v3856, %v3875
    %v3879 = vrot.slane %v3877, 4
    %v3881 = vmax.f32 %v3771, %v3879
    %v3882 = vrot.slane %v3877, 2
    %3883 = vrot.lane.b32.xlu0 %v3882, 80
    %v3884 = vpop.permute.xlu0 %3883
    %v3885 = vsel %vm250, %v3884, 0
    %3887 = vmatprep.subr.mxu0 0.0
    %3888 = vmatpush1.msra.mxu0 %v3127
    %3889 = vmatprep.subr.mxu0 0.0
    %3890 = vmatpush1.msra.mxu0 %v3128
    %3891 = vmatprep.subr.mxu0 0.0
    %3892 = vmatpush1.msra.mxu0 0.0
    %3893 = vmatprep.subr.mxu0 0.0
    %3894 = vmatpush1.msra.mxu0 0.0
    %3895 = vmatprep.subr.mxu0 0.0
    %3896 = vmatpush1.msra.mxu0 0.0
    %3897 = vmatprep.subr.mxu0 0.0
    %3898 = vmatpush1.msra.mxu0 0.0
    %3899 = vmatprep.subr.mxu0 0.0
    %3900 = vmatpush1.msra.mxu0 0.0
    %3901 = vmatprep.subr.mxu0 0.0
    %3902 = vmatpush1.msra.mxu0 0.0
    %3903 = vmatprep.subr.mxu0 0.0
    %3904 = vmatpush1.msra.mxu0 0.0
    %3905 = vmatprep.subr.mxu0 0.0
    %3906 = vmatpush1.msra.mxu0 0.0
    %3907 = vmatprep.subr.mxu0 0.0
    %3908 = vmatpush1.msra.mxu0 0.0
    %3909 = vmatprep.subr.mxu0 0.0
    %3910 = vmatpush1.msra.mxu0 0.0
    %3911 = vmatprep.subr.mxu0 0.0
    %3912 = vmatpush1.msra.mxu0 0.0
    %3913 = vmatprep.subr.mxu0 0.0
    %3914 = vmatpush1.msra.mxu0 0.0
    %3915 = vmatprep.subr.mxu0 0.0
    %3916 = vmatpush1.msra.mxu0 0.0
    %3917 = vmatprep.subr.mxu0 0.0
    %3918 = vmatpush1.msra.mxu0 0.0
    %3919 = vmatprep.subr.mxu0 0.0
    %3920 = vmatpush1.msra.mxu0 0.0
    %3921 = vmatprep.subr.mxu0 0.0
    %3922 = vmatpush1.msra.mxu0 0.0
    %3923 = vmatprep.subr.mxu0 0.0
    %3924 = vmatpush1.msra.mxu0 0.0
    %3925 = vmatprep.subr.mxu0 0.0
    %3926 = vmatpush1.msra.mxu0 0.0
    %3927 = vmatprep.subr.mxu0 0.0
    %3928 = vmatpush1.msra.mxu0 0.0
    %3929 = vmatprep.subr.mxu0 0.0
    %3930 = vmatpush1.msra.mxu0 0.0
    %3931 = vmatprep.subr.mxu0 0.0
    %3932 = vmatpush1.msra.mxu0 0.0
    %3933 = vmatprep.subr.mxu0 0.0
    %3934 = vmatpush1.msra.mxu0 0.0
    %3935 = vmatprep.subr.mxu0 0.0
    %3936 = vmatpush1.msra.mxu0 0.0
    %3937 = vmatprep.subr.mxu0 0.0
    %3938 = vmatpush1.msra.mxu0 0.0
    %3939 = vmatprep.subr.mxu0 0.0
    %3940 = vmatpush1.msra.mxu0 0.0
    %3941 = vmatprep.subr.mxu0 0.0
    %3942 = vmatpush1.msra.mxu0 0.0
    %3943 = vmatprep.subr.mxu0 0.0
    %3944 = vmatpush1.msra.mxu0 0.0
    %3945 = vmatprep.subr.mxu0 0.0
    %3946 = vmatpush1.msra.mxu0 0.0
    %3947 = vmatprep.subr.mxu0 0.0
    %3948 = vmatpush1.msra.mxu0 0.0
    %3949 = vmatprep.subr.mxu0 0.0
    %3950 = vmatpush1.msra.mxu0 0.0
    %3951 = vmatprep.mubr.f32.mxu0 0.0
    %3952 = vmatmul.mubr.f32.gmra.mrb[0].mxu0 %v3885
    %v3953 = vpop.f32.mrb[0].mxu0
    %v3954 = vadd.f32 0.0, %v3953
    %v3955 = vpop.f32.mrb[0].mxu0
    %3956 = vdwg.mxu0
    %v3957 = vadd.f32 %v3119, %v3954
    %v3958 = vxor.u32 %v3957, 2147483648
    %v3959 = vmul.f32 %v3958, 1.442695
    %v3960 = vpow.pop %v3959
    %v3961 = vadd.f32 %v3960, 1.0
    %v3962 = vrcp.pop %v3961
    %v3963 = vmul.f32 1.0, %v3962
    %v3964 = vtanh.pop %v3957
    %v3966 = vrot.slane %v3871, 2
    %v3968 = vmul.f32 %v3963, %v3966
    %3970 = vrot.lane.b32.xlu0 %v3964, 96
    %v3971 = vpop.permute.xlu0 %3970
    %v3973 = vmul.f32 %v3963, %v3971
    %3975 = vrot.lane.b32.xlu0 %v3973, 16
    %v3976 = vpop.permute.xlu0 %3975
    %v3978 = vadd.f32 %v3968, %v3976
    %v3979 = vtanh.pop %v3978
    %3981 = vrot.lane.b32.xlu0 %v3979, 32
    %v3982 = vpop.permute.xlu0 %3981
    %v3984 = vmul.f32 %v3963, %v3982
    %v3986 = vrot.slane %v3984, 2
    %v3988 = vmax.f32 %v3881, %v3986
    %3990 = vrot.lane.b32.xlu0 %v3040, 80
    %v3991 = vpop.permute.xlu0 %3990
    %v3994 = vrot.slane %v3988, 6
    %3995 = vrot.lane.b32.xlu0 %v3994, 96
    %v3996 = vpop.permute.xlu0 %3995
    %v3998 = vsel %vm250, %v3991, %v3996
    %v3999 = vld [vmem:[#allocation14] sm:$0xff]
    %v4000 = vld [vmem:[#allocation14 + $0x8] sm:$0xff]
    %v4001 = vld [vmem:[#allocation14 + $0x10] sm:$0xff]
    %v4002 = vld [vmem:[#allocation14 + $0x18] sm:$0xff]
    %v4003 = vld [vmem:[%s14] sm:$0x1]
    %v4005 = vlaneseq
    %v4006 = vshrl.u32 %v4005, 7
    %v4007 = vsub.s32 0, %v4006
    %v4008 = vrot.slane %v4003, %v4007
    %v4011 = vsel %vm166, %v3998, 0
    %4013 = vmatprep.subr.mxu0 0.0
    %4014 = vmatpush1.msra.mxu0 %v3999
    %4015 = vmatprep.subr.mxu0 0.0
    %4016 = vmatpush1.msra.mxu0 %v4000
    %4017 = vmatprep.subr.mxu0 0.0
    %4018 = vmatpush1.msra.mxu0 %v4001
    %4019 = vmatprep.subr.mxu0 0.0
    %4020 = vmatpush1.msra.mxu0 %v4002
    %4021 = vmatprep.subr.mxu0 0.0
    %4022 = vmatpush1.msra.mxu0 0.0
    %4023 = vmatprep.subr.mxu0 0.0
    %4024 = vmatpush1.msra.mxu0 0.0
    %4025 = vmatprep.subr.mxu0 0.0
    %4026 = vmatpush1.msra.mxu0 0.0
    %4027 = vmatprep.subr.mxu0 0.0
    %4028 = vmatpush1.msra.mxu0 0.0
    %4029 = vmatprep.subr.mxu0 0.0
    %4030 = vmatpush1.msra.mxu0 0.0
    %4031 = vmatprep.subr.mxu0 0.0
    %4032 = vmatpush1.msra.mxu0 0.0
    %4033 = vmatprep.subr.mxu0 0.0
    %4034 = vmatpush1.msra.mxu0 0.0
    %4035 = vmatprep.subr.mxu0 0.0
    %4036 = vmatpush1.msra.mxu0 0.0
    %4037 = vmatprep.subr.mxu0 0.0
    %4038 = vmatpush1.msra.mxu0 0.0
    %4039 = vmatprep.subr.mxu0 0.0
    %4040 = vmatpush1.msra.mxu0 0.0
    %4041 = vmatprep.subr.mxu0 0.0
    %4042 = vmatpush1.msra.mxu0 0.0
    %4043 = vmatprep.subr.mxu0 0.0
    %4044 = vmatpush1.msra.mxu0 0.0
    %4045 = vmatprep.subr.mxu0 0.0
    %4046 = vmatpush1.msra.mxu0 0.0
    %4047 = vmatprep.subr.mxu0 0.0
    %4048 = vmatpush1.msra.mxu0 0.0
    %4049 = vmatprep.subr.mxu0 0.0
    %4050 = vmatpush1.msra.mxu0 0.0
    %4051 = vmatprep.subr.mxu0 0.0
    %4052 = vmatpush1.msra.mxu0 0.0
    %4053 = vmatprep.subr.mxu0 0.0
    %4054 = vmatpush1.msra.mxu0 0.0
    %4055 = vmatprep.subr.mxu0 0.0
    %4056 = vmatpush1.msra.mxu0 0.0
    %4057 = vmatprep.subr.mxu0 0.0
    %4058 = vmatpush1.msra.mxu0 0.0
    %4059 = vmatprep.subr.mxu0 0.0
    %4060 = vmatpush1.msra.mxu0 0.0
    %4061 = vmatprep.subr.mxu0 0.0
    %4062 = vmatpush1.msra.mxu0 0.0
    %4063 = vmatprep.subr.mxu0 0.0
    %4064 = vmatpush1.msra.mxu0 0.0
    %4065 = vmatprep.subr.mxu0 0.0
    %4066 = vmatpush1.msra.mxu0 0.0
    %4067 = vmatprep.subr.mxu0 0.0
    %4068 = vmatpush1.msra.mxu0 0.0
    %4069 = vmatprep.subr.mxu0 0.0
    %4070 = vmatpush1.msra.mxu0 0.0
    %4071 = vmatprep.subr.mxu0 0.0
    %4072 = vmatpush1.msra.mxu0 0.0
    %4073 = vmatprep.subr.mxu0 0.0
    %4074 = vmatpush1.msra.mxu0 0.0
    %4075 = vmatprep.subr.mxu0 0.0
    %4076 = vmatpush1.msra.mxu0 0.0
    %4077 = vmatprep.mubr.f32.mxu0 0.0
    %4078 = vmatmul.mubr.f32.gmra.mrb[0].mxu0 %v4011
    %v4079 = vpop.f32.mrb[0].mxu0
    %v4080 = vadd.f32 %v4008, %v4079
    %v4081 = vpop.f32.mrb[0].mxu0
    %4082 = vdwg.mxu0
    %v4083 = vmax.f32 %v4080, 0.0
    %v4084 = vld [vmem:[%s15] sm:$0xff]
    %v4085 = vld [vmem:[%s15 + $0x8] sm:$0xff]
    %v4086 = vld [vmem:[%s15 + $0x10] sm:$0xff]
    %v4087 = vld [vmem:[%s15 + $0x18] sm:$0xff]
    %v4088 = vld [vmem:[%s15 + $0x20] sm:$0xff]
    %v4089 = vld [vmem:[%s15 + $0x28] sm:$0xff]
    %v4090 = vld [vmem:[%s15 + $0x30] sm:$0xff]
    %v4091 = vld [vmem:[%s15 + $0x38] sm:$0xff]
    %v4092 = vld [vmem:[#allocation3] sm:$0x1]
    %v4094 = vlaneseq
    %v4095 = vshrl.u32 %v4094, 7
    %v4096 = vsub.s32 0, %v4095
    %v4097 = vrot.slane %v4092, %v4096
    %vm4099 = vcmask 523264
    %v4101 = vsel %vm4099, %v4083, 0
    %4103 = vmatprep.subr.mxu0 0.0
    %4104 = vmatpush1.msra.mxu0 %v4084
    %4105 = vmatprep.subr.mxu0 0.0
    %4106 = vmatpush1.msra.mxu0 %v4085
    %4107 = vmatprep.subr.mxu0 0.0
    %4108 = vmatpush1.msra.mxu0 %v4086
    %4109 = vmatprep.subr.mxu0 0.0
    %4110 = vmatpush1.msra.mxu0 %v4087
    %4111 = vmatprep.subr.mxu0 0.0
    %4112 = vmatpush1.msra.mxu0 %v4088
    %4113 = vmatprep.subr.mxu0 0.0
    %4114 = vmatpush1.msra.mxu0 %v4089
    %4115 = vmatprep.subr.mxu0 0.0
    %4116 = vmatpush1.msra.mxu0 %v4090
    %4117 = vmatprep.subr.mxu0 0.0
    %4118 = vmatpush1.msra.mxu0 %v4091
    %4119 = vmatprep.subr.mxu0 0.0
    %4120 = vmatpush1.msra.mxu0 0.0
    %4121 = vmatprep.subr.mxu0 0.0
    %4122 = vmatpush1.msra.mxu0 0.0
    %4123 = vmatprep.subr.mxu0 0.0
    %4124 = vmatpush1.msra.mxu0 0.0
    %4125 = vmatprep.subr.mxu0 0.0
    %4126 = vmatpush1.msra.mxu0 0.0
    %4127 = vmatprep.subr.mxu0 0.0
    %4128 = vmatpush1.msra.mxu0 0.0
    %4129 = vmatprep.subr.mxu0 0.0
    %4130 = vmatpush1.msra.mxu0 0.0
    %4131 = vmatprep.subr.mxu0 0.0
    %4132 = vmatpush1.msra.mxu0 0.0
    %4133 = vmatprep.subr.mxu0 0.0
    %4134 = vmatpush1.msra.mxu0 0.0
    %4135 = vmatprep.subr.mxu0 0.0
    %4136 = vmatpush1.msra.mxu0 0.0
    %4137 = vmatprep.subr.mxu0 0.0
    %4138 = vmatpush1.msra.mxu0 0.0
    %4139 = vmatprep.subr.mxu0 0.0
    %4140 = vmatpush1.msra.mxu0 0.0
    %4141 = vmatprep.subr.mxu0 0.0
    %4142 = vmatpush1.msra.mxu0 0.0
    %4143 = vmatprep.subr.mxu0 0.0
    %4144 = vmatpush1.msra.mxu0 0.0
    %4145 = vmatprep.subr.mxu0 0.0
    %4146 = vmatpush1.msra.mxu0 0.0
    %4147 = vmatprep.subr.mxu0 0.0
    %4148 = vmatpush1.msra.mxu0 0.0
    %4149 = vmatprep.subr.mxu0 0.0
    %4150 = vmatpush1.msra.mxu0 0.0
    %4151 = vmatprep.subr.mxu0 0.0
    %4152 = vmatpush1.msra.mxu0 0.0
    %4153 = vmatprep.subr.mxu0 0.0
    %4154 = vmatpush1.msra.mxu0 0.0
    %4155 = vmatprep.subr.mxu0 0.0
    %4156 = vmatpush1.msra.mxu0 0.0
    %4157 = vmatprep.subr.mxu0 0.0
    %4158 = vmatpush1.msra.mxu0 0.0
    %4159 = vmatprep.subr.mxu0 0.0
    %4160 = vmatpush1.msra.mxu0 0.0
    %4161 = vmatprep.subr.mxu0 0.0
    %4162 = vmatpush1.msra.mxu0 0.0
    %4163 = vmatprep.subr.mxu0 0.0
    %4164 = vmatpush1.msra.mxu0 0.0
    %4165 = vmatprep.subr.mxu0 0.0
    %4166 = vmatpush1.msra.mxu0 0.0
    %4167 = vmatprep.mubr.f32.mxu0 0.0
    %4168 = vmatmul.mubr.f32.gmra.mrb[0].mxu0 %v4101
    %v4169 = vpop.f32.mrb[0].mxu0
    %v4170 = vadd.f32 %v4097, %v4169
    %v4171 = vpop.f32.mrb[0].mxu0
    %4172 = vdwg.mxu0
    %vm4173 = vcmask 1024
    %4174 = vst.msk [vmem:[%s17] sm:$0x3] %vm4173, %v4170
    // Predicated region
    $region98: #{tpu_custom_call.1} parent=1 // pred_check
      _
    $region99: #{tpu_custom_call.1} parent=1 // pred_check_branch
      %4176 = sbr.rel (0) target = $region101
    $region100: #{tpu_custom_call.1} parent=1 // pred_region
      _
    $region101: #{tpu_custom_call.1} parent=1 // pred_fallthru
      _
    // Predicated region
    $region102: #{tpu_custom_call.1} parent=1 // pred_check
      _
    $region103: #{tpu_custom_call.1} parent=1 // pred_check_branch
      %4178 = sbr.rel (0) target = $region105
    $region104: #{tpu_custom_call.1} parent=1 // pred_region
      _
    $region105: #{tpu_custom_call.1} parent=1 // pred_fallthru
      _
    %4179 = vsyncpa [#allocation5], 1
    %4180 = vsyncpa [#allocation7], 1
    %4181 = vsyncpa [#allocation10], 1
    %4182 = vsyncpa [#allocation13], 1

</llo_original>
